<compile_context>
chip_gen: v7x
topology: tpu7x:2x2x1
jax: 0.10.0
libtpu: 0.0.40
codegen_flags: <defaults>
</compile_context>

<pallas_src>
import functools

import jax
import jax.numpy as jnp
from jax.experimental import pallas as pl
from jax.experimental.pallas import tpu as pltpu

EPS = 1e-5            # nn.BatchNorm2d default
NEG_SLOPE = 0.01      # nn.LeakyReLU default
LANE = 128
TILE_M_MAX = 512      # rows per grid step (fits v5e/v6e/v7x VMEM with margin)
VMEM_LIMIT = 32 * 1024 * 1024


def _round_up(x, m):
    return (x + m - 1) // m * m


def _pad2d(a, rows, cols):
    r, c = a.shape
    if r == rows and c == cols:
        return a
    return jnp.pad(a, ((0, rows - r), (0, cols - c)))


def _tile_rows(m):
    return min(TILE_M_MAX, _round_up(m, 16))


def _compiler_params():
    return pltpu.CompilerParams(dimension_semantics=("parallel",),
                                vmem_limit_bytes=VMEM_LIMIT)


# ----------------------------- Pallas kernels ------------------------------ #

def _gemm_stats_kernel(p_ref, w_ref, y_ref, s_ref, ss_ref):
    """One M-tile: y = patches @ w (bf16 x bf16 -> f32 acc) + per-tile channel sums."""
    y = jnp.dot(p_ref[...], w_ref[...], preferred_element_type=jnp.float32)
    y_ref[...] = y
    s_ref[...] = jnp.sum(y, axis=0, keepdims=True)[None]          # (1, 1, C)
    ss_ref[...] = jnp.sum(y * y, axis=0, keepdims=True)[None]     # (1, 1, C)


def _gemm_bias_kernel(p_ref, w_ref, b_ref, y_ref):
    y = jnp.dot(p_ref[...], w_ref[...], preferred_element_type=jnp.float32)
    y_ref[...] = y + b_ref[...]


def _bn_lrelu_kernel(count, has_skip, *refs):
    """Finalize batch stats (tiny) + normalize + LeakyReLU (+ fused residual add)."""
    if has_skip:
        y_ref, s_ref, ss_ref, g_ref, b_ref, skip_ref, o_ref = refs
    else:
        y_ref, s_ref, ss_ref, g_ref, b_ref, o_ref = refs
    inv = 1.0 / count
    mean = jnp.sum(s_ref[...], axis=0) * inv                      # (1, C)
    ex2 = jnp.sum(ss_ref[...], axis=0) * inv                      # (1, C)
    var = ex2 - mean * mean                                       # biased (training)
    scale = g_ref[...] * jax.lax.rsqrt(var + EPS)
    shift = b_ref[...] - mean * scale
    z = y_ref[...] * scale + shift
    act = jnp.where(z >= 0.0, z, NEG_SLOPE * z)
    if has_skip:
        act = act + skip_ref[...]
    o_ref[...] = act


# ----------------------------- Pallas wrappers ------------------------------ #

def _gemm_stats(patches, w_mat):
    """Tiled GEMM + per-tile channel sum / sum-of-squares.

    Returns (y[:M] (M, Cpad) f32, s (T,1,Cpad), ss (T,1,Cpad), Cpad)."""
    M, K = patches.shape
    C = w_mat.shape[1]
    Cp = _round_up(C, LANE)
    tm = _tile_rows(M)
    Mp = _round_up(M, tm)
    T = Mp // tm
    p = _pad2d(patches.astype(jnp.bfloat16), Mp, K)
    w = _pad2d(w_mat.astype(jnp.bfloat16), K, Cp)
    y, s, ss = pl.pallas_call(
        _gemm_stats_kernel,
        out_shape=(jax.ShapeDtypeStruct((Mp, Cp), jnp.float32),
                   jax.ShapeDtypeStruct((T, 1, Cp), jnp.float32),
                   jax.ShapeDtypeStruct((T, 1, Cp), jnp.float32)),
        grid_spec=pltpu.PrefetchScalarGridSpec(
            num_scalar_prefetch=0,
            grid=(T,),
            in_specs=[pl.BlockSpec((tm, K), lambda i: (i, 0)),
                      pl.BlockSpec((K, Cp), lambda i: (0, 0))],
            out_specs=[pl.BlockSpec((tm, Cp), lambda i: (i, 0)),
                       pl.BlockSpec((1, 1, Cp), lambda i: (i, 0, 0)),
                       pl.BlockSpec((1, 1, Cp), lambda i: (i, 0, 0))]),
        compiler_params=_compiler_params(),
    )(p, w)
    return y[:M], s, ss, Cp


def _gemm_bias(patches, w_mat, bias):
    """Tiled GEMM + bias (no BN / activation). Returns (y[:M] (M, Cpad), Cpad)."""
    M, K = patches.shape
    C = w_mat.shape[1]
    Cp = _round_up(C, LANE)
    tm = _tile_rows(M)
    Mp = _round_up(M, tm)
    p = _pad2d(patches.astype(jnp.bfloat16), Mp, K)
    w = _pad2d(w_mat.astype(jnp.bfloat16), K, Cp)
    b = _pad2d(bias.astype(jnp.float32).reshape(1, -1), 1, Cp)
    y = pl.pallas_call(
        _gemm_bias_kernel,
        out_shape=jax.ShapeDtypeStruct((Mp, Cp), jnp.float32),
        grid_spec=pltpu.PrefetchScalarGridSpec(
            num_scalar_prefetch=0,
            grid=(Mp // tm,),
            in_specs=[pl.BlockSpec((tm, K), lambda i: (i, 0)),
                      pl.BlockSpec((K, Cp), lambda i: (0, 0)),
                      pl.BlockSpec((1, Cp), lambda i: (0, 0))],
            out_specs=pl.BlockSpec((tm, Cp), lambda i: (i, 0))),
        compiler_params=_compiler_params(),
    )(p, w, b)
    return y[:M], Cp


def _bn_lrelu(y_mat, s, ss, count, gamma, beta, skip_mat=None):
    """Tiled BatchNorm (batch stats over `count` elements) + LeakyReLU (+ skip)."""
    M, Cp = y_mat.shape
    tm = _tile_rows(M)
    Mp = _round_up(M, tm)
    yp = _pad2d(y_mat, Mp, Cp)
    g = _pad2d(gamma.reshape(1, -1), 1, Cp)
    b = _pad2d(beta.reshape(1, -1), 1, Cp)
    T = s.shape[0]
    args = [yp, s, ss, g, b]
    in_specs = [pl.BlockSpec((tm, Cp), lambda i: (i, 0)),
                pl.BlockSpec((T, 1, Cp), lambda i: (0, 0, 0)),
                pl.BlockSpec((T, 1, Cp), lambda i: (0, 0, 0)),
                pl.BlockSpec((1, Cp), lambda i: (0, 0)),
                pl.BlockSpec((1, Cp), lambda i: (0, 0))]
    if skip_mat is not None:
        args.append(_pad2d(skip_mat, Mp, Cp))
        in_specs.append(pl.BlockSpec((tm, Cp), lambda i: (i, 0)))
    kern = functools.partial(_bn_lrelu_kernel, float(count), skip_mat is not None)
    out = pl.pallas_call(
        kern,
        out_shape=jax.ShapeDtypeStruct((Mp, Cp), jnp.float32),
        grid_spec=pltpu.PrefetchScalarGridSpec(
            num_scalar_prefetch=0,
            grid=(Mp // tm,),
            in_specs=in_specs,
            out_specs=pl.BlockSpec((tm, Cp), lambda i: (i, 0))),
        compiler_params=_compiler_params(),
    )(*args)
    return out[:M]


# ------------------------------ layer glue ---------------------------------- #

def _im2col_nhwc(x, k, stride, pad):
    """x: (N, H, W, C) -> (N*Ho*Wo, k*k*C); feature order (kh, kw, c)."""
    N, H, W, C = x.shape
    xp = jnp.pad(x, ((0, 0), (pad, pad), (pad, pad), (0, 0)))
    Ho = (H + 2 * pad - k) // stride + 1
    Wo = (W + 2 * pad - k) // stride + 1
    cols = []
    for kh in range(k):
        for kw in range(k):
            cols.append(xp[:, kh:kh + stride * (Ho - 1) + 1:stride,
                           kw:kw + stride * (Wo - 1) + 1:stride, :])
    p = jnp.concatenate(cols, axis=-1)                 # (N, Ho, Wo, k*k*C)
    return p.reshape(N * Ho * Wo, k * k * C), Ho, Wo


def conv_bn_lrelu(x, w, gamma, beta):
    """nn.Conv2d(k=4,s=2,p=1) + BatchNorm2d (batch stats) + LeakyReLU (NHWC).

    Conv bias omitted: BatchNorm's mean subtraction cancels it exactly."""
    N, H, W, Cin = x.shape
    Cout, _, k, _ = w.shape
    patches, Ho, Wo = _im2col_nhwc(x, k, 2, 1)
    w_mat = jnp.transpose(w, (2, 3, 1, 0)).reshape(k * k * Cin, Cout)
    y, s, ss, _ = _gemm_stats(patches, w_mat)
    M = N * Ho * Wo
    out = _bn_lrelu(y, s, ss, M, gamma, beta)
    return out[:, :Cout].reshape(N, Ho, Wo, Cout)


def _phase_patches(xp, H, W, py, px):
    """2x2-tap patches of the +1-padded input for convT output phase (py, px)."""
    N, C = xp.shape[0], xp.shape[-1]
    cols = []
    for dr in range(2):
        for dc in range(2):
            cols.append(xp[:, py + dr:py + dr + H, px + dc:px + dc + W, :])
    return jnp.concatenate(cols, axis=-1).reshape(N * H * W, 4 * C)


def _phase_weight(w_t, py, px):
    """Effective (4*Cin, Cout) weight for ConvTranspose2d(k=4,s=2,p=1) phase (py,px)."""
    Cin, Cout = w_t.shape[0], w_t.shape[1]
    taps = []
    for dr in range(2):
        for dc in range(2):
            taps.append(w_t[:, :, 3 - py - 2 * dr, 3 - px - 2 * dc])   # (Cin, Cout)
    return jnp.stack(taps, axis=0).reshape(4 * Cin, Cout)


def _interleave_phases(phases, N, H, W, C):
    """phases[py*2+px]: (N,H,W,C) -> (N,2H,2W,C) with out[:, 2j+py, 2i+px] = phase."""
    stk = jnp.stack(phases, axis=0).reshape(2, 2, N, H, W, C)
    return jnp.transpose(stk, (2, 3, 0, 4, 1, 5)).reshape(N, 2 * H, 2 * W, C)


def convT_bn_lrelu(x, w_t, gamma, beta, skip=None):
    """nn.ConvTranspose2d(k=4,s=2,p=1) + BatchNorm2d + LeakyReLU [+ fused residual].

    Decomposed into 4 stride-1 2x2-tap GEMMs (one per output parity phase);
    convT bias omitted (cancelled by BatchNorm). The post-activation skip add
    is fused into the normalize kernel's epilogue."""
    N, H, W, Cin = x.shape
    Cout = w_t.shape[1]
    Cp = _round_up(Cout, LANE)
    xp = jnp.pad(x, ((0, 0), (1, 1), (1, 1), (0, 0)))
    ys, s_list, q_list = [], [], []
    for py in range(2):
        for px in range(2):
            patches = _phase_patches(xp, H, W, py, px)
            w_mat = _phase_weight(w_t, py, px)
            y, s, q, _ = _gemm_stats(patches, w_mat)
            ys.append(y.reshape(N, H, W, Cp))
            s_list.append(s)
            q_list.append(q)
    y_full = _interleave_phases(ys, N, H, W, Cp)
    M_total = N * (2 * H) * (2 * W)
    s_all = jnp.concatenate(s_list, axis=0)
    q_all = jnp.concatenate(q_list, axis=0)
    skip_mat = None
    if skip is not None:
        Cs = skip.shape[-1]
        skip_mat = jnp.pad(skip, ((0, 0), (0, 0), (0, 0), (0, Cp - Cs)))
        skip_mat = skip_mat.reshape(M_total, Cp)
    out = _bn_lrelu(y_full.reshape(M_total, Cp), s_all, q_all, M_total,
                    gamma, beta, skip_mat)
    return out[:, :Cout].reshape(N, 2 * H, 2 * W, Cout)


def convT_bias(x, w_t, bias):
    """nn.ConvTranspose2d(k=4,s=2,p=1) with bias, no BN / activation (NHWC)."""
    N, H, W, Cin = x.shape
    Cout = w_t.shape[1]
    Cp = _round_up(Cout, LANE)
    xp = jnp.pad(x, ((0, 0), (1, 1), (1, 1), (0, 0)))
    phases = []
    for py in range(2):
        for px in range(2):
            patches = _phase_patches(xp, H, W, py, px)
            w_mat = _phase_weight(w_t, py, px)
            y, _ = _gemm_bias(patches, w_mat, bias)
            phases.append(y.reshape(N, H, W, Cp))
    y_full = _interleave_phases(phases, N, H, W, Cp)
    return y_full[:, :, :, :Cout]


# ------------------------------ MC_model ------------------------------------ #

def init_params(key):
    ks = jax.random.split(key, 12)

    def w(k, shape, fan_in):
        return jax.random.normal(k, shape, jnp.float32) * (1.0 / fan_in) ** 0.5

    def b(k, n, fan_in):
        lim = (1.0 / fan_in) ** 0.5
        return jax.random.uniform(k, (n,), jnp.float32, -lim, lim)

    p = {}
    # Conv2d weights: (Cout, Cin, 4, 4)
    p["w1"] = w(ks[0], (64, 12, 4, 4), 12 * 16);    p["b1"] = b(ks[1], 64, 12 * 16)
    p["w2"] = w(ks[2], (128, 64, 4, 4), 64 * 16);   p["b2"] = b(ks[3], 128, 64 * 16)
    p["w3"] = w(ks[4], (256, 128, 4, 4), 128 * 16); p["b3"] = b(ks[5], 256, 128 * 16)
    # ConvTranspose2d weights: (Cin, Cout, 4, 4)
    p["w4"] = w(ks[6], (256, 128, 4, 4), 256 * 16); p["b4"] = b(ks[7], 128, 256 * 16)
    p["w5"] = w(ks[8], (128, 64, 4, 4), 128 * 16);  p["b5"] = b(ks[9], 64, 128 * 16)
    p["w6"] = w(ks[10], (64, 12, 4, 4), 64 * 16);   p["b6"] = b(ks[11], 12, 64 * 16)
    # BatchNorm affine params (PyTorch init: gamma=1, beta=0)
    for name, c in (("1", 64), ("2", 128), ("3", 256), ("4", 128), ("5", 64)):
        p["g" + name] = jnp.ones((c,), jnp.float32)
        p["beta" + name] = jnp.zeros((c,), jnp.float32)
    return p


@jax.jit
def mc_model_forward(params, stego_x):
    """stego_x: (N, 12, H, W) NCHW, as in the PyTorch module."""
    p = params
    x = jnp.transpose(stego_x, (0, 2, 3, 1))                       # NHWC once
    # b1..b5 are intentionally unused: bias before training-mode BatchNorm is a
    # mathematical no-op (mean subtraction cancels it exactly).
    out1 = conv_bn_lrelu(x, p["w1"], p["g1"], p["beta1"])          # (N, H/2, W/2, 64)
    out2 = conv_bn_lrelu(out1, p["w2"], p["g2"], p["beta2"])       # (N, H/4, W/4, 128)
    out3 = conv_bn_lrelu(out2, p["w3"], p["g3"], p["beta3"])       # (N, H/8, W/8, 256)
    # out4 + out2  (skip add fused into the BN+LeakyReLU kernel epilogue)
    out4s = convT_bn_lrelu(out3, p["w4"], p["g4"], p["beta4"], skip=out2)
    # out5 + out1
    out5s = convT_bn_lrelu(out4s, p["w5"], p["g5"], p["beta5"], skip=out1)
    out = convT_bias(out5s, p["w6"], p["b6"])                      # (N, H, W, 12)
    return jnp.transpose(out, (0, 3, 1, 2))                        # back to NCHW


if __name__ == "__main__":
    key = jax.random.PRNGKey(0)
    k_param, k_x = jax.random.split(key)
    params = init_params(k_param)

    # Input: NCHW, 12 channels (as required by conv1), small spatial size.
    x = jax.random.normal(k_x, (2, 12, 16, 16), jnp.float32)

    out = mc_model_forward(params, x)
    out = jax.block_until_ready(out)

    assert out.shape == (2, 12, 16, 16), out.shape
    assert out.dtype == jnp.float32
    assert bool(jnp.all(jnp.isfinite(out)))
    print("KERNEL_OK")
</pallas_src>

<mosaic_0001>
module attributes {stable_mosaic.version = 11 : i64} {
  func.func @_gemm_stats_kernel(%arg0: i32, %arg1: memref<128x192xbf16, #tpu.memory_space<vmem>>, %arg2: memref<192x128xbf16, #tpu.memory_space<vmem>>, %arg3: memref<128x128xf32, #tpu.memory_space<vmem>>, %arg4: memref<1x1x128xf32, #tpu.memory_space<vmem>>, %arg5: memref<1x1x128xf32, #tpu.memory_space<vmem>>) attributes {dimension_semantics = [#tpu.dimension_semantics<parallel>], iteration_bounds = array<i64: 1>, scalar_prefetch = 0 : i64, scratch_operands = 0 : i64, tpu.core_type = #tpu.core_type<tc>, window_params = [{transform_indices = @transform_0, window_bounds = array<i64: 128, 192>}, {pipeline_mode = #tpu.pipeline_mode<synchronous>, transform_indices = @transform_1, window_bounds = array<i64: 192, 128>}, {transform_indices = @transform_2, window_bounds = array<i64: 128, 128>}, {transform_indices = @transform_3, window_bounds = array<i64: 1, 1, 128>}, {transform_indices = @transform_4, window_bounds = array<i64: 1, 1, 128>}]} {
    %c0 = arith.constant 0 : index
    %c0_0 = arith.constant 0 : index
    %0 = vector.load %arg1[%c0, %c0_0] : memref<128x192xbf16, #tpu.memory_space<vmem>>, vector<128x192xbf16>
    %c0_1 = arith.constant 0 : index
    %c0_2 = arith.constant 0 : index
    %1 = vector.load %arg2[%c0_1, %c0_2] : memref<192x128xbf16, #tpu.memory_space<vmem>>, vector<192x128xbf16>
    %cst = arith.constant dense<0.000000e+00> : vector<128x128xf32>
    %2 = tpu.matmul %0, %1, %cst {dimension_numbers = #tpu.dot_dimension_numbers<[1], [0], [0], [1], [0, 0, 1, 1], [], []>} : vector<128x192xbf16>, vector<192x128xbf16>, vector<128x128xf32> -> vector<128x128xf32>
    %c0_3 = arith.constant 0 : index
    %c0_4 = arith.constant 0 : index
    %3 = vector.load %arg3[%c0_3, %c0_4] : memref<128x128xf32, #tpu.memory_space<vmem>>, vector<128x128xf32>
    tpu.vector_store %arg3[%c0_3, %c0_4], %2 {strides = array<i32>} : memref<128x128xf32, #tpu.memory_space<vmem>>, vector<128x128xf32>,
    %cst_5 = arith.constant dense<0.000000e+00> : vector<128xf32>
    %4 = vector.multi_reduction <add>, %2, %cst_5 [0] : vector<128x128xf32> to vector<128xf32>
    %5 = vector.shape_cast %4 : vector<128xf32> to vector<1x128xf32>
    %6 = vector.shape_cast %5 : vector<1x128xf32> to vector<1x1x128xf32>
    %c0_6 = arith.constant 0 : index
    %c0_7 = arith.constant 0 : index
    %c0_8 = arith.constant 0 : index
    %7 = vector.load %arg4[%c0_6, %c0_7, %c0_8] : memref<1x1x128xf32, #tpu.memory_space<vmem>>, vector<1x1x128xf32>
    tpu.vector_store %arg4[%c0_6, %c0_7, %c0_8], %6 {strides = array<i32>} : memref<1x1x128xf32, #tpu.memory_space<vmem>>, vector<1x1x128xf32>,
    %8 = arith.mulf %2, %2 : vector<128x128xf32>
    %cst_9 = arith.constant dense<0.000000e+00> : vector<128xf32>
    %9 = vector.multi_reduction <add>, %8, %cst_9 [0] : vector<128x128xf32> to vector<128xf32>
    %10 = vector.shape_cast %9 : vector<128xf32> to vector<1x128xf32>
    %11 = vector.shape_cast %10 : vector<1x128xf32> to vector<1x1x128xf32>
    %c0_10 = arith.constant 0 : index
    %c0_11 = arith.constant 0 : index
    %c0_12 = arith.constant 0 : index
    %12 = vector.load %arg5[%c0_10, %c0_11, %c0_12] : memref<1x1x128xf32, #tpu.memory_space<vmem>>, vector<1x1x128xf32>
    tpu.vector_store %arg5[%c0_10, %c0_11, %c0_12], %11 {strides = array<i32>} : memref<1x1x128xf32, #tpu.memory_space<vmem>>, vector<1x1x128xf32>,
    return
  }
  func.func @transform_0(%arg0: i32) -> (i32, i32) {
    %c0_i32 = arith.constant 0 : i32
    %c0_i32_0 = arith.constant 0 : i32
    return %arg0, %c0_i32 : i32, i32
  }
  func.func @transform_1(%arg0: i32) -> (i32, i32) {
    %c0_i32 = arith.constant 0 : i32
    %c0_i32_0 = arith.constant 0 : i32
    %c0_i32_1 = arith.constant 0 : i32
    return %c0_i32, %c0_i32_0 : i32, i32
  }
  func.func @transform_2(%arg0: i32) -> (i32, i32) {
    %c0_i32 = arith.constant 0 : i32
    %c0_i32_0 = arith.constant 0 : i32
    return %arg0, %c0_i32 : i32, i32
  }
  func.func @transform_3(%arg0: i32) -> (i32, i32, i32) {
    %c0_i32 = arith.constant 0 : i32
    %c0_i32_0 = arith.constant 0 : i32
    %c0_i32_1 = arith.constant 0 : i32
    return %arg0, %c0_i32, %c0_i32_0 : i32, i32, i32
  }
  func.func @transform_4(%arg0: i32) -> (i32, i32, i32) {
    %c0_i32 = arith.constant 0 : i32
    %c0_i32_0 = arith.constant 0 : i32
    %c0_i32_1 = arith.constant 0 : i32
    return %arg0, %c0_i32, %c0_i32_0 : i32, i32, i32
  }
}

module attributes {stable_mosaic.version = 11 : i64} {
  func.func @_bn_lrelu_kernel(%arg0: i32, %arg1: memref<128x128xf32, #tpu.memory_space<vmem>>, %arg2: memref<1x1x128xf32, #tpu.memory_space<vmem>>, %arg3: memref<1x1x128xf32, #tpu.memory_space<vmem>>, %arg4: memref<1x128xf32, #tpu.memory_space<vmem>>, %arg5: memref<1x128xf32, #tpu.memory_space<vmem>>, %arg6: memref<128x128xf32, #tpu.memory_space<vmem>>) attributes {dimension_semantics = [#tpu.dimension_semantics<parallel>], iteration_bounds = array<i64: 1>, scalar_prefetch = 0 : i64, scratch_operands = 0 : i64, tpu.core_type = #tpu.core_type<tc>, window_params = [{transform_indices = @transform_0, window_bounds = array<i64: 128, 128>}, {pipeline_mode = #tpu.pipeline_mode<synchronous>, transform_indices = @transform_1, window_bounds = array<i64: 1, 1, 128>}, {pipeline_mode = #tpu.pipeline_mode<synchronous>, transform_indices = @transform_2, window_bounds = array<i64: 1, 1, 128>}, {pipeline_mode = #tpu.pipeline_mode<synchronous>, transform_indices = @transform_3, window_bounds = array<i64: 1, 128>}, {pipeline_mode = #tpu.pipeline_mode<synchronous>, transform_indices = @transform_4, window_bounds = array<i64: 1, 128>}, {transform_indices = @transform_5, window_bounds = array<i64: 128, 128>}]} {
    %c0 = arith.constant 0 : index
    %c0_0 = arith.constant 0 : index
    %c0_1 = arith.constant 0 : index
    %0 = vector.load %arg2[%c0, %c0_0, %c0_1] : memref<1x1x128xf32, #tpu.memory_space<vmem>>, vector<1x1x128xf32>
    %cst = arith.constant dense<0.000000e+00> : vector<1x128xf32>
    %1 = vector.multi_reduction <add>, %0, %cst [0] : vector<1x1x128xf32> to vector<1x128xf32>
    %cst_2 = arith.constant 7.812500e-03 : f32
    %2 = vector.broadcast %cst_2 : f32 to vector<1x128xf32>
    %3 = arith.mulf %1, %2 : vector<1x128xf32>
    %c0_3 = arith.constant 0 : index
    %c0_4 = arith.constant 0 : index
    %c0_5 = arith.constant 0 : index
    %4 = vector.load %arg3[%c0_3, %c0_4, %c0_5] : memref<1x1x128xf32, #tpu.memory_space<vmem>>, vector<1x1x128xf32>
    %cst_6 = arith.constant dense<0.000000e+00> : vector<1x128xf32>
    %5 = vector.multi_reduction <add>, %4, %cst_6 [0] : vector<1x1x128xf32> to vector<1x128xf32>
    %cst_7 = arith.constant 7.812500e-03 : f32
    %6 = vector.broadcast %cst_7 : f32 to vector<1x128xf32>
    %7 = arith.mulf %5, %6 : vector<1x128xf32>
    %8 = arith.mulf %3, %3 : vector<1x128xf32>
    %9 = arith.subf %7, %8 : vector<1x128xf32>
    %c0_8 = arith.constant 0 : index
    %c0_9 = arith.constant 0 : index
    %10 = vector.load %arg4[%c0_8, %c0_9] : memref<1x128xf32, #tpu.memory_space<vmem>>, vector<1x128xf32>
    %cst_10 = arith.constant 9.99999974E-6 : f32
    %11 = vector.broadcast %cst_10 : f32 to vector<1x128xf32>
    %12 = arith.addf %9, %11 : vector<1x128xf32>
    %13 = math.rsqrt %12 : vector<1x128xf32>
    %14 = arith.mulf %10, %13 : vector<1x128xf32>
    %c0_11 = arith.constant 0 : index
    %c0_12 = arith.constant 0 : index
    %15 = vector.load %arg5[%c0_11, %c0_12] : memref<1x128xf32, #tpu.memory_space<vmem>>, vector<1x128xf32>
    %16 = arith.mulf %3, %14 : vector<1x128xf32>
    %17 = arith.subf %15, %16 : vector<1x128xf32>
    %c0_13 = arith.constant 0 : index
    %c0_14 = arith.constant 0 : index
    %18 = vector.load %arg1[%c0_13, %c0_14] : memref<128x128xf32, #tpu.memory_space<vmem>>, vector<128x128xf32>
    %19 = vector.broadcast %14 : vector<1x128xf32> to vector<128x128xf32>
    %20 = arith.mulf %18, %19 : vector<128x128xf32>
    %21 = vector.broadcast %17 : vector<1x128xf32> to vector<128x128xf32>
    %22 = arith.addf %20, %21 : vector<128x128xf32>
    %cst_15 = arith.constant 0.000000e+00 : f32
    %23 = vector.broadcast %cst_15 : f32 to vector<128x128xf32>
    %24 = arith.cmpf oge, %22, %23 : vector<128x128xf32>
    %cst_16 = arith.constant 0.00999999977 : f32
    %25 = vector.broadcast %cst_16 : f32 to vector<128x128xf32>
    %26 = arith.mulf %25, %22 : vector<128x128xf32>
    %27 = arith.select %24, %22, %26 : vector<128x128xi1>, vector<128x128xf32>
    %c0_17 = arith.constant 0 : index
    %c0_18 = arith.constant 0 : index
    %28 = vector.load %arg6[%c0_17, %c0_18] : memref<128x128xf32, #tpu.memory_space<vmem>>, vector<128x128xf32>
    tpu.vector_store %arg6[%c0_17, %c0_18], %27 {strides = array<i32>} : memref<128x128xf32, #tpu.memory_space<vmem>>, vector<128x128xf32>,
    return
  }
  func.func @transform_0(%arg0: i32) -> (i32, i32) {
    %c0_i32 = arith.constant 0 : i32
    %c0_i32_0 = arith.constant 0 : i32
    return %arg0, %c0_i32 : i32, i32
  }
  func.func @transform_1(%arg0: i32) -> (i32, i32, i32) {
    %c0_i32 = arith.constant 0 : i32
    %c0_i32_0 = arith.constant 0 : i32
    %c0_i32_1 = arith.constant 0 : i32
    %c0_i32_2 = arith.constant 0 : i32
    return %c0_i32, %c0_i32_0, %c0_i32_1 : i32, i32, i32
  }
  func.func @transform_2(%arg0: i32) -> (i32, i32, i32) {
    %c0_i32 = arith.constant 0 : i32
    %c0_i32_0 = arith.constant 0 : i32
    %c0_i32_1 = arith.constant 0 : i32
    %c0_i32_2 = arith.constant 0 : i32
    return %c0_i32, %c0_i32_0, %c0_i32_1 : i32, i32, i32
  }
  func.func @transform_3(%arg0: i32) -> (i32, i32) {
    %c0_i32 = arith.constant 0 : i32
    %c0_i32_0 = arith.constant 0 : i32
    %c0_i32_1 = arith.constant 0 : i32
    return %c0_i32, %c0_i32_0 : i32, i32
  }
  func.func @transform_4(%arg0: i32) -> (i32, i32) {
    %c0_i32 = arith.constant 0 : i32
    %c0_i32_0 = arith.constant 0 : i32
    %c0_i32_1 = arith.constant 0 : i32
    return %c0_i32, %c0_i32_0 : i32, i32
  }
  func.func @transform_5(%arg0: i32) -> (i32, i32) {
    %c0_i32 = arith.constant 0 : i32
    %c0_i32_0 = arith.constant 0 : i32
    return %arg0, %c0_i32 : i32, i32
  }
}

module attributes {stable_mosaic.version = 11 : i64} {
  func.func @_gemm_stats_kernel(%arg0: i32, %arg1: memref<32x1024xbf16, #tpu.memory_space<vmem>>, %arg2: memref<1024x128xbf16, #tpu.memory_space<vmem>>, %arg3: memref<32x128xf32, #tpu.memory_space<vmem>>, %arg4: memref<1x1x128xf32, #tpu.memory_space<vmem>>, %arg5: memref<1x1x128xf32, #tpu.memory_space<vmem>>) attributes {dimension_semantics = [#tpu.dimension_semantics<parallel>], iteration_bounds = array<i64: 1>, scalar_prefetch = 0 : i64, scratch_operands = 0 : i64, tpu.core_type = #tpu.core_type<tc>, window_params = [{transform_indices = @transform_0, window_bounds = array<i64: 32, 1024>}, {pipeline_mode = #tpu.pipeline_mode<synchronous>, transform_indices = @transform_1, window_bounds = array<i64: 1024, 128>}, {transform_indices = @transform_2, window_bounds = array<i64: 32, 128>}, {transform_indices = @transform_3, window_bounds = array<i64: 1, 1, 128>}, {transform_indices = @transform_4, window_bounds = array<i64: 1, 1, 128>}]} {
    %c0 = arith.constant 0 : index
    %c0_0 = arith.constant 0 : index
    %0 = vector.load %arg1[%c0, %c0_0] : memref<32x1024xbf16, #tpu.memory_space<vmem>>, vector<32x1024xbf16>
    %c0_1 = arith.constant 0 : index
    %c0_2 = arith.constant 0 : index
    %1 = vector.load %arg2[%c0_1, %c0_2] : memref<1024x128xbf16, #tpu.memory_space<vmem>>, vector<1024x128xbf16>
    %cst = arith.constant dense<0.000000e+00> : vector<32x128xf32>
    %2 = tpu.matmul %0, %1, %cst {dimension_numbers = #tpu.dot_dimension_numbers<[1], [0], [0], [1], [0, 0, 1, 1], [], []>} : vector<32x1024xbf16>, vector<1024x128xbf16>, vector<32x128xf32> -> vector<32x128xf32>
    %c0_3 = arith.constant 0 : index
    %c0_4 = arith.constant 0 : index
    %3 = vector.load %arg3[%c0_3, %c0_4] : memref<32x128xf32, #tpu.memory_space<vmem>>, vector<32x128xf32>
    tpu.vector_store %arg3[%c0_3, %c0_4], %2 {strides = array<i32>} : memref<32x128xf32, #tpu.memory_space<vmem>>, vector<32x128xf32>,
    %cst_5 = arith.constant dense<0.000000e+00> : vector<128xf32>
    %4 = vector.multi_reduction <add>, %2, %cst_5 [0] : vector<32x128xf32> to vector<128xf32>
    %5 = vector.shape_cast %4 : vector<128xf32> to vector<1x128xf32>
    %6 = vector.shape_cast %5 : vector<1x128xf32> to vector<1x1x128xf32>
    %c0_6 = arith.constant 0 : index
    %c0_7 = arith.constant 0 : index
    %c0_8 = arith.constant 0 : index
    %7 = vector.load %arg4[%c0_6, %c0_7, %c0_8] : memref<1x1x128xf32, #tpu.memory_space<vmem>>, vector<1x1x128xf32>
    tpu.vector_store %arg4[%c0_6, %c0_7, %c0_8], %6 {strides = array<i32>} : memref<1x1x128xf32, #tpu.memory_space<vmem>>, vector<1x1x128xf32>,
    %8 = arith.mulf %2, %2 : vector<32x128xf32>
    %cst_9 = arith.constant dense<0.000000e+00> : vector<128xf32>
    %9 = vector.multi_reduction <add>, %8, %cst_9 [0] : vector<32x128xf32> to vector<128xf32>
    %10 = vector.shape_cast %9 : vector<128xf32> to vector<1x128xf32>
    %11 = vector.shape_cast %10 : vector<1x128xf32> to vector<1x1x128xf32>
    %c0_10 = arith.constant 0 : index
    %c0_11 = arith.constant 0 : index
    %c0_12 = arith.constant 0 : index
    %12 = vector.load %arg5[%c0_10, %c0_11, %c0_12] : memref<1x1x128xf32, #tpu.memory_space<vmem>>, vector<1x1x128xf32>
    tpu.vector_store %arg5[%c0_10, %c0_11, %c0_12], %11 {strides = array<i32>} : memref<1x1x128xf32, #tpu.memory_space<vmem>>, vector<1x1x128xf32>,
    return
  }
  func.func @transform_0(%arg0: i32) -> (i32, i32) {
    %c0_i32 = arith.constant 0 : i32
    %c0_i32_0 = arith.constant 0 : i32
    return %arg0, %c0_i32 : i32, i32
  }
  func.func @transform_1(%arg0: i32) -> (i32, i32) {
    %c0_i32 = arith.constant 0 : i32
    %c0_i32_0 = arith.constant 0 : i32
    %c0_i32_1 = arith.constant 0 : i32
    return %c0_i32, %c0_i32_0 : i32, i32
  }
  func.func @transform_2(%arg0: i32) -> (i32, i32) {
    %c0_i32 = arith.constant 0 : i32
    %c0_i32_0 = arith.constant 0 : i32
    return %arg0, %c0_i32 : i32, i32
  }
  func.func @transform_3(%arg0: i32) -> (i32, i32, i32) {
    %c0_i32 = arith.constant 0 : i32
    %c0_i32_0 = arith.constant 0 : i32
    %c0_i32_1 = arith.constant 0 : i32
    return %arg0, %c0_i32, %c0_i32_0 : i32, i32, i32
  }
  func.func @transform_4(%arg0: i32) -> (i32, i32, i32) {
    %c0_i32 = arith.constant 0 : i32
    %c0_i32_0 = arith.constant 0 : i32
    %c0_i32_1 = arith.constant 0 : i32
    return %arg0, %c0_i32, %c0_i32_0 : i32, i32, i32
  }
}

module attributes {stable_mosaic.version = 11 : i64} {
  func.func @_bn_lrelu_kernel(%arg0: i32, %arg1: memref<32x128xf32, #tpu.memory_space<vmem>>, %arg2: memref<1x1x128xf32, #tpu.memory_space<vmem>>, %arg3: memref<1x1x128xf32, #tpu.memory_space<vmem>>, %arg4: memref<1x128xf32, #tpu.memory_space<vmem>>, %arg5: memref<1x128xf32, #tpu.memory_space<vmem>>, %arg6: memref<32x128xf32, #tpu.memory_space<vmem>>) attributes {dimension_semantics = [#tpu.dimension_semantics<parallel>], iteration_bounds = array<i64: 1>, scalar_prefetch = 0 : i64, scratch_operands = 0 : i64, tpu.core_type = #tpu.core_type<tc>, window_params = [{transform_indices = @transform_0, window_bounds = array<i64: 32, 128>}, {pipeline_mode = #tpu.pipeline_mode<synchronous>, transform_indices = @transform_1, window_bounds = array<i64: 1, 1, 128>}, {pipeline_mode = #tpu.pipeline_mode<synchronous>, transform_indices = @transform_2, window_bounds = array<i64: 1, 1, 128>}, {pipeline_mode = #tpu.pipeline_mode<synchronous>, transform_indices = @transform_3, window_bounds = array<i64: 1, 128>}, {pipeline_mode = #tpu.pipeline_mode<synchronous>, transform_indices = @transform_4, window_bounds = array<i64: 1, 128>}, {transform_indices = @transform_5, window_bounds = array<i64: 32, 128>}]} {
    %c0 = arith.constant 0 : index
    %c0_0 = arith.constant 0 : index
    %c0_1 = arith.constant 0 : index
    %0 = vector.load %arg2[%c0, %c0_0, %c0_1] : memref<1x1x128xf32, #tpu.memory_space<vmem>>, vector<1x1x128xf32>
    %cst = arith.constant dense<0.000000e+00> : vector<1x128xf32>
    %1 = vector.multi_reduction <add>, %0, %cst [0] : vector<1x1x128xf32> to vector<1x128xf32>
    %cst_2 = arith.constant 3.125000e-02 : f32
    %2 = vector.broadcast %cst_2 : f32 to vector<1x128xf32>
    %3 = arith.mulf %1, %2 : vector<1x128xf32>
    %c0_3 = arith.constant 0 : index
    %c0_4 = arith.constant 0 : index
    %c0_5 = arith.constant 0 : index
    %4 = vector.load %arg3[%c0_3, %c0_4, %c0_5] : memref<1x1x128xf32, #tpu.memory_space<vmem>>, vector<1x1x128xf32>
    %cst_6 = arith.constant dense<0.000000e+00> : vector<1x128xf32>
    %5 = vector.multi_reduction <add>, %4, %cst_6 [0] : vector<1x1x128xf32> to vector<1x128xf32>
    %cst_7 = arith.constant 3.125000e-02 : f32
    %6 = vector.broadcast %cst_7 : f32 to vector<1x128xf32>
    %7 = arith.mulf %5, %6 : vector<1x128xf32>
    %8 = arith.mulf %3, %3 : vector<1x128xf32>
    %9 = arith.subf %7, %8 : vector<1x128xf32>
    %c0_8 = arith.constant 0 : index
    %c0_9 = arith.constant 0 : index
    %10 = vector.load %arg4[%c0_8, %c0_9] : memref<1x128xf32, #tpu.memory_space<vmem>>, vector<1x128xf32>
    %cst_10 = arith.constant 9.99999974E-6 : f32
    %11 = vector.broadcast %cst_10 : f32 to vector<1x128xf32>
    %12 = arith.addf %9, %11 : vector<1x128xf32>
    %13 = math.rsqrt %12 : vector<1x128xf32>
    %14 = arith.mulf %10, %13 : vector<1x128xf32>
    %c0_11 = arith.constant 0 : index
    %c0_12 = arith.constant 0 : index
    %15 = vector.load %arg5[%c0_11, %c0_12] : memref<1x128xf32, #tpu.memory_space<vmem>>, vector<1x128xf32>
    %16 = arith.mulf %3, %14 : vector<1x128xf32>
    %17 = arith.subf %15, %16 : vector<1x128xf32>
    %c0_13 = arith.constant 0 : index
    %c0_14 = arith.constant 0 : index
    %18 = vector.load %arg1[%c0_13, %c0_14] : memref<32x128xf32, #tpu.memory_space<vmem>>, vector<32x128xf32>
    %19 = vector.broadcast %14 : vector<1x128xf32> to vector<32x128xf32>
    %20 = arith.mulf %18, %19 : vector<32x128xf32>
    %21 = vector.broadcast %17 : vector<1x128xf32> to vector<32x128xf32>
    %22 = arith.addf %20, %21 : vector<32x128xf32>
    %cst_15 = arith.constant 0.000000e+00 : f32
    %23 = vector.broadcast %cst_15 : f32 to vector<32x128xf32>
    %24 = arith.cmpf oge, %22, %23 : vector<32x128xf32>
    %cst_16 = arith.constant 0.00999999977 : f32
    %25 = vector.broadcast %cst_16 : f32 to vector<32x128xf32>
    %26 = arith.mulf %25, %22 : vector<32x128xf32>
    %27 = arith.select %24, %22, %26 : vector<32x128xi1>, vector<32x128xf32>
    %c0_17 = arith.constant 0 : index
    %c0_18 = arith.constant 0 : index
    %28 = vector.load %arg6[%c0_17, %c0_18] : memref<32x128xf32, #tpu.memory_space<vmem>>, vector<32x128xf32>
    tpu.vector_store %arg6[%c0_17, %c0_18], %27 {strides = array<i32>} : memref<32x128xf32, #tpu.memory_space<vmem>>, vector<32x128xf32>,
    return
  }
  func.func @transform_0(%arg0: i32) -> (i32, i32) {
    %c0_i32 = arith.constant 0 : i32
    %c0_i32_0 = arith.constant 0 : i32
    return %arg0, %c0_i32 : i32, i32
  }
  func.func @transform_1(%arg0: i32) -> (i32, i32, i32) {
    %c0_i32 = arith.constant 0 : i32
    %c0_i32_0 = arith.constant 0 : i32
    %c0_i32_1 = arith.constant 0 : i32
    %c0_i32_2 = arith.constant 0 : i32
    return %c0_i32, %c0_i32_0, %c0_i32_1 : i32, i32, i32
  }
  func.func @transform_2(%arg0: i32) -> (i32, i32, i32) {
    %c0_i32 = arith.constant 0 : i32
    %c0_i32_0 = arith.constant 0 : i32
    %c0_i32_1 = arith.constant 0 : i32
    %c0_i32_2 = arith.constant 0 : i32
    return %c0_i32, %c0_i32_0, %c0_i32_1 : i32, i32, i32
  }
  func.func @transform_3(%arg0: i32) -> (i32, i32) {
    %c0_i32 = arith.constant 0 : i32
    %c0_i32_0 = arith.constant 0 : i32
    %c0_i32_1 = arith.constant 0 : i32
    return %c0_i32, %c0_i32_0 : i32, i32
  }
  func.func @transform_4(%arg0: i32) -> (i32, i32) {
    %c0_i32 = arith.constant 0 : i32
    %c0_i32_0 = arith.constant 0 : i32
    %c0_i32_1 = arith.constant 0 : i32
    return %c0_i32, %c0_i32_0 : i32, i32
  }
  func.func @transform_5(%arg0: i32) -> (i32, i32) {
    %c0_i32 = arith.constant 0 : i32
    %c0_i32_0 = arith.constant 0 : i32
    return %arg0, %c0_i32 : i32, i32
  }
}

module attributes {stable_mosaic.version = 11 : i64} {
  func.func @_gemm_stats_kernel(%arg0: i32, %arg1: memref<16x2048xbf16, #tpu.memory_space<vmem>>, %arg2: memref<2048x256xbf16, #tpu.memory_space<vmem>>, %arg3: memref<16x256xf32, #tpu.memory_space<vmem>>, %arg4: memref<1x1x256xf32, #tpu.memory_space<vmem>>, %arg5: memref<1x1x256xf32, #tpu.memory_space<vmem>>) attributes {dimension_semantics = [#tpu.dimension_semantics<parallel>], iteration_bounds = array<i64: 1>, scalar_prefetch = 0 : i64, scratch_operands = 0 : i64, tpu.core_type = #tpu.core_type<tc>, window_params = [{transform_indices = @transform_0, window_bounds = array<i64: 16, 2048>}, {pipeline_mode = #tpu.pipeline_mode<synchronous>, transform_indices = @transform_1, window_bounds = array<i64: 2048, 256>}, {transform_indices = @transform_2, window_bounds = array<i64: 16, 256>}, {transform_indices = @transform_3, window_bounds = array<i64: 1, 1, 256>}, {transform_indices = @transform_4, window_bounds = array<i64: 1, 1, 256>}]} {
    %c0 = arith.constant 0 : index
    %c0_0 = arith.constant 0 : index
    %0 = vector.load %arg1[%c0, %c0_0] : memref<16x2048xbf16, #tpu.memory_space<vmem>>, vector<16x2048xbf16>
    %c0_1 = arith.constant 0 : index
    %c0_2 = arith.constant 0 : index
    %1 = vector.load %arg2[%c0_1, %c0_2] : memref<2048x256xbf16, #tpu.memory_space<vmem>>, vector<2048x256xbf16>
    %cst = arith.constant dense<0.000000e+00> : vector<16x256xf32>
    %2 = tpu.matmul %0, %1, %cst {dimension_numbers = #tpu.dot_dimension_numbers<[1], [0], [0], [1], [0, 0, 1, 1], [], []>} : vector<16x2048xbf16>, vector<2048x256xbf16>, vector<16x256xf32> -> vector<16x256xf32>
    %c0_3 = arith.constant 0 : index
    %c0_4 = arith.constant 0 : index
    %3 = vector.load %arg3[%c0_3, %c0_4] : memref<16x256xf32, #tpu.memory_space<vmem>>, vector<16x256xf32>
    tpu.vector_store %arg3[%c0_3, %c0_4], %2 {strides = array<i32>} : memref<16x256xf32, #tpu.memory_space<vmem>>, vector<16x256xf32>,
    %cst_5 = arith.constant dense<0.000000e+00> : vector<256xf32>
    %4 = vector.multi_reduction <add>, %2, %cst_5 [0] : vector<16x256xf32> to vector<256xf32>
    %5 = vector.shape_cast %4 : vector<256xf32> to vector<1x256xf32>
    %6 = vector.shape_cast %5 : vector<1x256xf32> to vector<1x1x256xf32>
    %c0_6 = arith.constant 0 : index
    %c0_7 = arith.constant 0 : index
    %c0_8 = arith.constant 0 : index
    %7 = vector.load %arg4[%c0_6, %c0_7, %c0_8] : memref<1x1x256xf32, #tpu.memory_space<vmem>>, vector<1x1x256xf32>
    tpu.vector_store %arg4[%c0_6, %c0_7, %c0_8], %6 {strides = array<i32>} : memref<1x1x256xf32, #tpu.memory_space<vmem>>, vector<1x1x256xf32>,
    %8 = arith.mulf %2, %2 : vector<16x256xf32>
    %cst_9 = arith.constant dense<0.000000e+00> : vector<256xf32>
    %9 = vector.multi_reduction <add>, %8, %cst_9 [0] : vector<16x256xf32> to vector<256xf32>
    %10 = vector.shape_cast %9 : vector<256xf32> to vector<1x256xf32>
    %11 = vector.shape_cast %10 : vector<1x256xf32> to vector<1x1x256xf32>
    %c0_10 = arith.constant 0 : index
    %c0_11 = arith.constant 0 : index
    %c0_12 = arith.constant 0 : index
    %12 = vector.load %arg5[%c0_10, %c0_11, %c0_12] : memref<1x1x256xf32, #tpu.memory_space<vmem>>, vector<1x1x256xf32>
    tpu.vector_store %arg5[%c0_10, %c0_11, %c0_12], %11 {strides = array<i32>} : memref<1x1x256xf32, #tpu.memory_space<vmem>>, vector<1x1x256xf32>,
    return
  }
  func.func @transform_0(%arg0: i32) -> (i32, i32) {
    %c0_i32 = arith.constant 0 : i32
    %c0_i32_0 = arith.constant 0 : i32
    return %arg0, %c0_i32 : i32, i32
  }
  func.func @transform_1(%arg0: i32) -> (i32, i32) {
    %c0_i32 = arith.constant 0 : i32
    %c0_i32_0 = arith.constant 0 : i32
    %c0_i32_1 = arith.constant 0 : i32
    return %c0_i32, %c0_i32_0 : i32, i32
  }
  func.func @transform_2(%arg0: i32) -> (i32, i32) {
    %c0_i32 = arith.constant 0 : i32
    %c0_i32_0 = arith.constant 0 : i32
    return %arg0, %c0_i32 : i32, i32
  }
  func.func @transform_3(%arg0: i32) -> (i32, i32, i32) {
    %c0_i32 = arith.constant 0 : i32
    %c0_i32_0 = arith.constant 0 : i32
    %c0_i32_1 = arith.constant 0 : i32
    return %arg0, %c0_i32, %c0_i32_0 : i32, i32, i32
  }
  func.func @transform_4(%arg0: i32) -> (i32, i32, i32) {
    %c0_i32 = arith.constant 0 : i32
    %c0_i32_0 = arith.constant 0 : i32
    %c0_i32_1 = arith.constant 0 : i32
    return %arg0, %c0_i32, %c0_i32_0 : i32, i32, i32
  }
}

module attributes {stable_mosaic.version = 11 : i64} {
  func.func @_bn_lrelu_kernel(%arg0: i32, %arg1: memref<16x256xf32, #tpu.memory_space<vmem>>, %arg2: memref<1x1x256xf32, #tpu.memory_space<vmem>>, %arg3: memref<1x1x256xf32, #tpu.memory_space<vmem>>, %arg4: memref<1x256xf32, #tpu.memory_space<vmem>>, %arg5: memref<1x256xf32, #tpu.memory_space<vmem>>, %arg6: memref<16x256xf32, #tpu.memory_space<vmem>>) attributes {dimension_semantics = [#tpu.dimension_semantics<parallel>], iteration_bounds = array<i64: 1>, scalar_prefetch = 0 : i64, scratch_operands = 0 : i64, tpu.core_type = #tpu.core_type<tc>, window_params = [{transform_indices = @transform_0, window_bounds = array<i64: 16, 256>}, {pipeline_mode = #tpu.pipeline_mode<synchronous>, transform_indices = @transform_1, window_bounds = array<i64: 1, 1, 256>}, {pipeline_mode = #tpu.pipeline_mode<synchronous>, transform_indices = @transform_2, window_bounds = array<i64: 1, 1, 256>}, {pipeline_mode = #tpu.pipeline_mode<synchronous>, transform_indices = @transform_3, window_bounds = array<i64: 1, 256>}, {pipeline_mode = #tpu.pipeline_mode<synchronous>, transform_indices = @transform_4, window_bounds = array<i64: 1, 256>}, {transform_indices = @transform_5, window_bounds = array<i64: 16, 256>}]} {
    %c0 = arith.constant 0 : index
    %c0_0 = arith.constant 0 : index
    %c0_1 = arith.constant 0 : index
    %0 = vector.load %arg2[%c0, %c0_0, %c0_1] : memref<1x1x256xf32, #tpu.memory_space<vmem>>, vector<1x1x256xf32>
    %cst = arith.constant dense<0.000000e+00> : vector<1x256xf32>
    %1 = vector.multi_reduction <add>, %0, %cst [0] : vector<1x1x256xf32> to vector<1x256xf32>
    %cst_2 = arith.constant 1.250000e-01 : f32
    %2 = vector.broadcast %cst_2 : f32 to vector<1x256xf32>
    %3 = arith.mulf %1, %2 : vector<1x256xf32>
    %c0_3 = arith.constant 0 : index
    %c0_4 = arith.constant 0 : index
    %c0_5 = arith.constant 0 : index
    %4 = vector.load %arg3[%c0_3, %c0_4, %c0_5] : memref<1x1x256xf32, #tpu.memory_space<vmem>>, vector<1x1x256xf32>
    %cst_6 = arith.constant dense<0.000000e+00> : vector<1x256xf32>
    %5 = vector.multi_reduction <add>, %4, %cst_6 [0] : vector<1x1x256xf32> to vector<1x256xf32>
    %cst_7 = arith.constant 1.250000e-01 : f32
    %6 = vector.broadcast %cst_7 : f32 to vector<1x256xf32>
    %7 = arith.mulf %5, %6 : vector<1x256xf32>
    %8 = arith.mulf %3, %3 : vector<1x256xf32>
    %9 = arith.subf %7, %8 : vector<1x256xf32>
    %c0_8 = arith.constant 0 : index
    %c0_9 = arith.constant 0 : index
    %10 = vector.load %arg4[%c0_8, %c0_9] : memref<1x256xf32, #tpu.memory_space<vmem>>, vector<1x256xf32>
    %cst_10 = arith.constant 9.99999974E-6 : f32
    %11 = vector.broadcast %cst_10 : f32 to vector<1x256xf32>
    %12 = arith.addf %9, %11 : vector<1x256xf32>
    %13 = math.rsqrt %12 : vector<1x256xf32>
    %14 = arith.mulf %10, %13 : vector<1x256xf32>
    %c0_11 = arith.constant 0 : index
    %c0_12 = arith.constant 0 : index
    %15 = vector.load %arg5[%c0_11, %c0_12] : memref<1x256xf32, #tpu.memory_space<vmem>>, vector<1x256xf32>
    %16 = arith.mulf %3, %14 : vector<1x256xf32>
    %17 = arith.subf %15, %16 : vector<1x256xf32>
    %c0_13 = arith.constant 0 : index
    %c0_14 = arith.constant 0 : index
    %18 = vector.load %arg1[%c0_13, %c0_14] : memref<16x256xf32, #tpu.memory_space<vmem>>, vector<16x256xf32>
    %19 = vector.broadcast %14 : vector<1x256xf32> to vector<16x256xf32>
    %20 = arith.mulf %18, %19 : vector<16x256xf32>
    %21 = vector.broadcast %17 : vector<1x256xf32> to vector<16x256xf32>
    %22 = arith.addf %20, %21 : vector<16x256xf32>
    %cst_15 = arith.constant 0.000000e+00 : f32
    %23 = vector.broadcast %cst_15 : f32 to vector<16x256xf32>
    %24 = arith.cmpf oge, %22, %23 : vector<16x256xf32>
    %cst_16 = arith.constant 0.00999999977 : f32
    %25 = vector.broadcast %cst_16 : f32 to vector<16x256xf32>
    %26 = arith.mulf %25, %22 : vector<16x256xf32>
    %27 = arith.select %24, %22, %26 : vector<16x256xi1>, vector<16x256xf32>
    %c0_17 = arith.constant 0 : index
    %c0_18 = arith.constant 0 : index
    %28 = vector.load %arg6[%c0_17, %c0_18] : memref<16x256xf32, #tpu.memory_space<vmem>>, vector<16x256xf32>
    tpu.vector_store %arg6[%c0_17, %c0_18], %27 {strides = array<i32>} : memref<16x256xf32, #tpu.memory_space<vmem>>, vector<16x256xf32>,
    return
  }
  func.func @transform_0(%arg0: i32) -> (i32, i32) {
    %c0_i32 = arith.constant 0 : i32
    %c0_i32_0 = arith.constant 0 : i32
    return %arg0, %c0_i32 : i32, i32
  }
  func.func @transform_1(%arg0: i32) -> (i32, i32, i32) {
    %c0_i32 = arith.constant 0 : i32
    %c0_i32_0 = arith.constant 0 : i32
    %c0_i32_1 = arith.constant 0 : i32
    %c0_i32_2 = arith.constant 0 : i32
    return %c0_i32, %c0_i32_0, %c0_i32_1 : i32, i32, i32
  }
  func.func @transform_2(%arg0: i32) -> (i32, i32, i32) {
    %c0_i32 = arith.constant 0 : i32
    %c0_i32_0 = arith.constant 0 : i32
    %c0_i32_1 = arith.constant 0 : i32
    %c0_i32_2 = arith.constant 0 : i32
    return %c0_i32, %c0_i32_0, %c0_i32_1 : i32, i32, i32
  }
  func.func @transform_3(%arg0: i32) -> (i32, i32) {
    %c0_i32 = arith.constant 0 : i32
    %c0_i32_0 = arith.constant 0 : i32
    %c0_i32_1 = arith.constant 0 : i32
    return %c0_i32, %c0_i32_0 : i32, i32
  }
  func.func @transform_4(%arg0: i32) -> (i32, i32) {
    %c0_i32 = arith.constant 0 : i32
    %c0_i32_0 = arith.constant 0 : i32
    %c0_i32_1 = arith.constant 0 : i32
    return %c0_i32, %c0_i32_0 : i32, i32
  }
  func.func @transform_5(%arg0: i32) -> (i32, i32) {
    %c0_i32 = arith.constant 0 : i32
    %c0_i32_0 = arith.constant 0 : i32
    return %arg0, %c0_i32 : i32, i32
  }
}

module attributes {stable_mosaic.version = 11 : i64} {
  func.func @_gemm_stats_kernel(%arg0: i32, %arg1: memref<16x1024xbf16, #tpu.memory_space<vmem>>, %arg2: memref<1024x128xbf16, #tpu.memory_space<vmem>>, %arg3: memref<16x128xf32, #tpu.memory_space<vmem>>, %arg4: memref<1x1x128xf32, #tpu.memory_space<vmem>>, %arg5: memref<1x1x128xf32, #tpu.memory_space<vmem>>) attributes {dimension_semantics = [#tpu.dimension_semantics<parallel>], iteration_bounds = array<i64: 1>, scalar_prefetch = 0 : i64, scratch_operands = 0 : i64, tpu.core_type = #tpu.core_type<tc>, window_params = [{transform_indices = @transform_0, window_bounds = array<i64: 16, 1024>}, {pipeline_mode = #tpu.pipeline_mode<synchronous>, transform_indices = @transform_1, window_bounds = array<i64: 1024, 128>}, {transform_indices = @transform_2, window_bounds = array<i64: 16, 128>}, {transform_indices = @transform_3, window_bounds = array<i64: 1, 1, 128>}, {transform_indices = @transform_4, window_bounds = array<i64: 1, 1, 128>}]} {
    %c0 = arith.constant 0 : index
    %c0_0 = arith.constant 0 : index
    %0 = vector.load %arg1[%c0, %c0_0] : memref<16x1024xbf16, #tpu.memory_space<vmem>>, vector<16x1024xbf16>
    %c0_1 = arith.constant 0 : index
    %c0_2 = arith.constant 0 : index
    %1 = vector.load %arg2[%c0_1, %c0_2] : memref<1024x128xbf16, #tpu.memory_space<vmem>>, vector<1024x128xbf16>
    %cst = arith.constant dense<0.000000e+00> : vector<16x128xf32>
    %2 = tpu.matmul %0, %1, %cst {dimension_numbers = #tpu.dot_dimension_numbers<[1], [0], [0], [1], [0, 0, 1, 1], [], []>} : vector<16x1024xbf16>, vector<1024x128xbf16>, vector<16x128xf32> -> vector<16x128xf32>
    %c0_3 = arith.constant 0 : index
    %c0_4 = arith.constant 0 : index
    %3 = vector.load %arg3[%c0_3, %c0_4] : memref<16x128xf32, #tpu.memory_space<vmem>>, vector<16x128xf32>
    tpu.vector_store %arg3[%c0_3, %c0_4], %2 {strides = array<i32>} : memref<16x128xf32, #tpu.memory_space<vmem>>, vector<16x128xf32>,
    %cst_5 = arith.constant dense<0.000000e+00> : vector<128xf32>
    %4 = vector.multi_reduction <add>, %2, %cst_5 [0] : vector<16x128xf32> to vector<128xf32>
    %5 = vector.shape_cast %4 : vector<128xf32> to vector<1x128xf32>
    %6 = vector.shape_cast %5 : vector<1x128xf32> to vector<1x1x128xf32>
    %c0_6 = arith.constant 0 : index
    %c0_7 = arith.constant 0 : index
    %c0_8 = arith.constant 0 : index
    %7 = vector.load %arg4[%c0_6, %c0_7, %c0_8] : memref<1x1x128xf32, #tpu.memory_space<vmem>>, vector<1x1x128xf32>
    tpu.vector_store %arg4[%c0_6, %c0_7, %c0_8], %6 {strides = array<i32>} : memref<1x1x128xf32, #tpu.memory_space<vmem>>, vector<1x1x128xf32>,
    %8 = arith.mulf %2, %2 : vector<16x128xf32>
    %cst_9 = arith.constant dense<0.000000e+00> : vector<128xf32>
    %9 = vector.multi_reduction <add>, %8, %cst_9 [0] : vector<16x128xf32> to vector<128xf32>
    %10 = vector.shape_cast %9 : vector<128xf32> to vector<1x128xf32>
    %11 = vector.shape_cast %10 : vector<1x128xf32> to vector<1x1x128xf32>
    %c0_10 = arith.constant 0 : index
    %c0_11 = arith.constant 0 : index
    %c0_12 = arith.constant 0 : index
    %12 = vector.load %arg5[%c0_10, %c0_11, %c0_12] : memref<1x1x128xf32, #tpu.memory_space<vmem>>, vector<1x1x128xf32>
    tpu.vector_store %arg5[%c0_10, %c0_11, %c0_12], %11 {strides = array<i32>} : memref<1x1x128xf32, #tpu.memory_space<vmem>>, vector<1x1x128xf32>,
    return
  }
  func.func @transform_0(%arg0: i32) -> (i32, i32) {
    %c0_i32 = arith.constant 0 : i32
    %c0_i32_0 = arith.constant 0 : i32
    return %arg0, %c0_i32 : i32, i32
  }
  func.func @transform_1(%arg0: i32) -> (i32, i32) {
    %c0_i32 = arith.constant 0 : i32
    %c0_i32_0 = arith.constant 0 : i32
    %c0_i32_1 = arith.constant 0 : i32
    return %c0_i32, %c0_i32_0 : i32, i32
  }
  func.func @transform_2(%arg0: i32) -> (i32, i32) {
    %c0_i32 = arith.constant 0 : i32
    %c0_i32_0 = arith.constant 0 : i32
    return %arg0, %c0_i32 : i32, i32
  }
  func.func @transform_3(%arg0: i32) -> (i32, i32, i32) {
    %c0_i32 = arith.constant 0 : i32
    %c0_i32_0 = arith.constant 0 : i32
    %c0_i32_1 = arith.constant 0 : i32
    return %arg0, %c0_i32, %c0_i32_0 : i32, i32, i32
  }
  func.func @transform_4(%arg0: i32) -> (i32, i32, i32) {
    %c0_i32 = arith.constant 0 : i32
    %c0_i32_0 = arith.constant 0 : i32
    %c0_i32_1 = arith.constant 0 : i32
    return %arg0, %c0_i32, %c0_i32_0 : i32, i32, i32
  }
}

module attributes {stable_mosaic.version = 11 : i64} {
  func.func @_bn_lrelu_kernel(%arg0: i32, %arg1: memref<32x128xf32, #tpu.memory_space<vmem>>, %arg2: memref<4x1x128xf32, #tpu.memory_space<vmem>>, %arg3: memref<4x1x128xf32, #tpu.memory_space<vmem>>, %arg4: memref<1x128xf32, #tpu.memory_space<vmem>>, %arg5: memref<1x128xf32, #tpu.memory_space<vmem>>, %arg6: memref<32x128xf32, #tpu.memory_space<vmem>>, %arg7: memref<32x128xf32, #tpu.memory_space<vmem>>) attributes {dimension_semantics = [#tpu.dimension_semantics<parallel>], iteration_bounds = array<i64: 1>, scalar_prefetch = 0 : i64, scratch_operands = 0 : i64, tpu.core_type = #tpu.core_type<tc>, window_params = [{transform_indices = @transform_0, window_bounds = array<i64: 32, 128>}, {pipeline_mode = #tpu.pipeline_mode<synchronous>, transform_indices = @transform_1, window_bounds = array<i64: 4, 1, 128>}, {pipeline_mode = #tpu.pipeline_mode<synchronous>, transform_indices = @transform_2, window_bounds = array<i64: 4, 1, 128>}, {pipeline_mode = #tpu.pipeline_mode<synchronous>, transform_indices = @transform_3, window_bounds = array<i64: 1, 128>}, {pipeline_mode = #tpu.pipeline_mode<synchronous>, transform_indices = @transform_4, window_bounds = array<i64: 1, 128>}, {transform_indices = @transform_5, window_bounds = array<i64: 32, 128>}, {transform_indices = @transform_6, window_bounds = array<i64: 32, 128>}]} {
    %c0 = arith.constant 0 : index
    %c0_0 = arith.constant 0 : index
    %c0_1 = arith.constant 0 : index
    %0 = vector.load %arg2[%c0, %c0_0, %c0_1] : memref<4x1x128xf32, #tpu.memory_space<vmem>>, vector<4x1x128xf32>
    %cst = arith.constant dense<0.000000e+00> : vector<1x128xf32>
    %1 = vector.multi_reduction <add>, %0, %cst [0] : vector<4x1x128xf32> to vector<1x128xf32>
    %cst_2 = arith.constant 3.125000e-02 : f32
    %2 = vector.broadcast %cst_2 : f32 to vector<1x128xf32>
    %3 = arith.mulf %1, %2 : vector<1x128xf32>
    %c0_3 = arith.constant 0 : index
    %c0_4 = arith.constant 0 : index
    %c0_5 = arith.constant 0 : index
    %4 = vector.load %arg3[%c0_3, %c0_4, %c0_5] : memref<4x1x128xf32, #tpu.memory_space<vmem>>, vector<4x1x128xf32>
    %cst_6 = arith.constant dense<0.000000e+00> : vector<1x128xf32>
    %5 = vector.multi_reduction <add>, %4, %cst_6 [0] : vector<4x1x128xf32> to vector<1x128xf32>
    %cst_7 = arith.constant 3.125000e-02 : f32
    %6 = vector.broadcast %cst_7 : f32 to vector<1x128xf32>
    %7 = arith.mulf %5, %6 : vector<1x128xf32>
    %8 = arith.mulf %3, %3 : vector<1x128xf32>
    %9 = arith.subf %7, %8 : vector<1x128xf32>
    %c0_8 = arith.constant 0 : index
    %c0_9 = arith.constant 0 : index
    %10 = vector.load %arg4[%c0_8, %c0_9] : memref<1x128xf32, #tpu.memory_space<vmem>>, vector<1x128xf32>
    %cst_10 = arith.constant 9.99999974E-6 : f32
    %11 = vector.broadcast %cst_10 : f32 to vector<1x128xf32>
    %12 = arith.addf %9, %11 : vector<1x128xf32>
    %13 = math.rsqrt %12 : vector<1x128xf32>
    %14 = arith.mulf %10, %13 : vector<1x128xf32>
    %c0_11 = arith.constant 0 : index
    %c0_12 = arith.constant 0 : index
    %15 = vector.load %arg5[%c0_11, %c0_12] : memref<1x128xf32, #tpu.memory_space<vmem>>, vector<1x128xf32>
    %16 = arith.mulf %3, %14 : vector<1x128xf32>
    %17 = arith.subf %15, %16 : vector<1x128xf32>
    %c0_13 = arith.constant 0 : index
    %c0_14 = arith.constant 0 : index
    %18 = vector.load %arg1[%c0_13, %c0_14] : memref<32x128xf32, #tpu.memory_space<vmem>>, vector<32x128xf32>
    %19 = vector.broadcast %14 : vector<1x128xf32> to vector<32x128xf32>
    %20 = arith.mulf %18, %19 : vector<32x128xf32>
    %21 = vector.broadcast %17 : vector<1x128xf32> to vector<32x128xf32>
    %22 = arith.addf %20, %21 : vector<32x128xf32>
    %cst_15 = arith.constant 0.000000e+00 : f32
    %23 = vector.broadcast %cst_15 : f32 to vector<32x128xf32>
    %24 = arith.cmpf oge, %22, %23 : vector<32x128xf32>
    %cst_16 = arith.constant 0.00999999977 : f32
    %25 = vector.broadcast %cst_16 : f32 to vector<32x128xf32>
    %26 = arith.mulf %25, %22 : vector<32x128xf32>
    %27 = arith.select %24, %22, %26 : vector<32x128xi1>, vector<32x128xf32>
    %c0_17 = arith.constant 0 : index
    %c0_18 = arith.constant 0 : index
    %28 = vector.load %arg6[%c0_17, %c0_18] : memref<32x128xf32, #tpu.memory_space<vmem>>, vector<32x128xf32>
    %29 = arith.addf %27, %28 : vector<32x128xf32>
    %c0_19 = arith.constant 0 : index
    %c0_20 = arith.constant 0 : index
    %30 = vector.load %arg7[%c0_19, %c0_20] : memref<32x128xf32, #tpu.memory_space<vmem>>, vector<32x128xf32>
    tpu.vector_store %arg7[%c0_19, %c0_20], %29 {strides = array<i32>} : memref<32x128xf32, #tpu.memory_space<vmem>>, vector<32x128xf32>,
    return
  }
  func.func @transform_0(%arg0: i32) -> (i32, i32) {
    %c0_i32 = arith.constant 0 : i32
    %c0_i32_0 = arith.constant 0 : i32
    return %arg0, %c0_i32 : i32, i32
  }
  func.func @transform_1(%arg0: i32) -> (i32, i32, i32) {
    %c0_i32 = arith.constant 0 : i32
    %c0_i32_0 = arith.constant 0 : i32
    %c0_i32_1 = arith.constant 0 : i32
    %c0_i32_2 = arith.constant 0 : i32
    return %c0_i32, %c0_i32_0, %c0_i32_1 : i32, i32, i32
  }
  func.func @transform_2(%arg0: i32) -> (i32, i32, i32) {
    %c0_i32 = arith.constant 0 : i32
    %c0_i32_0 = arith.constant 0 : i32
    %c0_i32_1 = arith.constant 0 : i32
    %c0_i32_2 = arith.constant 0 : i32
    return %c0_i32, %c0_i32_0, %c0_i32_1 : i32, i32, i32
  }
  func.func @transform_3(%arg0: i32) -> (i32, i32) {
    %c0_i32 = arith.constant 0 : i32
    %c0_i32_0 = arith.constant 0 : i32
    %c0_i32_1 = arith.constant 0 : i32
    return %c0_i32, %c0_i32_0 : i32, i32
  }
  func.func @transform_4(%arg0: i32) -> (i32, i32) {
    %c0_i32 = arith.constant 0 : i32
    %c0_i32_0 = arith.constant 0 : i32
    %c0_i32_1 = arith.constant 0 : i32
    return %c0_i32, %c0_i32_0 : i32, i32
  }
  func.func @transform_5(%arg0: i32) -> (i32, i32) {
    %c0_i32 = arith.constant 0 : i32
    %c0_i32_0 = arith.constant 0 : i32
    return %arg0, %c0_i32 : i32, i32
  }
  func.func @transform_6(%arg0: i32) -> (i32, i32) {
    %c0_i32 = arith.constant 0 : i32
    %c0_i32_0 = arith.constant 0 : i32
    return %arg0, %c0_i32 : i32, i32
  }
}

module attributes {stable_mosaic.version = 11 : i64} {
  func.func @_gemm_stats_kernel(%arg0: i32, %arg1: memref<32x512xbf16, #tpu.memory_space<vmem>>, %arg2: memref<512x128xbf16, #tpu.memory_space<vmem>>, %arg3: memref<32x128xf32, #tpu.memory_space<vmem>>, %arg4: memref<1x1x128xf32, #tpu.memory_space<vmem>>, %arg5: memref<1x1x128xf32, #tpu.memory_space<vmem>>) attributes {dimension_semantics = [#tpu.dimension_semantics<parallel>], iteration_bounds = array<i64: 1>, scalar_prefetch = 0 : i64, scratch_operands = 0 : i64, tpu.core_type = #tpu.core_type<tc>, window_params = [{transform_indices = @transform_0, window_bounds = array<i64: 32, 512>}, {pipeline_mode = #tpu.pipeline_mode<synchronous>, transform_indices = @transform_1, window_bounds = array<i64: 512, 128>}, {transform_indices = @transform_2, window_bounds = array<i64: 32, 128>}, {transform_indices = @transform_3, window_bounds = array<i64: 1, 1, 128>}, {transform_indices = @transform_4, window_bounds = array<i64: 1, 1, 128>}]} {
    %c0 = arith.constant 0 : index
    %c0_0 = arith.constant 0 : index
    %0 = vector.load %arg1[%c0, %c0_0] : memref<32x512xbf16, #tpu.memory_space<vmem>>, vector<32x512xbf16>
    %c0_1 = arith.constant 0 : index
    %c0_2 = arith.constant 0 : index
    %1 = vector.load %arg2[%c0_1, %c0_2] : memref<512x128xbf16, #tpu.memory_space<vmem>>, vector<512x128xbf16>
    %cst = arith.constant dense<0.000000e+00> : vector<32x128xf32>
    %2 = tpu.matmul %0, %1, %cst {dimension_numbers = #tpu.dot_dimension_numbers<[1], [0], [0], [1], [0, 0, 1, 1], [], []>} : vector<32x512xbf16>, vector<512x128xbf16>, vector<32x128xf32> -> vector<32x128xf32>
    %c0_3 = arith.constant 0 : index
    %c0_4 = arith.constant 0 : index
    %3 = vector.load %arg3[%c0_3, %c0_4] : memref<32x128xf32, #tpu.memory_space<vmem>>, vector<32x128xf32>
    tpu.vector_store %arg3[%c0_3, %c0_4], %2 {strides = array<i32>} : memref<32x128xf32, #tpu.memory_space<vmem>>, vector<32x128xf32>,
    %cst_5 = arith.constant dense<0.000000e+00> : vector<128xf32>
    %4 = vector.multi_reduction <add>, %2, %cst_5 [0] : vector<32x128xf32> to vector<128xf32>
    %5 = vector.shape_cast %4 : vector<128xf32> to vector<1x128xf32>
    %6 = vector.shape_cast %5 : vector<1x128xf32> to vector<1x1x128xf32>
    %c0_6 = arith.constant 0 : index
    %c0_7 = arith.constant 0 : index
    %c0_8 = arith.constant 0 : index
    %7 = vector.load %arg4[%c0_6, %c0_7, %c0_8] : memref<1x1x128xf32, #tpu.memory_space<vmem>>, vector<1x1x128xf32>
    tpu.vector_store %arg4[%c0_6, %c0_7, %c0_8], %6 {strides = array<i32>} : memref<1x1x128xf32, #tpu.memory_space<vmem>>, vector<1x1x128xf32>,
    %8 = arith.mulf %2, %2 : vector<32x128xf32>
    %cst_9 = arith.constant dense<0.000000e+00> : vector<128xf32>
    %9 = vector.multi_reduction <add>, %8, %cst_9 [0] : vector<32x128xf32> to vector<128xf32>
    %10 = vector.shape_cast %9 : vector<128xf32> to vector<1x128xf32>
    %11 = vector.shape_cast %10 : vector<1x128xf32> to vector<1x1x128xf32>
    %c0_10 = arith.constant 0 : index
    %c0_11 = arith.constant 0 : index
    %c0_12 = arith.constant 0 : index
    %12 = vector.load %arg5[%c0_10, %c0_11, %c0_12] : memref<1x1x128xf32, #tpu.memory_space<vmem>>, vector<1x1x128xf32>
    tpu.vector_store %arg5[%c0_10, %c0_11, %c0_12], %11 {strides = array<i32>} : memref<1x1x128xf32, #tpu.memory_space<vmem>>, vector<1x1x128xf32>,
    return
  }
  func.func @transform_0(%arg0: i32) -> (i32, i32) {
    %c0_i32 = arith.constant 0 : i32
    %c0_i32_0 = arith.constant 0 : i32
    return %arg0, %c0_i32 : i32, i32
  }
  func.func @transform_1(%arg0: i32) -> (i32, i32) {
    %c0_i32 = arith.constant 0 : i32
    %c0_i32_0 = arith.constant 0 : i32
    %c0_i32_1 = arith.constant 0 : i32
    return %c0_i32, %c0_i32_0 : i32, i32
  }
  func.func @transform_2(%arg0: i32) -> (i32, i32) {
    %c0_i32 = arith.constant 0 : i32
    %c0_i32_0 = arith.constant 0 : i32
    return %arg0, %c0_i32 : i32, i32
  }
  func.func @transform_3(%arg0: i32) -> (i32, i32, i32) {
    %c0_i32 = arith.constant 0 : i32
    %c0_i32_0 = arith.constant 0 : i32
    %c0_i32_1 = arith.constant 0 : i32
    return %arg0, %c0_i32, %c0_i32_0 : i32, i32, i32
  }
  func.func @transform_4(%arg0: i32) -> (i32, i32, i32) {
    %c0_i32 = arith.constant 0 : i32
    %c0_i32_0 = arith.constant 0 : i32
    %c0_i32_1 = arith.constant 0 : i32
    return %arg0, %c0_i32, %c0_i32_0 : i32, i32, i32
  }
}

module attributes {stable_mosaic.version = 11 : i64} {
  func.func @_bn_lrelu_kernel(%arg0: i32, %arg1: memref<128x128xf32, #tpu.memory_space<vmem>>, %arg2: memref<4x1x128xf32, #tpu.memory_space<vmem>>, %arg3: memref<4x1x128xf32, #tpu.memory_space<vmem>>, %arg4: memref<1x128xf32, #tpu.memory_space<vmem>>, %arg5: memref<1x128xf32, #tpu.memory_space<vmem>>, %arg6: memref<128x128xf32, #tpu.memory_space<vmem>>, %arg7: memref<128x128xf32, #tpu.memory_space<vmem>>) attributes {dimension_semantics = [#tpu.dimension_semantics<parallel>], iteration_bounds = array<i64: 1>, scalar_prefetch = 0 : i64, scratch_operands = 0 : i64, tpu.core_type = #tpu.core_type<tc>, window_params = [{transform_indices = @transform_0, window_bounds = array<i64: 128, 128>}, {pipeline_mode = #tpu.pipeline_mode<synchronous>, transform_indices = @transform_1, window_bounds = array<i64: 4, 1, 128>}, {pipeline_mode = #tpu.pipeline_mode<synchronous>, transform_indices = @transform_2, window_bounds = array<i64: 4, 1, 128>}, {pipeline_mode = #tpu.pipeline_mode<synchronous>, transform_indices = @transform_3, window_bounds = array<i64: 1, 128>}, {pipeline_mode = #tpu.pipeline_mode<synchronous>, transform_indices = @transform_4, window_bounds = array<i64: 1, 128>}, {transform_indices = @transform_5, window_bounds = array<i64: 128, 128>}, {transform_indices = @transform_6, window_bounds = array<i64: 128, 128>}]} {
    %c0 = arith.constant 0 : index
    %c0_0 = arith.constant 0 : index
    %c0_1 = arith.constant 0 : index
    %0 = vector.load %arg2[%c0, %c0_0, %c0_1] : memref<4x1x128xf32, #tpu.memory_space<vmem>>, vector<4x1x128xf32>
    %cst = arith.constant dense<0.000000e+00> : vector<1x128xf32>
    %1 = vector.multi_reduction <add>, %0, %cst [0] : vector<4x1x128xf32> to vector<1x128xf32>
    %cst_2 = arith.constant 7.812500e-03 : f32
    %2 = vector.broadcast %cst_2 : f32 to vector<1x128xf32>
    %3 = arith.mulf %1, %2 : vector<1x128xf32>
    %c0_3 = arith.constant 0 : index
    %c0_4 = arith.constant 0 : index
    %c0_5 = arith.constant 0 : index
    %4 = vector.load %arg3[%c0_3, %c0_4, %c0_5] : memref<4x1x128xf32, #tpu.memory_space<vmem>>, vector<4x1x128xf32>
    %cst_6 = arith.constant dense<0.000000e+00> : vector<1x128xf32>
    %5 = vector.multi_reduction <add>, %4, %cst_6 [0] : vector<4x1x128xf32> to vector<1x128xf32>
    %cst_7 = arith.constant 7.812500e-03 : f32
    %6 = vector.broadcast %cst_7 : f32 to vector<1x128xf32>
    %7 = arith.mulf %5, %6 : vector<1x128xf32>
    %8 = arith.mulf %3, %3 : vector<1x128xf32>
    %9 = arith.subf %7, %8 : vector<1x128xf32>
    %c0_8 = arith.constant 0 : index
    %c0_9 = arith.constant 0 : index
    %10 = vector.load %arg4[%c0_8, %c0_9] : memref<1x128xf32, #tpu.memory_space<vmem>>, vector<1x128xf32>
    %cst_10 = arith.constant 9.99999974E-6 : f32
    %11 = vector.broadcast %cst_10 : f32 to vector<1x128xf32>
    %12 = arith.addf %9, %11 : vector<1x128xf32>
    %13 = math.rsqrt %12 : vector<1x128xf32>
    %14 = arith.mulf %10, %13 : vector<1x128xf32>
    %c0_11 = arith.constant 0 : index
    %c0_12 = arith.constant 0 : index
    %15 = vector.load %arg5[%c0_11, %c0_12] : memref<1x128xf32, #tpu.memory_space<vmem>>, vector<1x128xf32>
    %16 = arith.mulf %3, %14 : vector<1x128xf32>
    %17 = arith.subf %15, %16 : vector<1x128xf32>
    %c0_13 = arith.constant 0 : index
    %c0_14 = arith.constant 0 : index
    %18 = vector.load %arg1[%c0_13, %c0_14] : memref<128x128xf32, #tpu.memory_space<vmem>>, vector<128x128xf32>
    %19 = vector.broadcast %14 : vector<1x128xf32> to vector<128x128xf32>
    %20 = arith.mulf %18, %19 : vector<128x128xf32>
    %21 = vector.broadcast %17 : vector<1x128xf32> to vector<128x128xf32>
    %22 = arith.addf %20, %21 : vector<128x128xf32>
    %cst_15 = arith.constant 0.000000e+00 : f32
    %23 = vector.broadcast %cst_15 : f32 to vector<128x128xf32>
    %24 = arith.cmpf oge, %22, %23 : vector<128x128xf32>
    %cst_16 = arith.constant 0.00999999977 : f32
    %25 = vector.broadcast %cst_16 : f32 to vector<128x128xf32>
    %26 = arith.mulf %25, %22 : vector<128x128xf32>
    %27 = arith.select %24, %22, %26 : vector<128x128xi1>, vector<128x128xf32>
    %c0_17 = arith.constant 0 : index
    %c0_18 = arith.constant 0 : index
    %28 = vector.load %arg6[%c0_17, %c0_18] : memref<128x128xf32, #tpu.memory_space<vmem>>, vector<128x128xf32>
    %29 = arith.addf %27, %28 : vector<128x128xf32>
    %c0_19 = arith.constant 0 : index
    %c0_20 = arith.constant 0 : index
    %30 = vector.load %arg7[%c0_19, %c0_20] : memref<128x128xf32, #tpu.memory_space<vmem>>, vector<128x128xf32>
    tpu.vector_store %arg7[%c0_19, %c0_20], %29 {strides = array<i32>} : memref<128x128xf32, #tpu.memory_space<vmem>>, vector<128x128xf32>,
    return
  }
  func.func @transform_0(%arg0: i32) -> (i32, i32) {
    %c0_i32 = arith.constant 0 : i32
    %c0_i32_0 = arith.constant 0 : i32
    return %arg0, %c0_i32 : i32, i32
  }
  func.func @transform_1(%arg0: i32) -> (i32, i32, i32) {
    %c0_i32 = arith.constant 0 : i32
    %c0_i32_0 = arith.constant 0 : i32
    %c0_i32_1 = arith.constant 0 : i32
    %c0_i32_2 = arith.constant 0 : i32
    return %c0_i32, %c0_i32_0, %c0_i32_1 : i32, i32, i32
  }
  func.func @transform_2(%arg0: i32) -> (i32, i32, i32) {
    %c0_i32 = arith.constant 0 : i32
    %c0_i32_0 = arith.constant 0 : i32
    %c0_i32_1 = arith.constant 0 : i32
    %c0_i32_2 = arith.constant 0 : i32
    return %c0_i32, %c0_i32_0, %c0_i32_1 : i32, i32, i32
  }
  func.func @transform_3(%arg0: i32) -> (i32, i32) {
    %c0_i32 = arith.constant 0 : i32
    %c0_i32_0 = arith.constant 0 : i32
    %c0_i32_1 = arith.constant 0 : i32
    return %c0_i32, %c0_i32_0 : i32, i32
  }
  func.func @transform_4(%arg0: i32) -> (i32, i32) {
    %c0_i32 = arith.constant 0 : i32
    %c0_i32_0 = arith.constant 0 : i32
    %c0_i32_1 = arith.constant 0 : i32
    return %c0_i32, %c0_i32_0 : i32, i32
  }
  func.func @transform_5(%arg0: i32) -> (i32, i32) {
    %c0_i32 = arith.constant 0 : i32
    %c0_i32_0 = arith.constant 0 : i32
    return %arg0, %c0_i32 : i32, i32
  }
  func.func @transform_6(%arg0: i32) -> (i32, i32) {
    %c0_i32 = arith.constant 0 : i32
    %c0_i32_0 = arith.constant 0 : i32
    return %arg0, %c0_i32 : i32, i32
  }
}

module attributes {stable_mosaic.version = 11 : i64} {
  func.func @_gemm_bias_kernel(%arg0: i32, %arg1: memref<128x256xbf16, #tpu.memory_space<vmem>>, %arg2: memref<256x128xbf16, #tpu.memory_space<vmem>>, %arg3: memref<1x128xf32, #tpu.memory_space<vmem>>, %arg4: memref<128x128xf32, #tpu.memory_space<vmem>>) attributes {dimension_semantics = [#tpu.dimension_semantics<parallel>], iteration_bounds = array<i64: 1>, scalar_prefetch = 0 : i64, scratch_operands = 0 : i64, tpu.core_type = #tpu.core_type<tc>, window_params = [{transform_indices = @transform_0, window_bounds = array<i64: 128, 256>}, {pipeline_mode = #tpu.pipeline_mode<synchronous>, transform_indices = @transform_1, window_bounds = array<i64: 256, 128>}, {pipeline_mode = #tpu.pipeline_mode<synchronous>, transform_indices = @transform_2, window_bounds = array<i64: 1, 128>}, {transform_indices = @transform_3, window_bounds = array<i64: 128, 128>}]} {
    %c0 = arith.constant 0 : index
    %c0_0 = arith.constant 0 : index
    %0 = vector.load %arg1[%c0, %c0_0] : memref<128x256xbf16, #tpu.memory_space<vmem>>, vector<128x256xbf16>
    %c0_1 = arith.constant 0 : index
    %c0_2 = arith.constant 0 : index
    %1 = vector.load %arg2[%c0_1, %c0_2] : memref<256x128xbf16, #tpu.memory_space<vmem>>, vector<256x128xbf16>
    %cst = arith.constant dense<0.000000e+00> : vector<128x128xf32>
    %2 = tpu.matmul %0, %1, %cst {dimension_numbers = #tpu.dot_dimension_numbers<[1], [0], [0], [1], [0, 0, 1, 1], [], []>} : vector<128x256xbf16>, vector<256x128xbf16>, vector<128x128xf32> -> vector<128x128xf32>
    %c0_3 = arith.constant 0 : index
    %c0_4 = arith.constant 0 : index
    %3 = vector.load %arg3[%c0_3, %c0_4] : memref<1x128xf32, #tpu.memory_space<vmem>>, vector<1x128xf32>
    %4 = vector.broadcast %3 : vector<1x128xf32> to vector<128x128xf32>
    %5 = arith.addf %2, %4 : vector<128x128xf32>
    %c0_5 = arith.constant 0 : index
    %c0_6 = arith.constant 0 : index
    %6 = vector.load %arg4[%c0_5, %c0_6] : memref<128x128xf32, #tpu.memory_space<vmem>>, vector<128x128xf32>
    tpu.vector_store %arg4[%c0_5, %c0_6], %5 {strides = array<i32>} : memref<128x128xf32, #tpu.memory_space<vmem>>, vector<128x128xf32>,
    return
  }
  func.func @transform_0(%arg0: i32) -> (i32, i32) {
    %c0_i32 = arith.constant 0 : i32
    %c0_i32_0 = arith.constant 0 : i32
    return %arg0, %c0_i32 : i32, i32
  }
  func.func @transform_1(%arg0: i32) -> (i32, i32) {
    %c0_i32 = arith.constant 0 : i32
    %c0_i32_0 = arith.constant 0 : i32
    %c0_i32_1 = arith.constant 0 : i32
    return %c0_i32, %c0_i32_0 : i32, i32
  }
  func.func @transform_2(%arg0: i32) -> (i32, i32) {
    %c0_i32 = arith.constant 0 : i32
    %c0_i32_0 = arith.constant 0 : i32
    %c0_i32_1 = arith.constant 0 : i32
    return %c0_i32, %c0_i32_0 : i32, i32
  }
  func.func @transform_3(%arg0: i32) -> (i32, i32) {
    %c0_i32 = arith.constant 0 : i32
    %c0_i32_0 = arith.constant 0 : i32
    return %arg0, %c0_i32 : i32, i32
  }
}

</mosaic_0001>

<llo_original>
// kernel: mc_model_forward.21
$region0: #{mc_model_forward.21}
  #allocation0 [shape = 'u32[]', space=smem, size = 0x4, offset = 0x4, fixed_abs, tag = 'smem constant byte address 0x4 - core index']
  #allocation1 [shape = 'u32[144,128]{1,0:T(1,128)}', space=vmem, size = 0x12000, scoped, tag = 'internal scratch']
  %s0 = inlined_call_operand.vmem [shape: f32[128,128], index: 0, kind: input, shape index: {}]
  %s1 = inlined_call_operand.vmem [shape: f32[1,1,128], index: 1, kind: input, shape index: {}]
  %s2 = inlined_call_operand.vmem [shape: f32[1,1,128], index: 2, kind: input, shape index: {}]
  %s3 = inlined_call_operand.vmem [shape: f32[1,128], index: 3, kind: input, shape index: {}]
  %s4 = inlined_call_operand.vmem [shape: f32[1,128], index: 4, kind: input, shape index: {}]
  %s5 = inlined_call_operand.vmem [shape: f32[128,128], index: 5, kind: output, shape index: {}]
  %s6 = sld [smem:[#allocation0]]
  $region30: #{mc_model_forward.21} parent=0
    _
  %s8 = ssub.s32 1, %s6
  %s9 = scalar_select 0, %s8, %s6
  // Predicated region
  $region2: #{mc_model_forward.21} parent=0 // pred_check
    _
  $region3: #{mc_model_forward.21} parent=0 // pred_check_branch
    %11 = sbr.rel (0) target = $region5
  $region4: #{mc_model_forward.21} parent=0 // pred_region
    _
  $region5: #{mc_model_forward.21} parent=0 // pred_fallthru
    _
  // Predicated region
  $region6: #{mc_model_forward.21} parent=0 // pred_check
    _
  $region7: #{mc_model_forward.21} parent=0 // pred_check_branch
    %13 = sbr.rel (0) target = $region9
  $region8: #{mc_model_forward.21} parent=0 // pred_region
    _
  $region9: #{mc_model_forward.21} parent=0 // pred_fallthru
    _
  // Predicated region
  $region10: #{mc_model_forward.21} parent=0 // pred_check
    _
  $region11: #{mc_model_forward.21} parent=0 // pred_check_branch
    %15 = sbr.rel (0) target = $region13
  $region12: #{mc_model_forward.21} parent=0 // pred_region
    _
  $region13: #{mc_model_forward.21} parent=0 // pred_fallthru
    _
  // Predicated region
  $region14: #{mc_model_forward.21} parent=0 // pred_check
    _
  $region15: #{mc_model_forward.21} parent=0 // pred_check_branch
    %17 = sbr.rel (0) target = $region17
  $region16: #{mc_model_forward.21} parent=0 // pred_region
    _
  $region17: #{mc_model_forward.21} parent=0 // pred_fallthru
    _
  // Predicated region
  $region18: #{mc_model_forward.21} parent=0 // pred_check
    _
  $region19: #{mc_model_forward.21} parent=0 // pred_check_branch
    %19 = sbr.rel (0) target = $region21
  $region20: #{mc_model_forward.21} parent=0 // pred_region
    _
  $region21: #{mc_model_forward.21} parent=0 // pred_fallthru
    _
  %v20 = vld [vmem:[%s1] sm:$0x1]
  %v21 = vadd.f32 %v20, 0.0
  %v22 = vmul.f32 %v21, 0.0078125
  %v23 = vld [vmem:[%s2] sm:$0x1]
  %v24 = vadd.f32 %v23, 0.0
  %v25 = vmul.f32 %v24, 0.0078125
  %v26 = vmul.f32 %v22, %v22
  %v27 = vsub.f32 %v25, %v26
  %v28 = vld [vmem:[%s3] sm:$0x1]
  %v29 = vadd.f32 %v27, 1e-05
  %v30 = vrsqrt.pop %v29
  %v31 = vmul.f32 %v28, %v30
  %v32 = vld [vmem:[%s4] sm:$0x1]
  %v33 = vmul.f32 %v22, %v31
  %v34 = vsub.f32 %v32, %v33
  %v35 = vld [vmem:[%s0] sm:$0xff]
  %v36 = vld [vmem:[%s0 + $0x8] sm:$0xff]
  %v37 = vld [vmem:[%s0 + $0x10] sm:$0xff]
  %v38 = vld [vmem:[%s0 + $0x18] sm:$0xff]
  %v39 = vld [vmem:[%s0 + $0x20] sm:$0xff]
  %v40 = vld [vmem:[%s0 + $0x28] sm:$0xff]
  %v41 = vld [vmem:[%s0 + $0x30] sm:$0xff]
  %v42 = vld [vmem:[%s0 + $0x38] sm:$0xff]
  %v43 = vld [vmem:[%s0 + $0x40] sm:$0xff]
  %v44 = vld [vmem:[%s0 + $0x48] sm:$0xff]
  %v45 = vld [vmem:[%s0 + $0x50] sm:$0xff]
  %v46 = vld [vmem:[%s0 + $0x58] sm:$0xff]
  %v47 = vld [vmem:[%s0 + $0x60] sm:$0xff]
  %v48 = vld [vmem:[%s0 + $0x68] sm:$0xff]
  %v49 = vld [vmem:[%s0 + $0x70] sm:$0xff]
  %v50 = vld [vmem:[%s0 + $0x78] sm:$0xff]
  %v52 = vlaneseq
  %v53 = vshrl.u32 %v52, 7
  %v54 = vsub.s32 0, %v53
  %v55 = vrot.slane %v31, %v54
  %v57 = vmul.f32 %v35, %v55
  %v58 = vmul.f32 %v36, %v55
  %v59 = vmul.f32 %v37, %v55
  %v60 = vmul.f32 %v38, %v55
  %v61 = vmul.f32 %v39, %v55
  %v62 = vmul.f32 %v40, %v55
  %v63 = vmul.f32 %v41, %v55
  %v64 = vmul.f32 %v42, %v55
  %v65 = vmul.f32 %v43, %v55
  %v66 = vmul.f32 %v44, %v55
  %v67 = vmul.f32 %v45, %v55
  %v68 = vmul.f32 %v46, %v55
  %v69 = vmul.f32 %v47, %v55
  %v70 = vmul.f32 %v48, %v55
  %v71 = vmul.f32 %v49, %v55
  %v72 = vmul.f32 %v50, %v55
  %v74 = vlaneseq
  %v75 = vshrl.u32 %v74, 7
  %v76 = vsub.s32 0, %v75
  %v77 = vrot.slane %v34, %v76
  %v79 = vadd.f32 %v57, %v77
  %v80 = vadd.f32 %v58, %v77
  %v81 = vadd.f32 %v59, %v77
  %v82 = vadd.f32 %v60, %v77
  %v83 = vadd.f32 %v61, %v77
  %v84 = vadd.f32 %v62, %v77
  %v85 = vadd.f32 %v63, %v77
  %v86 = vadd.f32 %v64, %v77
  %v87 = vadd.f32 %v65, %v77
  %v88 = vadd.f32 %v66, %v77
  %v89 = vadd.f32 %v67, %v77
  %v90 = vadd.f32 %v68, %v77
  %v91 = vadd.f32 %v69, %v77
  %v92 = vadd.f32 %v70, %v77
  %v93 = vadd.f32 %v71, %v77
  %v94 = vadd.f32 %v72, %v77
  %vm95 = vcmp.ge.f32.partialorder %v79, 0.0
  %vm96 = vcmp.ge.f32.partialorder %v80, 0.0
  %vm97 = vcmp.ge.f32.partialorder %v81, 0.0
  %vm98 = vcmp.ge.f32.partialorder %v82, 0.0
  %vm99 = vcmp.ge.f32.partialorder %v83, 0.0
  %vm100 = vcmp.ge.f32.partialorder %v84, 0.0
  %vm101 = vcmp.ge.f32.partialorder %v85, 0.0
  %vm102 = vcmp.ge.f32.partialorder %v86, 0.0
  %vm103 = vcmp.ge.f32.partialorder %v87, 0.0
  %vm104 = vcmp.ge.f32.partialorder %v88, 0.0
  %vm105 = vcmp.ge.f32.partialorder %v89, 0.0
  %vm106 = vcmp.ge.f32.partialorder %v90, 0.0
  %vm107 = vcmp.ge.f32.partialorder %v91, 0.0
  %vm108 = vcmp.ge.f32.partialorder %v92, 0.0
  %vm109 = vcmp.ge.f32.partialorder %v93, 0.0
  %vm110 = vcmp.ge.f32.partialorder %v94, 0.0
  %v111 = vmul.f32 %v79, 0.01
  %v112 = vmul.f32 %v80, 0.01
  %v113 = vmul.f32 %v81, 0.01
  %v114 = vmul.f32 %v82, 0.01
  %v115 = vmul.f32 %v83, 0.01
  %v116 = vmul.f32 %v84, 0.01
  %v117 = vmul.f32 %v85, 0.01
  %v118 = vmul.f32 %v86, 0.01
  %v119 = vmul.f32 %v87, 0.01
  %v120 = vmul.f32 %v88, 0.01
  %v121 = vmul.f32 %v89, 0.01
  %v122 = vmul.f32 %v90, 0.01
  %v123 = vmul.f32 %v91, 0.01
  %v124 = vmul.f32 %v92, 0.01
  %v125 = vmul.f32 %v93, 0.01
  %v126 = vmul.f32 %v94, 0.01
  %v127 = vsel %vm95, %v79, %v111
  %v128 = vsel %vm96, %v80, %v112
  %v129 = vsel %vm97, %v81, %v113
  %v130 = vsel %vm98, %v82, %v114
  %v131 = vsel %vm99, %v83, %v115
  %v132 = vsel %vm100, %v84, %v116
  %v133 = vsel %vm101, %v85, %v117
  %v134 = vsel %vm102, %v86, %v118
  %v135 = vsel %vm103, %v87, %v119
  %v136 = vsel %vm104, %v88, %v120
  %v137 = vsel %vm105, %v89, %v121
  %v138 = vsel %vm106, %v90, %v122
  %v139 = vsel %vm107, %v91, %v123
  %v140 = vsel %vm108, %v92, %v124
  %v141 = vsel %vm109, %v93, %v125
  %v142 = vsel %vm110, %v94, %v126
  %143 = vst [vmem:[%s5] sm:$0xff] %v127
  %144 = vst [vmem:[%s5 + $0x8] sm:$0xff] %v128
  %145 = vst [vmem:[%s5 + $0x10] sm:$0xff] %v129
  %146 = vst [vmem:[%s5 + $0x18] sm:$0xff] %v130
  %147 = vst [vmem:[%s5 + $0x20] sm:$0xff] %v131
  %148 = vst [vmem:[%s5 + $0x28] sm:$0xff] %v132
  %149 = vst [vmem:[%s5 + $0x30] sm:$0xff] %v133
  %150 = vst [vmem:[%s5 + $0x38] sm:$0xff] %v134
  %151 = vst [vmem:[%s5 + $0x40] sm:$0xff] %v135
  %152 = vst [vmem:[%s5 + $0x48] sm:$0xff] %v136
  %153 = vst [vmem:[%s5 + $0x50] sm:$0xff] %v137
  %154 = vst [vmem:[%s5 + $0x58] sm:$0xff] %v138
  %155 = vst [vmem:[%s5 + $0x60] sm:$0xff] %v139
  %156 = vst [vmem:[%s5 + $0x68] sm:$0xff] %v140
  %157 = vst [vmem:[%s5 + $0x70] sm:$0xff] %v141
  %158 = vst [vmem:[%s5 + $0x78] sm:$0xff] %v142
  // Predicated region
  $region22: #{mc_model_forward.21} parent=0 // pred_check
    _
  $region23: #{mc_model_forward.21} parent=0 // pred_check_branch
    %160 = sbr.rel (0) target = $region25
  $region24: #{mc_model_forward.21} parent=0 // pred_region
    _
  $region25: #{mc_model_forward.21} parent=0 // pred_fallthru
    _
  // Predicated region
  $region26: #{mc_model_forward.21} parent=0 // pred_check
    _
  $region27: #{mc_model_forward.21} parent=0 // pred_check_branch
    %162 = sbr.rel (0) target = $region29
  $region28: #{mc_model_forward.21} parent=0 // pred_region
    _
  $region29: #{mc_model_forward.21} parent=0 // pred_fallthru
    _

// kernel: mc_model_forward.20
$region0: #{mc_model_forward.20}
  #allocation0 [shape = 'u32[]', space=smem, size = 0x4, offset = 0x4, fixed_abs, tag = 'smem constant byte address 0x4 - core index']
  #allocation1 [shape = 'u32[144,128]{1,0:T(1,128)}', space=vmem, size = 0x12000, scoped, tag = 'internal scratch']
  %s0 = inlined_call_operand.vmem [shape: bf16[128,192], index: 0, kind: input, shape index: {}]
  %s1 = inlined_call_operand.vmem [shape: bf16[192,128], index: 1, kind: input, shape index: {}]
  %s2 = inlined_call_operand.vmem [shape: f32[128,128], index: 2, kind: output, shape index: {0}]
  %s3 = inlined_call_operand.vmem [shape: f32[1,1,128], index: 3, kind: output, shape index: {1}]
  %s4 = inlined_call_operand.vmem [shape: f32[1,1,128], index: 4, kind: output, shape index: {2}]
  %5 = xla_tuple %s2, %s3, %s4
  %s6 = sld [smem:[#allocation0]]
  $region34: #{mc_model_forward.20} parent=0
    _
  %s8 = ssub.s32 1, %s6
  %s9 = scalar_select 0, %s8, %s6
  // Predicated region
  $region2: #{mc_model_forward.20} parent=0 // pred_check
    _
  $region3: #{mc_model_forward.20} parent=0 // pred_check_branch
    %11 = sbr.rel (0) target = $region5
  $region4: #{mc_model_forward.20} parent=0 // pred_region
    _
  $region5: #{mc_model_forward.20} parent=0 // pred_fallthru
    _
  // Predicated region
  $region6: #{mc_model_forward.20} parent=0 // pred_check
    _
  $region7: #{mc_model_forward.20} parent=0 // pred_check_branch
    %13 = sbr.rel (0) target = $region9
  $region8: #{mc_model_forward.20} parent=0 // pred_region
    _
  $region9: #{mc_model_forward.20} parent=0 // pred_fallthru
    _
  %v15 = vld [vmem:[%s0] sm:$0xff]
  %v16 = vld [vmem:[%s0 + $0x8] sm:$0xff]
  %v17 = vld [vmem:[%s0 + $0x10] sm:$0xff]
  %v18 = vld [vmem:[%s0 + $0x18] sm:$0xff]
  %v19 = vld [vmem:[%s0 + $0x20] sm:$0xff]
  %v20 = vld [vmem:[%s0 + $0x28] sm:$0xff]
  %v21 = vld [vmem:[%s0 + $0x30] sm:$0xff]
  %v22 = vld [vmem:[%s0 + $0x38] sm:$0xff]
  %v23 = vld [vmem:[%s0 + $0x40] sm:$0xff]
  %v24 = vld [vmem:[%s0 + $0x48] sm:$0xff]
  %v25 = vld [vmem:[%s0 + $0x50] sm:$0xff]
  %v26 = vld [vmem:[%s0 + $0x58] sm:$0xff]
  %v27 = vld [vmem:[%s0 + $0x60] sm:$0xff]
  %v28 = vld [vmem:[%s0 + $0x68] sm:$0xff]
  %v29 = vld [vmem:[%s0 + $0x70] sm:$0xff]
  %v30 = vld [vmem:[%s0 + $0x78] sm:$0xff]
  %v31 = vld [vmem:[%s1] sm:$0xf]
  %v32 = vld [vmem:[%s1 + $0x4] sm:$0xf]
  %v33 = vld [vmem:[%s1 + $0x8] sm:$0xf]
  %v34 = vld [vmem:[%s1 + $0xc] sm:$0xf]
  %v35 = vld [vmem:[%s1 + $0x10] sm:$0xf]
  %v36 = vld [vmem:[%s1 + $0x14] sm:$0xf]
  %v37 = vld [vmem:[%s1 + $0x18] sm:$0xf]
  %v38 = vld [vmem:[%s1 + $0x1c] sm:$0xf]
  %v39 = vld [vmem:[%s1 + $0x20] sm:$0xf]
  %v40 = vld [vmem:[%s1 + $0x24] sm:$0xf]
  %v41 = vld [vmem:[%s1 + $0x28] sm:$0xf]
  %v42 = vld [vmem:[%s1 + $0x2c] sm:$0xf]
  %v43 = vld [vmem:[%s1 + $0x30] sm:$0xf]
  %v44 = vld [vmem:[%s1 + $0x34] sm:$0xf]
  %v45 = vld [vmem:[%s1 + $0x38] sm:$0xf]
  %v46 = vld [vmem:[%s1 + $0x3c] sm:$0xf]
  %v47 = vld [vmem:[%s1 + $0x40] sm:$0xf]
  %v48 = vld [vmem:[%s1 + $0x44] sm:$0xf]
  %v49 = vld [vmem:[%s1 + $0x48] sm:$0xf]
  %v50 = vld [vmem:[%s1 + $0x4c] sm:$0xf]
  %v51 = vld [vmem:[%s1 + $0x50] sm:$0xf]
  %v52 = vld [vmem:[%s1 + $0x54] sm:$0xf]
  %v53 = vld [vmem:[%s1 + $0x58] sm:$0xf]
  %v54 = vld [vmem:[%s1 + $0x5c] sm:$0xf]
  %v71 = vunpack.c.l.b16 %v15
  %v72 = vunpack.c.h.b16 %v15
  %v73 = vunpack.c.l.b16 %v16
  %v74 = vunpack.c.h.b16 %v16
  %v75 = vunpack.c.l.b16 %v17
  %v76 = vunpack.c.h.b16 %v17
  %v77 = vunpack.c.l.b16 %v18
  %v78 = vunpack.c.h.b16 %v18
  %v79 = vunpack.c.l.b16 %v19
  %v80 = vunpack.c.h.b16 %v19
  %v81 = vunpack.c.l.b16 %v20
  %v82 = vunpack.c.h.b16 %v20
  %v83 = vunpack.c.l.b16 %v21
  %v84 = vunpack.c.h.b16 %v21
  %v85 = vunpack.c.l.b16 %v22
  %v86 = vunpack.c.h.b16 %v22
  %v87 = vunpack.c.l.b16 %v23
  %v88 = vunpack.c.h.b16 %v23
  %v89 = vunpack.c.l.b16 %v24
  %v90 = vunpack.c.h.b16 %v24
  %v91 = vunpack.c.l.b16 %v25
  %v92 = vunpack.c.h.b16 %v25
  %v93 = vunpack.c.l.b16 %v26
  %v94 = vunpack.c.h.b16 %v26
  %v95 = vunpack.c.l.b16 %v27
  %v96 = vunpack.c.h.b16 %v27
  %v97 = vunpack.c.l.b16 %v28
  %v98 = vunpack.c.h.b16 %v28
  %v99 = vunpack.c.l.b16 %v29
  %v100 = vunpack.c.h.b16 %v29
  %v101 = vunpack.c.l.b16 %v30
  %v102 = vunpack.c.h.b16 %v30
  %v103 = vpack.c.b16 %v73, %v71
  %v104 = vpack.c.b16 %v74, %v72
  %v105 = vpack.c.b16 %v77, %v75
  %v106 = vpack.c.b16 %v78, %v76
  %v107 = vpack.c.b16 %v81, %v79
  %v108 = vpack.c.b16 %v82, %v80
  %v109 = vpack.c.b16 %v85, %v83
  %v110 = vpack.c.b16 %v86, %v84
  %v111 = vpack.c.b16 %v89, %v87
  %v112 = vpack.c.b16 %v90, %v88
  %v113 = vpack.c.b16 %v93, %v91
  %v114 = vpack.c.b16 %v94, %v92
  %v115 = vpack.c.b16 %v97, %v95
  %v116 = vpack.c.b16 %v98, %v96
  %v117 = vpack.c.b16 %v101, %v99
  %v118 = vpack.c.b16 %v102, %v100
  %v151 = vunpack.c.l.b16 %v31
  %v152 = vunpack.c.l.b16 %v32
  %v153 = vunpack.c.l.b16 %v33
  %v154 = vunpack.c.l.b16 %v34
  %v155 = vunpack.c.l.b16 %v35
  %v156 = vunpack.c.l.b16 %v36
  %v157 = vunpack.c.l.b16 %v37
  %v158 = vunpack.c.l.b16 %v38
  %v159 = vunpack.c.l.b16 %v39
  %v160 = vunpack.c.l.b16 %v40
  %v161 = vunpack.c.l.b16 %v41
  %v162 = vunpack.c.l.b16 %v42
  %v163 = vunpack.c.l.b16 %v43
  %v164 = vunpack.c.l.b16 %v44
  %v165 = vunpack.c.l.b16 %v45
  %v166 = vunpack.c.l.b16 %v46
  %v167 = vunpack.c.l.b16 %v47
  %v168 = vunpack.c.l.b16 %v48
  %v169 = vunpack.c.l.b16 %v49
  %v170 = vunpack.c.l.b16 %v50
  %v171 = vunpack.c.l.b16 %v51
  %v172 = vunpack.c.l.b16 %v52
  %v173 = vunpack.c.l.b16 %v53
  %v174 = vunpack.c.l.b16 %v54
  %v175 = vpack.c.b16 %v152, %v151
  %v176 = vpack.c.b16 %v154, %v153
  %v177 = vpack.c.b16 %v156, %v155
  %v178 = vpack.c.b16 %v158, %v157
  %v179 = vpack.c.b16 %v160, %v159
  %v180 = vpack.c.b16 %v162, %v161
  %v181 = vpack.c.b16 %v164, %v163
  %v182 = vpack.c.b16 %v166, %v165
  %v183 = vpack.c.b16 %v168, %v167
  %v184 = vpack.c.b16 %v170, %v169
  %v185 = vpack.c.b16 %v172, %v171
  %v186 = vpack.c.b16 %v174, %v173
  %vm199 = vcmask 523264
  %v201 = vsel %vm199, %v104, 0
  %v204 = vsel %vm199, %v106, 0
  %v207 = vsel %vm199, %v108, 0
  %v210 = vsel %vm199, %v110, 0
  %v213 = vsel %vm199, %v112, 0
  %v216 = vsel %vm199, %v114, 0
  %v219 = vsel %vm199, %v116, 0
  %v222 = vsel %vm199, %v118, 0
  %224 = vmatprep.subr.bf16.mxu0 0
  %225 = vmatpush1.bf16.msra.mxu0 %v175
  %226 = vmatprep.subr.bf16.mxu0 0
  %227 = vmatpush1.bf16.msra.mxu0 %v176
  %228 = vmatprep.subr.bf16.mxu0 0
  %229 = vmatpush1.bf16.msra.mxu0 %v177
  %230 = vmatprep.subr.bf16.mxu0 0
  %231 = vmatpush1.bf16.msra.mxu0 %v178
  %232 = vmatprep.subr.bf16.mxu0 0
  %233 = vmatpush1.bf16.msra.mxu0 %v179
  %234 = vmatprep.subr.bf16.mxu0 0
  %235 = vmatpush1.bf16.msra.mxu0 %v180
  %236 = vmatprep.subr.bf16.mxu0 0
  %237 = vmatpush1.bf16.msra.mxu0 %v181
  %238 = vmatprep.subr.bf16.mxu0 0
  %239 = vmatpush1.bf16.msra.mxu0 %v182
  %240 = vmatprep.subr.bf16.mxu0 0
  %241 = vmatpush1.bf16.msra.mxu0 %v183
  %242 = vmatprep.subr.bf16.mxu0 0
  %243 = vmatpush1.bf16.msra.mxu0 %v184
  %244 = vmatprep.subr.bf16.mxu0 0
  %245 = vmatpush1.bf16.msra.mxu0 %v185
  %246 = vmatprep.subr.bf16.mxu0 0
  %247 = vmatpush1.bf16.msra.mxu0 %v186
  %248 = vmatprep.subr.bf16.mxu0 0
  %249 = vmatpush1.bf16.msra.mxu0 0
  %250 = vmatprep.subr.bf16.mxu0 0
  %251 = vmatpush1.bf16.msra.mxu0 0
  %252 = vmatprep.subr.bf16.mxu0 0
  %253 = vmatpush1.bf16.msra.mxu0 0
  %254 = vmatprep.subr.bf16.mxu0 0
  %255 = vmatpush1.bf16.msra.mxu0 0
  %256 = vmatprep.mubr.bf16.mxu0 %v201
  %257 = vmatmul.mubr.bf16.gmra.mrb[0].mxu0 %v103
  %v258 = vpop.f32.mrb[0].mxu0
  %v259 = vadd.f32 0.0, %v258
  %v260 = vpop.f32.mrb[0].mxu0
  %v261 = vpop.f32.mrb[0].mxu0
  %v262 = vadd.f32 0.0, %v261
  %v263 = vpop.f32.mrb[0].mxu0
  %264 = vmatprep.mubr.bf16.mxu0 %v204
  %265 = vmatmul.mubr.bf16.gmra.mrb[0].mxu0 %v105
  %v266 = vpop.f32.mrb[0].mxu0
  %v267 = vadd.f32 0.0, %v266
  %v268 = vpop.f32.mrb[0].mxu0
  %v269 = vpop.f32.mrb[0].mxu0
  %v270 = vadd.f32 0.0, %v269
  %v271 = vpop.f32.mrb[0].mxu0
  %272 = vmatprep.mubr.bf16.mxu0 %v207
  %273 = vmatmul.mubr.bf16.gmra.mrb[0].mxu0 %v107
  %v274 = vpop.f32.mrb[0].mxu0
  %v275 = vadd.f32 0.0, %v274
  %v276 = vpop.f32.mrb[0].mxu0
  %v277 = vpop.f32.mrb[0].mxu0
  %v278 = vadd.f32 0.0, %v277
  %v279 = vpop.f32.mrb[0].mxu0
  %280 = vmatprep.mubr.bf16.mxu0 %v210
  %281 = vmatmul.mubr.bf16.gmra.mrb[0].mxu0 %v109
  %v282 = vpop.f32.mrb[0].mxu0
  %v283 = vadd.f32 0.0, %v282
  %v284 = vpop.f32.mrb[0].mxu0
  %v285 = vpop.f32.mrb[0].mxu0
  %v286 = vadd.f32 0.0, %v285
  %v287 = vpop.f32.mrb[0].mxu0
  %288 = vmatprep.mubr.bf16.mxu0 %v213
  %289 = vmatmul.mubr.bf16.gmra.mrb[0].mxu0 %v111
  %v290 = vpop.f32.mrb[0].mxu0
  %v291 = vadd.f32 0.0, %v290
  %v292 = vpop.f32.mrb[0].mxu0
  %v293 = vpop.f32.mrb[0].mxu0
  %v294 = vadd.f32 0.0, %v293
  %v295 = vpop.f32.mrb[0].mxu0
  %296 = vmatprep.mubr.bf16.mxu0 %v216
  %297 = vmatmul.mubr.bf16.gmra.mrb[0].mxu0 %v113
  %v298 = vpop.f32.mrb[0].mxu0
  %v299 = vadd.f32 0.0, %v298
  %v300 = vpop.f32.mrb[0].mxu0
  %v301 = vpop.f32.mrb[0].mxu0
  %v302 = vadd.f32 0.0, %v301
  %v303 = vpop.f32.mrb[0].mxu0
  %304 = vmatprep.mubr.bf16.mxu0 %v219
  %305 = vmatmul.mubr.bf16.gmra.mrb[0].mxu0 %v115
  %v306 = vpop.f32.mrb[0].mxu0
  %v307 = vadd.f32 0.0, %v306
  %v308 = vpop.f32.mrb[0].mxu0
  %v309 = vpop.f32.mrb[0].mxu0
  %v310 = vadd.f32 0.0, %v309
  %v311 = vpop.f32.mrb[0].mxu0
  %312 = vmatprep.mubr.bf16.mxu0 %v222
  %313 = vmatmul.mubr.bf16.gmra.mrb[0].mxu0 %v117
  %v314 = vpop.f32.mrb[0].mxu0
  %v315 = vadd.f32 0.0, %v314
  %v316 = vpop.f32.mrb[0].mxu0
  %v317 = vpop.f32.mrb[0].mxu0
  %v318 = vadd.f32 0.0, %v317
  %v319 = vpop.f32.mrb[0].mxu0
  %320 = vdwg.mxu0
  %321 = vst [vmem:[%s2] sm:$0xff] %v259
  %322 = vst [vmem:[%s2 + $0x8] sm:$0xff] %v262
  %323 = vst [vmem:[%s2 + $0x10] sm:$0xff] %v267
  %324 = vst [vmem:[%s2 + $0x18] sm:$0xff] %v270
  %325 = vst [vmem:[%s2 + $0x20] sm:$0xff] %v275
  %326 = vst [vmem:[%s2 + $0x28] sm:$0xff] %v278
  %327 = vst [vmem:[%s2 + $0x30] sm:$0xff] %v283
  %328 = vst [vmem:[%s2 + $0x38] sm:$0xff] %v286
  %329 = vst [vmem:[%s2 + $0x40] sm:$0xff] %v291
  %330 = vst [vmem:[%s2 + $0x48] sm:$0xff] %v294
  %331 = vst [vmem:[%s2 + $0x50] sm:$0xff] %v299
  %332 = vst [vmem:[%s2 + $0x58] sm:$0xff] %v302
  %333 = vst [vmem:[%s2 + $0x60] sm:$0xff] %v307
  %334 = vst [vmem:[%s2 + $0x68] sm:$0xff] %v310
  %335 = vst [vmem:[%s2 + $0x70] sm:$0xff] %v315
  %336 = vst [vmem:[%s2 + $0x78] sm:$0xff] %v318
  %v337 = vadd.f32 %v259, %v262
  %v338 = vadd.f32 %v337, %v267
  %v339 = vadd.f32 %v338, %v270
  %v340 = vadd.f32 %v339, %v275
  %v341 = vadd.f32 %v340, %v278
  %v342 = vadd.f32 %v341, %v283
  %v343 = vadd.f32 %v342, %v286
  %v344 = vadd.f32 %v343, %v291
  %v345 = vadd.f32 %v344, %v294
  %v346 = vadd.f32 %v345, %v299
  %v347 = vadd.f32 %v346, %v302
  %v348 = vadd.f32 %v347, %v307
  %v349 = vadd.f32 %v348, %v310
  %v350 = vadd.f32 %v349, %v315
  %v351 = vadd.f32 %v350, %v318
  %v352 = vrot.slane %v351, 4
  %v353 = vadd.f32 %v351, %v352
  %v354 = vrot.slane %v353, 2
  %v355 = vadd.f32 %v353, %v354
  %v356 = vrot.slane %v355, 1
  %v357 = vadd.f32 %v355, %v356
  %358 = vst [vmem:[%s3] sm:$0x1] %v357
  %v359 = vmul.f32 %v259, %v259
  %v360 = vmul.f32 %v262, %v262
  %v361 = vmul.f32 %v267, %v267
  %v362 = vmul.f32 %v270, %v270
  %v363 = vmul.f32 %v275, %v275
  %v364 = vmul.f32 %v278, %v278
  %v365 = vmul.f32 %v283, %v283
  %v366 = vmul.f32 %v286, %v286
  %v367 = vmul.f32 %v291, %v291
  %v368 = vmul.f32 %v294, %v294
  %v369 = vmul.f32 %v299, %v299
  %v370 = vmul.f32 %v302, %v302
  %v371 = vmul.f32 %v307, %v307
  %v372 = vmul.f32 %v310, %v310
  %v373 = vmul.f32 %v315, %v315
  %v374 = vmul.f32 %v318, %v318
  %v375 = vadd.f32 %v359, %v360
  %v376 = vadd.f32 %v375, %v361
  %v377 = vadd.f32 %v376, %v362
  %v378 = vadd.f32 %v377, %v363
  %v379 = vadd.f32 %v378, %v364
  %v380 = vadd.f32 %v379, %v365
  %v381 = vadd.f32 %v380, %v366
  %v382 = vadd.f32 %v381, %v367
  %v383 = vadd.f32 %v382, %v368
  %v384 = vadd.f32 %v383, %v369
  %v385 = vadd.f32 %v384, %v370
  %v386 = vadd.f32 %v385, %v371
  %v387 = vadd.f32 %v386, %v372
  %v388 = vadd.f32 %v387, %v373
  %v389 = vadd.f32 %v388, %v374
  %v390 = vrot.slane %v389, 4
  %v391 = vadd.f32 %v389, %v390
  %v392 = vrot.slane %v391, 2
  %v393 = vadd.f32 %v391, %v392
  %v394 = vrot.slane %v393, 1
  %v395 = vadd.f32 %v393, %v394
  %396 = vst [vmem:[%s4] sm:$0x1] %v395
  // Predicated region
  $region10: #{mc_model_forward.20} parent=0 // pred_check
    _
  $region11: #{mc_model_forward.20} parent=0 // pred_check_branch
    %398 = sbr.rel (0) target = $region13
  $region12: #{mc_model_forward.20} parent=0 // pred_region
    _
  $region13: #{mc_model_forward.20} parent=0 // pred_fallthru
    _
  // Predicated region
  $region14: #{mc_model_forward.20} parent=0 // pred_check
    _
  $region15: #{mc_model_forward.20} parent=0 // pred_check_branch
    %400 = sbr.rel (0) target = $region17
  $region16: #{mc_model_forward.20} parent=0 // pred_region
    _
  $region17: #{mc_model_forward.20} parent=0 // pred_fallthru
    _
  // Predicated region
  $region18: #{mc_model_forward.20} parent=0 // pred_check
    _
  $region19: #{mc_model_forward.20} parent=0 // pred_check_branch
    %402 = sbr.rel (0) target = $region21
  $region20: #{mc_model_forward.20} parent=0 // pred_region
    _
  $region21: #{mc_model_forward.20} parent=0 // pred_fallthru
    _
  // Predicated region
  $region22: #{mc_model_forward.20} parent=0 // pred_check
    _
  $region23: #{mc_model_forward.20} parent=0 // pred_check_branch
    %404 = sbr.rel (0) target = $region25
  $region24: #{mc_model_forward.20} parent=0 // pred_region
    _
  $region25: #{mc_model_forward.20} parent=0 // pred_fallthru
    _
  // Predicated region
  $region26: #{mc_model_forward.20} parent=0 // pred_check
    _
  $region27: #{mc_model_forward.20} parent=0 // pred_check_branch
    %406 = sbr.rel (0) target = $region29
  $region28: #{mc_model_forward.20} parent=0 // pred_region
    _
  $region29: #{mc_model_forward.20} parent=0 // pred_fallthru
    _
  // Predicated region
  $region30: #{mc_model_forward.20} parent=0 // pred_check
    _
  $region31: #{mc_model_forward.20} parent=0 // pred_check_branch
    %408 = sbr.rel (0) target = $region33
  $region32: #{mc_model_forward.20} parent=0 // pred_region
    _
  $region33: #{mc_model_forward.20} parent=0 // pred_fallthru
    _

// kernel: mc_model_forward.23
$region0: #{mc_model_forward.23}
  #allocation0 [shape = 'u32[]', space=smem, size = 0x4, offset = 0x4, fixed_abs, tag = 'smem constant byte address 0x4 - core index']
  #allocation1 [shape = 'u32[144,128]{1,0:T(1,128)}', space=vmem, size = 0x12000, scoped, tag = 'internal scratch']
  %s0 = inlined_call_operand.vmem [shape: f32[32,128], index: 0, kind: input, shape index: {}]
  %s1 = inlined_call_operand.vmem [shape: f32[1,1,128], index: 1, kind: input, shape index: {}]
  %s2 = inlined_call_operand.vmem [shape: f32[1,1,128], index: 2, kind: input, shape index: {}]
  %s3 = inlined_call_operand.vmem [shape: f32[1,128], index: 3, kind: input, shape index: {}]
  %s4 = inlined_call_operand.vmem [shape: f32[1,128], index: 4, kind: input, shape index: {}]
  %s5 = inlined_call_operand.vmem [shape: f32[32,128], index: 5, kind: output, shape index: {}]
  %s6 = sld [smem:[#allocation0]]
  $region30: #{mc_model_forward.23} parent=0
    _
  %s8 = ssub.s32 1, %s6
  %s9 = scalar_select 0, %s8, %s6
  // Predicated region
  $region2: #{mc_model_forward.23} parent=0 // pred_check
    _
  $region3: #{mc_model_forward.23} parent=0 // pred_check_branch
    %11 = sbr.rel (0) target = $region5
  $region4: #{mc_model_forward.23} parent=0 // pred_region
    _
  $region5: #{mc_model_forward.23} parent=0 // pred_fallthru
    _
  // Predicated region
  $region6: #{mc_model_forward.23} parent=0 // pred_check
    _
  $region7: #{mc_model_forward.23} parent=0 // pred_check_branch
    %13 = sbr.rel (0) target = $region9
  $region8: #{mc_model_forward.23} parent=0 // pred_region
    _
  $region9: #{mc_model_forward.23} parent=0 // pred_fallthru
    _
  // Predicated region
  $region10: #{mc_model_forward.23} parent=0 // pred_check
    _
  $region11: #{mc_model_forward.23} parent=0 // pred_check_branch
    %15 = sbr.rel (0) target = $region13
  $region12: #{mc_model_forward.23} parent=0 // pred_region
    _
  $region13: #{mc_model_forward.23} parent=0 // pred_fallthru
    _
  // Predicated region
  $region14: #{mc_model_forward.23} parent=0 // pred_check
    _
  $region15: #{mc_model_forward.23} parent=0 // pred_check_branch
    %17 = sbr.rel (0) target = $region17
  $region16: #{mc_model_forward.23} parent=0 // pred_region
    _
  $region17: #{mc_model_forward.23} parent=0 // pred_fallthru
    _
  // Predicated region
  $region18: #{mc_model_forward.23} parent=0 // pred_check
    _
  $region19: #{mc_model_forward.23} parent=0 // pred_check_branch
    %19 = sbr.rel (0) target = $region21
  $region20: #{mc_model_forward.23} parent=0 // pred_region
    _
  $region21: #{mc_model_forward.23} parent=0 // pred_fallthru
    _
  %v20 = vld [vmem:[%s1] sm:$0x1]
  %v21 = vadd.f32 %v20, 0.0
  %v22 = vmul.f32 %v21, 0.03125
  %v23 = vld [vmem:[%s2] sm:$0x1]
  %v24 = vadd.f32 %v23, 0.0
  %v25 = vmul.f32 %v24, 0.03125
  %v26 = vmul.f32 %v22, %v22
  %v27 = vsub.f32 %v25, %v26
  %v28 = vld [vmem:[%s3] sm:$0x1]
  %v29 = vadd.f32 %v27, 1e-05
  %v30 = vrsqrt.pop %v29
  %v31 = vmul.f32 %v28, %v30
  %v32 = vld [vmem:[%s4] sm:$0x1]
  %v33 = vmul.f32 %v22, %v31
  %v34 = vsub.f32 %v32, %v33
  %v35 = vld [vmem:[%s0] sm:$0xff]
  %v36 = vld [vmem:[%s0 + $0x8] sm:$0xff]
  %v37 = vld [vmem:[%s0 + $0x10] sm:$0xff]
  %v38 = vld [vmem:[%s0 + $0x18] sm:$0xff]
  %v40 = vlaneseq
  %v41 = vshrl.u32 %v40, 7
  %v42 = vsub.s32 0, %v41
  %v43 = vrot.slane %v31, %v42
  %v45 = vmul.f32 %v35, %v43
  %v46 = vmul.f32 %v36, %v43
  %v47 = vmul.f32 %v37, %v43
  %v48 = vmul.f32 %v38, %v43
  %v50 = vlaneseq
  %v51 = vshrl.u32 %v50, 7
  %v52 = vsub.s32 0, %v51
  %v53 = vrot.slane %v34, %v52
  %v55 = vadd.f32 %v45, %v53
  %v56 = vadd.f32 %v46, %v53
  %v57 = vadd.f32 %v47, %v53
  %v58 = vadd.f32 %v48, %v53
  %vm59 = vcmp.ge.f32.partialorder %v55, 0.0
  %vm60 = vcmp.ge.f32.partialorder %v56, 0.0
  %vm61 = vcmp.ge.f32.partialorder %v57, 0.0
  %vm62 = vcmp.ge.f32.partialorder %v58, 0.0
  %v63 = vmul.f32 %v55, 0.01
  %v64 = vmul.f32 %v56, 0.01
  %v65 = vmul.f32 %v57, 0.01
  %v66 = vmul.f32 %v58, 0.01
  %v67 = vsel %vm59, %v55, %v63
  %v68 = vsel %vm60, %v56, %v64
  %v69 = vsel %vm61, %v57, %v65
  %v70 = vsel %vm62, %v58, %v66
  %71 = vst [vmem:[%s5] sm:$0xff] %v67
  %72 = vst [vmem:[%s5 + $0x8] sm:$0xff] %v68
  %73 = vst [vmem:[%s5 + $0x10] sm:$0xff] %v69
  %74 = vst [vmem:[%s5 + $0x18] sm:$0xff] %v70
  // Predicated region
  $region22: #{mc_model_forward.23} parent=0 // pred_check
    _
  $region23: #{mc_model_forward.23} parent=0 // pred_check_branch
    %76 = sbr.rel (0) target = $region25
  $region24: #{mc_model_forward.23} parent=0 // pred_region
    _
  $region25: #{mc_model_forward.23} parent=0 // pred_fallthru
    _
  // Predicated region
  $region26: #{mc_model_forward.23} parent=0 // pred_check
    _
  $region27: #{mc_model_forward.23} parent=0 // pred_check_branch
    %78 = sbr.rel (0) target = $region29
  $region28: #{mc_model_forward.23} parent=0 // pred_region
    _
  $region29: #{mc_model_forward.23} parent=0 // pred_fallthru
    _

// kernel: mc_model_forward.22
$region0: #{mc_model_forward.22}
  #allocation0 [shape = 'u32[]', space=smem, size = 0x4, offset = 0x4, fixed_abs, tag = 'smem constant byte address 0x4 - core index']
  #allocation1 [shape = 'u32[144,128]{1,0:T(1,128)}', space=vmem, size = 0x12000, scoped, tag = 'internal scratch']
  %s0 = inlined_call_operand.vmem [shape: bf16[32,1024], index: 0, kind: input, shape index: {}]
  %s1 = inlined_call_operand.vmem [shape: bf16[1024,128], index: 1, kind: input, shape index: {}]
  %s2 = inlined_call_operand.vmem [shape: f32[32,128], index: 2, kind: output, shape index: {0}]
  %s3 = inlined_call_operand.vmem [shape: f32[1,1,128], index: 3, kind: output, shape index: {1}]
  %s4 = inlined_call_operand.vmem [shape: f32[1,1,128], index: 4, kind: output, shape index: {2}]
  %5 = xla_tuple %s2, %s3, %s4
  %s6 = sld [smem:[#allocation0]]
  $region34: #{mc_model_forward.22} parent=0
    _
  %s8 = ssub.s32 1, %s6
  %s9 = scalar_select 0, %s8, %s6
  // Predicated region
  $region2: #{mc_model_forward.22} parent=0 // pred_check
    _
  $region3: #{mc_model_forward.22} parent=0 // pred_check_branch
    %11 = sbr.rel (0) target = $region5
  $region4: #{mc_model_forward.22} parent=0 // pred_region
    _
  $region5: #{mc_model_forward.22} parent=0 // pred_fallthru
    _
  // Predicated region
  $region6: #{mc_model_forward.22} parent=0 // pred_check
    _
  $region7: #{mc_model_forward.22} parent=0 // pred_check_branch
    %13 = sbr.rel (0) target = $region9
  $region8: #{mc_model_forward.22} parent=0 // pred_region
    _
  $region9: #{mc_model_forward.22} parent=0 // pred_fallthru
    _
  %v15 = vld [vmem:[%s0] sm:$0xff]
  %v16 = vld [vmem:[%s0 + $0x8] sm:$0xff]
  %v17 = vld [vmem:[%s0 + $0x10] sm:$0xff]
  %v18 = vld [vmem:[%s0 + $0x18] sm:$0xff]
  %v19 = vld [vmem:[%s0 + $0x20] sm:$0xff]
  %v20 = vld [vmem:[%s0 + $0x28] sm:$0xff]
  %v21 = vld [vmem:[%s0 + $0x30] sm:$0xff]
  %v22 = vld [vmem:[%s0 + $0x38] sm:$0xff]
  %v23 = vld [vmem:[%s0 + $0x40] sm:$0xff]
  %v24 = vld [vmem:[%s0 + $0x48] sm:$0xff]
  %v25 = vld [vmem:[%s0 + $0x50] sm:$0xff]
  %v26 = vld [vmem:[%s0 + $0x58] sm:$0xff]
  %v27 = vld [vmem:[%s0 + $0x60] sm:$0xff]
  %v28 = vld [vmem:[%s0 + $0x68] sm:$0xff]
  %v29 = vld [vmem:[%s0 + $0x70] sm:$0xff]
  %v30 = vld [vmem:[%s0 + $0x78] sm:$0xff]
  %v31 = vld [vmem:[%s1] sm:$0xf]
  %v32 = vld [vmem:[%s1 + $0x4] sm:$0xf]
  %v33 = vld [vmem:[%s1 + $0x8] sm:$0xf]
  %v34 = vld [vmem:[%s1 + $0xc] sm:$0xf]
  %v35 = vld [vmem:[%s1 + $0x10] sm:$0xf]
  %v36 = vld [vmem:[%s1 + $0x14] sm:$0xf]
  %v37 = vld [vmem:[%s1 + $0x18] sm:$0xf]
  %v38 = vld [vmem:[%s1 + $0x1c] sm:$0xf]
  %v39 = vld [vmem:[%s1 + $0x20] sm:$0xf]
  %v40 = vld [vmem:[%s1 + $0x24] sm:$0xf]
  %v41 = vld [vmem:[%s1 + $0x28] sm:$0xf]
  %v42 = vld [vmem:[%s1 + $0x2c] sm:$0xf]
  %v43 = vld [vmem:[%s1 + $0x30] sm:$0xf]
  %v44 = vld [vmem:[%s1 + $0x34] sm:$0xf]
  %v45 = vld [vmem:[%s1 + $0x38] sm:$0xf]
  %v46 = vld [vmem:[%s1 + $0x3c] sm:$0xf]
  %v47 = vld [vmem:[%s1 + $0x40] sm:$0xf]
  %v48 = vld [vmem:[%s1 + $0x44] sm:$0xf]
  %v49 = vld [vmem:[%s1 + $0x48] sm:$0xf]
  %v50 = vld [vmem:[%s1 + $0x4c] sm:$0xf]
  %v51 = vld [vmem:[%s1 + $0x50] sm:$0xf]
  %v52 = vld [vmem:[%s1 + $0x54] sm:$0xf]
  %v53 = vld [vmem:[%s1 + $0x58] sm:$0xf]
  %v54 = vld [vmem:[%s1 + $0x5c] sm:$0xf]
  %v55 = vld [vmem:[%s1 + $0x60] sm:$0xf]
  %v56 = vld [vmem:[%s1 + $0x64] sm:$0xf]
  %v57 = vld [vmem:[%s1 + $0x68] sm:$0xf]
  %v58 = vld [vmem:[%s1 + $0x6c] sm:$0xf]
  %v59 = vld [vmem:[%s1 + $0x70] sm:$0xf]
  %v60 = vld [vmem:[%s1 + $0x74] sm:$0xf]
  %v61 = vld [vmem:[%s1 + $0x78] sm:$0xf]
  %v62 = vld [vmem:[%s1 + $0x7c] sm:$0xf]
  %v63 = vld [vmem:[%s1 + $0x80] sm:$0xf]
  %v64 = vld [vmem:[%s1 + $0x84] sm:$0xf]
  %v65 = vld [vmem:[%s1 + $0x88] sm:$0xf]
  %v66 = vld [vmem:[%s1 + $0x8c] sm:$0xf]
  %v67 = vld [vmem:[%s1 + $0x90] sm:$0xf]
  %v68 = vld [vmem:[%s1 + $0x94] sm:$0xf]
  %v69 = vld [vmem:[%s1 + $0x98] sm:$0xf]
  %v70 = vld [vmem:[%s1 + $0x9c] sm:$0xf]
  %v71 = vld [vmem:[%s1 + $0xa0] sm:$0xf]
  %v72 = vld [vmem:[%s1 + $0xa4] sm:$0xf]
  %v73 = vld [vmem:[%s1 + $0xa8] sm:$0xf]
  %v74 = vld [vmem:[%s1 + $0xac] sm:$0xf]
  %v75 = vld [vmem:[%s1 + $0xb0] sm:$0xf]
  %v76 = vld [vmem:[%s1 + $0xb4] sm:$0xf]
  %v77 = vld [vmem:[%s1 + $0xb8] sm:$0xf]
  %v78 = vld [vmem:[%s1 + $0xbc] sm:$0xf]
  %v79 = vld [vmem:[%s1 + $0xc0] sm:$0xf]
  %v80 = vld [vmem:[%s1 + $0xc4] sm:$0xf]
  %v81 = vld [vmem:[%s1 + $0xc8] sm:$0xf]
  %v82 = vld [vmem:[%s1 + $0xcc] sm:$0xf]
  %v83 = vld [vmem:[%s1 + $0xd0] sm:$0xf]
  %v84 = vld [vmem:[%s1 + $0xd4] sm:$0xf]
  %v85 = vld [vmem:[%s1 + $0xd8] sm:$0xf]
  %v86 = vld [vmem:[%s1 + $0xdc] sm:$0xf]
  %v87 = vld [vmem:[%s1 + $0xe0] sm:$0xf]
  %v88 = vld [vmem:[%s1 + $0xe4] sm:$0xf]
  %v89 = vld [vmem:[%s1 + $0xe8] sm:$0xf]
  %v90 = vld [vmem:[%s1 + $0xec] sm:$0xf]
  %v91 = vld [vmem:[%s1 + $0xf0] sm:$0xf]
  %v92 = vld [vmem:[%s1 + $0xf4] sm:$0xf]
  %v93 = vld [vmem:[%s1 + $0xf8] sm:$0xf]
  %v94 = vld [vmem:[%s1 + $0xfc] sm:$0xf]
  %v95 = vld [vmem:[%s1 + $0x100] sm:$0xf]
  %v96 = vld [vmem:[%s1 + $0x104] sm:$0xf]
  %v97 = vld [vmem:[%s1 + $0x108] sm:$0xf]
  %v98 = vld [vmem:[%s1 + $0x10c] sm:$0xf]
  %v99 = vld [vmem:[%s1 + $0x110] sm:$0xf]
  %v100 = vld [vmem:[%s1 + $0x114] sm:$0xf]
  %v101 = vld [vmem:[%s1 + $0x118] sm:$0xf]
  %v102 = vld [vmem:[%s1 + $0x11c] sm:$0xf]
  %v103 = vld [vmem:[%s1 + $0x120] sm:$0xf]
  %v104 = vld [vmem:[%s1 + $0x124] sm:$0xf]
  %v105 = vld [vmem:[%s1 + $0x128] sm:$0xf]
  %v106 = vld [vmem:[%s1 + $0x12c] sm:$0xf]
  %v107 = vld [vmem:[%s1 + $0x130] sm:$0xf]
  %v108 = vld [vmem:[%s1 + $0x134] sm:$0xf]
  %v109 = vld [vmem:[%s1 + $0x138] sm:$0xf]
  %v110 = vld [vmem:[%s1 + $0x13c] sm:$0xf]
  %v111 = vld [vmem:[%s1 + $0x140] sm:$0xf]
  %v112 = vld [vmem:[%s1 + $0x144] sm:$0xf]
  %v113 = vld [vmem:[%s1 + $0x148] sm:$0xf]
  %v114 = vld [vmem:[%s1 + $0x14c] sm:$0xf]
  %v115 = vld [vmem:[%s1 + $0x150] sm:$0xf]
  %v116 = vld [vmem:[%s1 + $0x154] sm:$0xf]
  %v117 = vld [vmem:[%s1 + $0x158] sm:$0xf]
  %v118 = vld [vmem:[%s1 + $0x15c] sm:$0xf]
  %v119 = vld [vmem:[%s1 + $0x160] sm:$0xf]
  %v120 = vld [vmem:[%s1 + $0x164] sm:$0xf]
  %v121 = vld [vmem:[%s1 + $0x168] sm:$0xf]
  %v122 = vld [vmem:[%s1 + $0x16c] sm:$0xf]
  %v123 = vld [vmem:[%s1 + $0x170] sm:$0xf]
  %v124 = vld [vmem:[%s1 + $0x174] sm:$0xf]
  %v125 = vld [vmem:[%s1 + $0x178] sm:$0xf]
  %v126 = vld [vmem:[%s1 + $0x17c] sm:$0xf]
  %v127 = vld [vmem:[%s1 + $0x180] sm:$0xf]
  %v128 = vld [vmem:[%s1 + $0x184] sm:$0xf]
  %v129 = vld [vmem:[%s1 + $0x188] sm:$0xf]
  %v130 = vld [vmem:[%s1 + $0x18c] sm:$0xf]
  %v131 = vld [vmem:[%s1 + $0x190] sm:$0xf]
  %v132 = vld [vmem:[%s1 + $0x194] sm:$0xf]
  %v133 = vld [vmem:[%s1 + $0x198] sm:$0xf]
  %v134 = vld [vmem:[%s1 + $0x19c] sm:$0xf]
  %v135 = vld [vmem:[%s1 + $0x1a0] sm:$0xf]
  %v136 = vld [vmem:[%s1 + $0x1a4] sm:$0xf]
  %v137 = vld [vmem:[%s1 + $0x1a8] sm:$0xf]
  %v138 = vld [vmem:[%s1 + $0x1ac] sm:$0xf]
  %v139 = vld [vmem:[%s1 + $0x1b0] sm:$0xf]
  %v140 = vld [vmem:[%s1 + $0x1b4] sm:$0xf]
  %v141 = vld [vmem:[%s1 + $0x1b8] sm:$0xf]
  %v142 = vld [vmem:[%s1 + $0x1bc] sm:$0xf]
  %v143 = vld [vmem:[%s1 + $0x1c0] sm:$0xf]
  %v144 = vld [vmem:[%s1 + $0x1c4] sm:$0xf]
  %v145 = vld [vmem:[%s1 + $0x1c8] sm:$0xf]
  %v146 = vld [vmem:[%s1 + $0x1cc] sm:$0xf]
  %v147 = vld [vmem:[%s1 + $0x1d0] sm:$0xf]
  %v148 = vld [vmem:[%s1 + $0x1d4] sm:$0xf]
  %v149 = vld [vmem:[%s1 + $0x1d8] sm:$0xf]
  %v150 = vld [vmem:[%s1 + $0x1dc] sm:$0xf]
  %v151 = vld [vmem:[%s1 + $0x1e0] sm:$0xf]
  %v152 = vld [vmem:[%s1 + $0x1e4] sm:$0xf]
  %v153 = vld [vmem:[%s1 + $0x1e8] sm:$0xf]
  %v154 = vld [vmem:[%s1 + $0x1ec] sm:$0xf]
  %v155 = vld [vmem:[%s1 + $0x1f0] sm:$0xf]
  %v156 = vld [vmem:[%s1 + $0x1f4] sm:$0xf]
  %v157 = vld [vmem:[%s1 + $0x1f8] sm:$0xf]
  %v158 = vld [vmem:[%s1 + $0x1fc] sm:$0xf]
  %v175 = vunpack.c.l.b16 %v15
  %v176 = vunpack.c.h.b16 %v15
  %v177 = vunpack.c.l.b16 %v16
  %v178 = vunpack.c.h.b16 %v16
  %v179 = vunpack.c.l.b16 %v17
  %v180 = vunpack.c.h.b16 %v17
  %v181 = vunpack.c.l.b16 %v18
  %v182 = vunpack.c.h.b16 %v18
  %v183 = vunpack.c.l.b16 %v19
  %v184 = vunpack.c.h.b16 %v19
  %v185 = vunpack.c.l.b16 %v20
  %v186 = vunpack.c.h.b16 %v20
  %v187 = vunpack.c.l.b16 %v21
  %v188 = vunpack.c.h.b16 %v21
  %v189 = vunpack.c.l.b16 %v22
  %v190 = vunpack.c.h.b16 %v22
  %v191 = vunpack.c.l.b16 %v23
  %v192 = vunpack.c.h.b16 %v23
  %v193 = vunpack.c.l.b16 %v24
  %v194 = vunpack.c.h.b16 %v24
  %v195 = vunpack.c.l.b16 %v25
  %v196 = vunpack.c.h.b16 %v25
  %v197 = vunpack.c.l.b16 %v26
  %v198 = vunpack.c.h.b16 %v26
  %v199 = vunpack.c.l.b16 %v27
  %v200 = vunpack.c.h.b16 %v27
  %v201 = vunpack.c.l.b16 %v28
  %v202 = vunpack.c.h.b16 %v28
  %v203 = vunpack.c.l.b16 %v29
  %v204 = vunpack.c.h.b16 %v29
  %v205 = vunpack.c.l.b16 %v30
  %v206 = vunpack.c.h.b16 %v30
  %v207 = vpack.c.b16 %v183, %v175
  %v208 = vpack.c.b16 %v184, %v176
  %v209 = vpack.c.b16 %v185, %v177
  %v210 = vpack.c.b16 %v186, %v178
  %v211 = vpack.c.b16 %v187, %v179
  %v212 = vpack.c.b16 %v188, %v180
  %v213 = vpack.c.b16 %v189, %v181
  %v214 = vpack.c.b16 %v190, %v182
  %v215 = vpack.c.b16 %v199, %v191
  %v216 = vpack.c.b16 %v200, %v192
  %v217 = vpack.c.b16 %v201, %v193
  %v218 = vpack.c.b16 %v202, %v194
  %v219 = vpack.c.b16 %v203, %v195
  %v220 = vpack.c.b16 %v204, %v196
  %v221 = vpack.c.b16 %v205, %v197
  %v222 = vpack.c.b16 %v206, %v198
  %v367 = vunpack.c.l.b16 %v31
  %v368 = vunpack.c.l.b16 %v32
  %v369 = vunpack.c.l.b16 %v33
  %v370 = vunpack.c.l.b16 %v34
  %v371 = vunpack.c.l.b16 %v35
  %v372 = vunpack.c.l.b16 %v36
  %v373 = vunpack.c.l.b16 %v37
  %v374 = vunpack.c.l.b16 %v38
  %v375 = vunpack.c.l.b16 %v39
  %v376 = vunpack.c.l.b16 %v40
  %v377 = vunpack.c.l.b16 %v41
  %v378 = vunpack.c.l.b16 %v42
  %v379 = vunpack.c.l.b16 %v43
  %v380 = vunpack.c.l.b16 %v44
  %v381 = vunpack.c.l.b16 %v45
  %v382 = vunpack.c.l.b16 %v46
  %v383 = vunpack.c.l.b16 %v47
  %v384 = vunpack.c.l.b16 %v48
  %v385 = vunpack.c.l.b16 %v49
  %v386 = vunpack.c.l.b16 %v50
  %v387 = vunpack.c.l.b16 %v51
  %v388 = vunpack.c.l.b16 %v52
  %v389 = vunpack.c.l.b16 %v53
  %v390 = vunpack.c.l.b16 %v54
  %v391 = vunpack.c.l.b16 %v55
  %v392 = vunpack.c.l.b16 %v56
  %v393 = vunpack.c.l.b16 %v57
  %v394 = vunpack.c.l.b16 %v58
  %v395 = vunpack.c.l.b16 %v59
  %v396 = vunpack.c.l.b16 %v60
  %v397 = vunpack.c.l.b16 %v61
  %v398 = vunpack.c.l.b16 %v62
  %v399 = vunpack.c.l.b16 %v63
  %v400 = vunpack.c.l.b16 %v64
  %v401 = vunpack.c.l.b16 %v65
  %v402 = vunpack.c.l.b16 %v66
  %v403 = vunpack.c.l.b16 %v67
  %v404 = vunpack.c.l.b16 %v68
  %v405 = vunpack.c.l.b16 %v69
  %v406 = vunpack.c.l.b16 %v70
  %v407 = vunpack.c.l.b16 %v71
  %v408 = vunpack.c.l.b16 %v72
  %v409 = vunpack.c.l.b16 %v73
  %v410 = vunpack.c.l.b16 %v74
  %v411 = vunpack.c.l.b16 %v75
  %v412 = vunpack.c.l.b16 %v76
  %v413 = vunpack.c.l.b16 %v77
  %v414 = vunpack.c.l.b16 %v78
  %v415 = vunpack.c.l.b16 %v79
  %v416 = vunpack.c.l.b16 %v80
  %v417 = vunpack.c.l.b16 %v81
  %v418 = vunpack.c.l.b16 %v82
  %v419 = vunpack.c.l.b16 %v83
  %v420 = vunpack.c.l.b16 %v84
  %v421 = vunpack.c.l.b16 %v85
  %v422 = vunpack.c.l.b16 %v86
  %v423 = vunpack.c.l.b16 %v87
  %v424 = vunpack.c.l.b16 %v88
  %v425 = vunpack.c.l.b16 %v89
  %v426 = vunpack.c.l.b16 %v90
  %v427 = vunpack.c.l.b16 %v91
  %v428 = vunpack.c.l.b16 %v92
  %v429 = vunpack.c.l.b16 %v93
  %v430 = vunpack.c.l.b16 %v94
  %v431 = vunpack.c.l.b16 %v95
  %v432 = vunpack.c.l.b16 %v96
  %v433 = vunpack.c.l.b16 %v97
  %v434 = vunpack.c.l.b16 %v98
  %v435 = vunpack.c.l.b16 %v99
  %v436 = vunpack.c.l.b16 %v100
  %v437 = vunpack.c.l.b16 %v101
  %v438 = vunpack.c.l.b16 %v102
  %v439 = vunpack.c.l.b16 %v103
  %v440 = vunpack.c.l.b16 %v104
  %v441 = vunpack.c.l.b16 %v105
  %v442 = vunpack.c.l.b16 %v106
  %v443 = vunpack.c.l.b16 %v107
  %v444 = vunpack.c.l.b16 %v108
  %v445 = vunpack.c.l.b16 %v109
  %v446 = vunpack.c.l.b16 %v110
  %v447 = vunpack.c.l.b16 %v111
  %v448 = vunpack.c.l.b16 %v112
  %v449 = vunpack.c.l.b16 %v113
  %v450 = vunpack.c.l.b16 %v114
  %v451 = vunpack.c.l.b16 %v115
  %v452 = vunpack.c.l.b16 %v116
  %v453 = vunpack.c.l.b16 %v117
  %v454 = vunpack.c.l.b16 %v118
  %v455 = vunpack.c.l.b16 %v119
  %v456 = vunpack.c.l.b16 %v120
  %v457 = vunpack.c.l.b16 %v121
  %v458 = vunpack.c.l.b16 %v122
  %v459 = vunpack.c.l.b16 %v123
  %v460 = vunpack.c.l.b16 %v124
  %v461 = vunpack.c.l.b16 %v125
  %v462 = vunpack.c.l.b16 %v126
  %v463 = vunpack.c.l.b16 %v127
  %v464 = vunpack.c.l.b16 %v128
  %v465 = vunpack.c.l.b16 %v129
  %v466 = vunpack.c.l.b16 %v130
  %v467 = vunpack.c.l.b16 %v131
  %v468 = vunpack.c.l.b16 %v132
  %v469 = vunpack.c.l.b16 %v133
  %v470 = vunpack.c.l.b16 %v134
  %v471 = vunpack.c.l.b16 %v135
  %v472 = vunpack.c.l.b16 %v136
  %v473 = vunpack.c.l.b16 %v137
  %v474 = vunpack.c.l.b16 %v138
  %v475 = vunpack.c.l.b16 %v139
  %v476 = vunpack.c.l.b16 %v140
  %v477 = vunpack.c.l.b16 %v141
  %v478 = vunpack.c.l.b16 %v142
  %v479 = vunpack.c.l.b16 %v143
  %v480 = vunpack.c.l.b16 %v144
  %v481 = vunpack.c.l.b16 %v145
  %v482 = vunpack.c.l.b16 %v146
  %v483 = vunpack.c.l.b16 %v147
  %v484 = vunpack.c.l.b16 %v148
  %v485 = vunpack.c.l.b16 %v149
  %v486 = vunpack.c.l.b16 %v150
  %v487 = vunpack.c.l.b16 %v151
  %v488 = vunpack.c.l.b16 %v152
  %v489 = vunpack.c.l.b16 %v153
  %v490 = vunpack.c.l.b16 %v154
  %v491 = vunpack.c.l.b16 %v155
  %v492 = vunpack.c.l.b16 %v156
  %v493 = vunpack.c.l.b16 %v157
  %v494 = vunpack.c.l.b16 %v158
  %v495 = vpack.c.b16 %v368, %v367
  %v496 = vpack.c.b16 %v370, %v369
  %v497 = vpack.c.b16 %v372, %v371
  %v498 = vpack.c.b16 %v374, %v373
  %v499 = vpack.c.b16 %v376, %v375
  %v500 = vpack.c.b16 %v378, %v377
  %v501 = vpack.c.b16 %v380, %v379
  %v502 = vpack.c.b16 %v382, %v381
  %v503 = vpack.c.b16 %v384, %v383
  %v504 = vpack.c.b16 %v386, %v385
  %v505 = vpack.c.b16 %v388, %v387
  %v506 = vpack.c.b16 %v390, %v389
  %v507 = vpack.c.b16 %v392, %v391
  %v508 = vpack.c.b16 %v394, %v393
  %v509 = vpack.c.b16 %v396, %v395
  %v510 = vpack.c.b16 %v398, %v397
  %v511 = vpack.c.b16 %v400, %v399
  %v512 = vpack.c.b16 %v402, %v401
  %v513 = vpack.c.b16 %v404, %v403
  %v514 = vpack.c.b16 %v406, %v405
  %v515 = vpack.c.b16 %v408, %v407
  %v516 = vpack.c.b16 %v410, %v409
  %v517 = vpack.c.b16 %v412, %v411
  %v518 = vpack.c.b16 %v414, %v413
  %v519 = vpack.c.b16 %v416, %v415
  %v520 = vpack.c.b16 %v418, %v417
  %v521 = vpack.c.b16 %v420, %v419
  %v522 = vpack.c.b16 %v422, %v421
  %v523 = vpack.c.b16 %v424, %v423
  %v524 = vpack.c.b16 %v426, %v425
  %v525 = vpack.c.b16 %v428, %v427
  %v526 = vpack.c.b16 %v430, %v429
  %v527 = vpack.c.b16 %v432, %v431
  %v528 = vpack.c.b16 %v434, %v433
  %v529 = vpack.c.b16 %v436, %v435
  %v530 = vpack.c.b16 %v438, %v437
  %v531 = vpack.c.b16 %v440, %v439
  %v532 = vpack.c.b16 %v442, %v441
  %v533 = vpack.c.b16 %v444, %v443
  %v534 = vpack.c.b16 %v446, %v445
  %v535 = vpack.c.b16 %v448, %v447
  %v536 = vpack.c.b16 %v450, %v449
  %v537 = vpack.c.b16 %v452, %v451
  %v538 = vpack.c.b16 %v454, %v453
  %v539 = vpack.c.b16 %v456, %v455
  %v540 = vpack.c.b16 %v458, %v457
  %v541 = vpack.c.b16 %v460, %v459
  %v542 = vpack.c.b16 %v462, %v461
  %v543 = vpack.c.b16 %v464, %v463
  %v544 = vpack.c.b16 %v466, %v465
  %v545 = vpack.c.b16 %v468, %v467
  %v546 = vpack.c.b16 %v470, %v469
  %v547 = vpack.c.b16 %v472, %v471
  %v548 = vpack.c.b16 %v474, %v473
  %v549 = vpack.c.b16 %v476, %v475
  %v550 = vpack.c.b16 %v478, %v477
  %v551 = vpack.c.b16 %v480, %v479
  %v552 = vpack.c.b16 %v482, %v481
  %v553 = vpack.c.b16 %v484, %v483
  %v554 = vpack.c.b16 %v486, %v485
  %v555 = vpack.c.b16 %v488, %v487
  %v556 = vpack.c.b16 %v490, %v489
  %v557 = vpack.c.b16 %v492, %v491
  %v558 = vpack.c.b16 %v494, %v493
  %623 = vmatprep.subr.bf16.mxu0 0
  %624 = vmatpush1.bf16.msra.mxu0 %v495
  %625 = vmatprep.subr.bf16.mxu0 0
  %626 = vmatpush1.bf16.msra.mxu0 %v496
  %627 = vmatprep.subr.bf16.mxu0 0
  %628 = vmatpush1.bf16.msra.mxu0 %v497
  %629 = vmatprep.subr.bf16.mxu0 0
  %630 = vmatpush1.bf16.msra.mxu0 %v498
  %631 = vmatprep.subr.bf16.mxu0 0
  %632 = vmatpush1.bf16.msra.mxu0 %v499
  %633 = vmatprep.subr.bf16.mxu0 0
  %634 = vmatpush1.bf16.msra.mxu0 %v500
  %635 = vmatprep.subr.bf16.mxu0 0
  %636 = vmatpush1.bf16.msra.mxu0 %v501
  %637 = vmatprep.subr.bf16.mxu0 0
  %638 = vmatpush1.bf16.msra.mxu0 %v502
  %639 = vmatprep.subr.bf16.mxu0 0
  %640 = vmatpush1.bf16.msra.mxu0 %v503
  %641 = vmatprep.subr.bf16.mxu0 0
  %642 = vmatpush1.bf16.msra.mxu0 %v504
  %643 = vmatprep.subr.bf16.mxu0 0
  %644 = vmatpush1.bf16.msra.mxu0 %v505
  %645 = vmatprep.subr.bf16.mxu0 0
  %646 = vmatpush1.bf16.msra.mxu0 %v506
  %647 = vmatprep.subr.bf16.mxu0 0
  %648 = vmatpush1.bf16.msra.mxu0 %v507
  %649 = vmatprep.subr.bf16.mxu0 0
  %650 = vmatpush1.bf16.msra.mxu0 %v508
  %651 = vmatprep.subr.bf16.mxu0 0
  %652 = vmatpush1.bf16.msra.mxu0 %v509
  %653 = vmatprep.subr.bf16.mxu0 0
  %654 = vmatpush1.bf16.msra.mxu0 %v510
  %655 = vmatprep.mubr.bf16.mxu0 %v208
  %656 = vmatmul.mubr.bf16.gmra.mrb[0].mxu0 %v207
  %v657 = vpop.f32.mrb[0].mxu0
  %v658 = vadd.f32 0.0, %v657
  %v659 = vpop.f32.mrb[0].mxu0
  %v660 = vpop.f32.mrb[0].mxu0
  %v661 = vadd.f32 0.0, %v660
  %v662 = vpop.f32.mrb[0].mxu0
  %663 = vmatprep.mubr.bf16.mxu0 %v216
  %664 = vmatmul.mubr.bf16.gmra.mrb[0].mxu0 %v215
  %v665 = vpop.f32.mrb[0].mxu0
  %v666 = vadd.f32 0.0, %v665
  %v667 = vpop.f32.mrb[0].mxu0
  %v668 = vpop.f32.mrb[0].mxu0
  %v669 = vadd.f32 0.0, %v668
  %v670 = vpop.f32.mrb[0].mxu0
  %671 = vdwg.mxu0
  %672 = vmatprep.subr.bf16.mxu0 0
  %673 = vmatpush1.bf16.msra.mxu0 %v511
  %674 = vmatprep.subr.bf16.mxu0 0
  %675 = vmatpush1.bf16.msra.mxu0 %v512
  %676 = vmatprep.subr.bf16.mxu0 0
  %677 = vmatpush1.bf16.msra.mxu0 %v513
  %678 = vmatprep.subr.bf16.mxu0 0
  %679 = vmatpush1.bf16.msra.mxu0 %v514
  %680 = vmatprep.subr.bf16.mxu0 0
  %681 = vmatpush1.bf16.msra.mxu0 %v515
  %682 = vmatprep.subr.bf16.mxu0 0
  %683 = vmatpush1.bf16.msra.mxu0 %v516
  %684 = vmatprep.subr.bf16.mxu0 0
  %685 = vmatpush1.bf16.msra.mxu0 %v517
  %686 = vmatprep.subr.bf16.mxu0 0
  %687 = vmatpush1.bf16.msra.mxu0 %v518
  %688 = vmatprep.subr.bf16.mxu0 0
  %689 = vmatpush1.bf16.msra.mxu0 %v519
  %690 = vmatprep.subr.bf16.mxu0 0
  %691 = vmatpush1.bf16.msra.mxu0 %v520
  %692 = vmatprep.subr.bf16.mxu0 0
  %693 = vmatpush1.bf16.msra.mxu0 %v521
  %694 = vmatprep.subr.bf16.mxu0 0
  %695 = vmatpush1.bf16.msra.mxu0 %v522
  %696 = vmatprep.subr.bf16.mxu0 0
  %697 = vmatpush1.bf16.msra.mxu0 %v523
  %698 = vmatprep.subr.bf16.mxu0 0
  %699 = vmatpush1.bf16.msra.mxu0 %v524
  %700 = vmatprep.subr.bf16.mxu0 0
  %701 = vmatpush1.bf16.msra.mxu0 %v525
  %702 = vmatprep.subr.bf16.mxu0 0
  %703 = vmatpush1.bf16.msra.mxu0 %v526
  %704 = vmatprep.mubr.bf16.mxu0 %v210
  %705 = vmatmul.mubr.bf16.gmra.mrb[0].mxu0 %v209
  %v706 = vpop.f32.mrb[0].mxu0
  %v707 = vadd.f32 %v658, %v706
  %v708 = vpop.f32.mrb[0].mxu0
  %v709 = vpop.f32.mrb[0].mxu0
  %v710 = vadd.f32 %v661, %v709
  %v711 = vpop.f32.mrb[0].mxu0
  %712 = vmatprep.mubr.bf16.mxu0 %v218
  %713 = vmatmul.mubr.bf16.gmra.mrb[0].mxu0 %v217
  %v714 = vpop.f32.mrb[0].mxu0
  %v715 = vadd.f32 %v666, %v714
  %v716 = vpop.f32.mrb[0].mxu0
  %v717 = vpop.f32.mrb[0].mxu0
  %v718 = vadd.f32 %v669, %v717
  %v719 = vpop.f32.mrb[0].mxu0
  %720 = vdwg.mxu0
  %721 = vmatprep.subr.bf16.mxu0 0
  %722 = vmatpush1.bf16.msra.mxu0 %v527
  %723 = vmatprep.subr.bf16.mxu0 0
  %724 = vmatpush1.bf16.msra.mxu0 %v528
  %725 = vmatprep.subr.bf16.mxu0 0
  %726 = vmatpush1.bf16.msra.mxu0 %v529
  %727 = vmatprep.subr.bf16.mxu0 0
  %728 = vmatpush1.bf16.msra.mxu0 %v530
  %729 = vmatprep.subr.bf16.mxu0 0
  %730 = vmatpush1.bf16.msra.mxu0 %v531
  %731 = vmatprep.subr.bf16.mxu0 0
  %732 = vmatpush1.bf16.msra.mxu0 %v532
  %733 = vmatprep.subr.bf16.mxu0 0
  %734 = vmatpush1.bf16.msra.mxu0 %v533
  %735 = vmatprep.subr.bf16.mxu0 0
  %736 = vmatpush1.bf16.msra.mxu0 %v534
  %737 = vmatprep.subr.bf16.mxu0 0
  %738 = vmatpush1.bf16.msra.mxu0 %v535
  %739 = vmatprep.subr.bf16.mxu0 0
  %740 = vmatpush1.bf16.msra.mxu0 %v536
  %741 = vmatprep.subr.bf16.mxu0 0
  %742 = vmatpush1.bf16.msra.mxu0 %v537
  %743 = vmatprep.subr.bf16.mxu0 0
  %744 = vmatpush1.bf16.msra.mxu0 %v538
  %745 = vmatprep.subr.bf16.mxu0 0
  %746 = vmatpush1.bf16.msra.mxu0 %v539
  %747 = vmatprep.subr.bf16.mxu0 0
  %748 = vmatpush1.bf16.msra.mxu0 %v540
  %749 = vmatprep.subr.bf16.mxu0 0
  %750 = vmatpush1.bf16.msra.mxu0 %v541
  %751 = vmatprep.subr.bf16.mxu0 0
  %752 = vmatpush1.bf16.msra.mxu0 %v542
  %753 = vmatprep.mubr.bf16.mxu0 %v212
  %754 = vmatmul.mubr.bf16.gmra.mrb[0].mxu0 %v211
  %v755 = vpop.f32.mrb[0].mxu0
  %v756 = vadd.f32 %v707, %v755
  %v757 = vpop.f32.mrb[0].mxu0
  %v758 = vpop.f32.mrb[0].mxu0
  %v759 = vadd.f32 %v710, %v758
  %v760 = vpop.f32.mrb[0].mxu0
  %761 = vmatprep.mubr.bf16.mxu0 %v220
  %762 = vmatmul.mubr.bf16.gmra.mrb[0].mxu0 %v219
  %v763 = vpop.f32.mrb[0].mxu0
  %v764 = vadd.f32 %v715, %v763
  %v765 = vpop.f32.mrb[0].mxu0
  %v766 = vpop.f32.mrb[0].mxu0
  %v767 = vadd.f32 %v718, %v766
  %v768 = vpop.f32.mrb[0].mxu0
  %769 = vdwg.mxu0
  %770 = vmatprep.subr.bf16.mxu0 0
  %771 = vmatpush1.bf16.msra.mxu0 %v543
  %772 = vmatprep.subr.bf16.mxu0 0
  %773 = vmatpush1.bf16.msra.mxu0 %v544
  %774 = vmatprep.subr.bf16.mxu0 0
  %775 = vmatpush1.bf16.msra.mxu0 %v545
  %776 = vmatprep.subr.bf16.mxu0 0
  %777 = vmatpush1.bf16.msra.mxu0 %v546
  %778 = vmatprep.subr.bf16.mxu0 0
  %779 = vmatpush1.bf16.msra.mxu0 %v547
  %780 = vmatprep.subr.bf16.mxu0 0
  %781 = vmatpush1.bf16.msra.mxu0 %v548
  %782 = vmatprep.subr.bf16.mxu0 0
  %783 = vmatpush1.bf16.msra.mxu0 %v549
  %784 = vmatprep.subr.bf16.mxu0 0
  %785 = vmatpush1.bf16.msra.mxu0 %v550
  %786 = vmatprep.subr.bf16.mxu0 0
  %787 = vmatpush1.bf16.msra.mxu0 %v551
  %788 = vmatprep.subr.bf16.mxu0 0
  %789 = vmatpush1.bf16.msra.mxu0 %v552
  %790 = vmatprep.subr.bf16.mxu0 0
  %791 = vmatpush1.bf16.msra.mxu0 %v553
  %792 = vmatprep.subr.bf16.mxu0 0
  %793 = vmatpush1.bf16.msra.mxu0 %v554
  %794 = vmatprep.subr.bf16.mxu0 0
  %795 = vmatpush1.bf16.msra.mxu0 %v555
  %796 = vmatprep.subr.bf16.mxu0 0
  %797 = vmatpush1.bf16.msra.mxu0 %v556
  %798 = vmatprep.subr.bf16.mxu0 0
  %799 = vmatpush1.bf16.msra.mxu0 %v557
  %800 = vmatprep.subr.bf16.mxu0 0
  %801 = vmatpush1.bf16.msra.mxu0 %v558
  %802 = vmatprep.mubr.bf16.mxu0 %v214
  %803 = vmatmul.mubr.bf16.gmra.mrb[0].mxu0 %v213
  %v804 = vpop.f32.mrb[0].mxu0
  %v805 = vadd.f32 %v756, %v804
  %v806 = vpop.f32.mrb[0].mxu0
  %v807 = vpop.f32.mrb[0].mxu0
  %v808 = vadd.f32 %v759, %v807
  %v809 = vpop.f32.mrb[0].mxu0
  %810 = vmatprep.mubr.bf16.mxu0 %v222
  %811 = vmatmul.mubr.bf16.gmra.mrb[0].mxu0 %v221
  %v812 = vpop.f32.mrb[0].mxu0
  %v813 = vadd.f32 %v764, %v812
  %v814 = vpop.f32.mrb[0].mxu0
  %v815 = vpop.f32.mrb[0].mxu0
  %v816 = vadd.f32 %v767, %v815
  %v817 = vpop.f32.mrb[0].mxu0
  %818 = vdwg.mxu0
  %819 = vst [vmem:[%s2] sm:$0xff] %v805
  %820 = vst [vmem:[%s2 + $0x8] sm:$0xff] %v808
  %821 = vst [vmem:[%s2 + $0x10] sm:$0xff] %v813
  %822 = vst [vmem:[%s2 + $0x18] sm:$0xff] %v816
  %v823 = vadd.f32 %v805, %v808
  %v824 = vadd.f32 %v823, %v813
  %v825 = vadd.f32 %v824, %v816
  %v826 = vrot.slane %v825, 4
  %v827 = vadd.f32 %v825, %v826
  %v828 = vrot.slane %v827, 2
  %v829 = vadd.f32 %v827, %v828
  %v830 = vrot.slane %v829, 1
  %v831 = vadd.f32 %v829, %v830
  %832 = vst [vmem:[%s3] sm:$0x1] %v831
  %v833 = vmul.f32 %v805, %v805
  %v834 = vmul.f32 %v808, %v808
  %v835 = vmul.f32 %v813, %v813
  %v836 = vmul.f32 %v816, %v816
  %v837 = vadd.f32 %v833, %v834
  %v838 = vadd.f32 %v837, %v835
  %v839 = vadd.f32 %v838, %v836
  %v840 = vrot.slane %v839, 4
  %v841 = vadd.f32 %v839, %v840
  %v842 = vrot.slane %v841, 2
  %v843 = vadd.f32 %v841, %v842
  %v844 = vrot.slane %v843, 1
  %v845 = vadd.f32 %v843, %v844
  %846 = vst [vmem:[%s4] sm:$0x1] %v845
  // Predicated region
  $region10: #{mc_model_forward.22} parent=0 // pred_check
    _
  $region11: #{mc_model_forward.22} parent=0 // pred_check_branch
    %848 = sbr.rel (0) target = $region13
  $region12: #{mc_model_forward.22} parent=0 // pred_region
    _
  $region13: #{mc_model_forward.22} parent=0 // pred_fallthru
    _
  // Predicated region
  $region14: #{mc_model_forward.22} parent=0 // pred_check
    _
  $region15: #{mc_model_forward.22} parent=0 // pred_check_branch
    %850 = sbr.rel (0) target = $region17
  $region16: #{mc_model_forward.22} parent=0 // pred_region
    _
  $region17: #{mc_model_forward.22} parent=0 // pred_fallthru
    _
  // Predicated region
  $region18: #{mc_model_forward.22} parent=0 // pred_check
    _
  $region19: #{mc_model_forward.22} parent=0 // pred_check_branch
    %852 = sbr.rel (0) target = $region21
  $region20: #{mc_model_forward.22} parent=0 // pred_region
    _
  $region21: #{mc_model_forward.22} parent=0 // pred_fallthru
    _
  // Predicated region
  $region22: #{mc_model_forward.22} parent=0 // pred_check
    _
  $region23: #{mc_model_forward.22} parent=0 // pred_check_branch
    %854 = sbr.rel (0) target = $region25
  $region24: #{mc_model_forward.22} parent=0 // pred_region
    _
  $region25: #{mc_model_forward.22} parent=0 // pred_fallthru
    _
  // Predicated region
  $region26: #{mc_model_forward.22} parent=0 // pred_check
    _
  $region27: #{mc_model_forward.22} parent=0 // pred_check_branch
    %856 = sbr.rel (0) target = $region29
  $region28: #{mc_model_forward.22} parent=0 // pred_region
    _
  $region29: #{mc_model_forward.22} parent=0 // pred_fallthru
    _
  // Predicated region
  $region30: #{mc_model_forward.22} parent=0 // pred_check
    _
  $region31: #{mc_model_forward.22} parent=0 // pred_check_branch
    %858 = sbr.rel (0) target = $region33
  $region32: #{mc_model_forward.22} parent=0 // pred_region
    _
  $region33: #{mc_model_forward.22} parent=0 // pred_fallthru
    _

// kernel: mc_model_forward.25
$region0: #{mc_model_forward.25}
  #allocation0 [shape = 'u32[]', space=smem, size = 0x4, offset = 0x4, fixed_abs, tag = 'smem constant byte address 0x4 - core index']
  #allocation1 [shape = 'u32[144,128]{1,0:T(1,128)}', space=vmem, size = 0x12000, scoped, tag = 'internal scratch']
  %s0 = inlined_call_operand.vmem [shape: f32[16,256], index: 0, kind: input, shape index: {}]
  %s1 = inlined_call_operand.vmem [shape: f32[1,1,256], index: 1, kind: input, shape index: {}]
  %s2 = inlined_call_operand.vmem [shape: f32[1,1,256], index: 2, kind: input, shape index: {}]
  %s3 = inlined_call_operand.vmem [shape: f32[1,256], index: 3, kind: input, shape index: {}]
  %s4 = inlined_call_operand.vmem [shape: f32[1,256], index: 4, kind: input, shape index: {}]
  %s5 = inlined_call_operand.vmem [shape: f32[16,256], index: 5, kind: output, shape index: {}]
  %s6 = sld [smem:[#allocation0]]
  $region30: #{mc_model_forward.25} parent=0
    _
  %s8 = ssub.s32 1, %s6
  %s9 = scalar_select 0, %s8, %s6
  // Predicated region
  $region2: #{mc_model_forward.25} parent=0 // pred_check
    _
  $region3: #{mc_model_forward.25} parent=0 // pred_check_branch
    %11 = sbr.rel (0) target = $region5
  $region4: #{mc_model_forward.25} parent=0 // pred_region
    _
  $region5: #{mc_model_forward.25} parent=0 // pred_fallthru
    _
  // Predicated region
  $region6: #{mc_model_forward.25} parent=0 // pred_check
    _
  $region7: #{mc_model_forward.25} parent=0 // pred_check_branch
    %13 = sbr.rel (0) target = $region9
  $region8: #{mc_model_forward.25} parent=0 // pred_region
    _
  $region9: #{mc_model_forward.25} parent=0 // pred_fallthru
    _
  // Predicated region
  $region10: #{mc_model_forward.25} parent=0 // pred_check
    _
  $region11: #{mc_model_forward.25} parent=0 // pred_check_branch
    %15 = sbr.rel (0) target = $region13
  $region12: #{mc_model_forward.25} parent=0 // pred_region
    _
  $region13: #{mc_model_forward.25} parent=0 // pred_fallthru
    _
  // Predicated region
  $region14: #{mc_model_forward.25} parent=0 // pred_check
    _
  $region15: #{mc_model_forward.25} parent=0 // pred_check_branch
    %17 = sbr.rel (0) target = $region17
  $region16: #{mc_model_forward.25} parent=0 // pred_region
    _
  $region17: #{mc_model_forward.25} parent=0 // pred_fallthru
    _
  // Predicated region
  $region18: #{mc_model_forward.25} parent=0 // pred_check
    _
  $region19: #{mc_model_forward.25} parent=0 // pred_check_branch
    %19 = sbr.rel (0) target = $region21
  $region20: #{mc_model_forward.25} parent=0 // pred_region
    _
  $region21: #{mc_model_forward.25} parent=0 // pred_fallthru
    _
  %v20 = vld [vmem:[%s1] sm:$0x3]
  %v21 = vadd.f32 %v20, 0.0
  %v22 = vmul.f32 %v21, 0.125
  %v23 = vld [vmem:[%s2] sm:$0x3]
  %v24 = vadd.f32 %v23, 0.0
  %v25 = vmul.f32 %v24, 0.125
  %v26 = vmul.f32 %v22, %v22
  %v27 = vsub.f32 %v25, %v26
  %v28 = vld [vmem:[%s3] sm:$0x3]
  %v29 = vadd.f32 %v27, 1e-05
  %v30 = vrsqrt.pop %v29
  %v31 = vmul.f32 %v28, %v30
  %v32 = vld [vmem:[%s4] sm:$0x3]
  %v33 = vmul.f32 %v22, %v31
  %v34 = vsub.f32 %v32, %v33
  %v35 = vld [vmem:[%s0] sm:$0xff]
  %v36 = vld [vmem:[%s0 + $0x8] sm:$0xff]
  %v37 = vld [vmem:[%s0 + $0x10] sm:$0xff]
  %v38 = vld [vmem:[%s0 + $0x18] sm:$0xff]
  %v40 = vlaneseq
  %v41 = vshrl.u32 %v40, 7
  %v42 = vsub.s32 0, %v41
  %v43 = vrot.slane %v31, %v42
  %v44 = vlaneseq
  %v45 = vshrl.u32 %v44, 7
  %v46 = vsub.s32 1, %v45
  %v47 = vrot.slane %v31, %v46
  %v50 = vmul.f32 %v35, %v43
  %v51 = vmul.f32 %v36, %v47
  %v52 = vmul.f32 %v37, %v43
  %v53 = vmul.f32 %v38, %v47
  %v55 = vlaneseq
  %v56 = vshrl.u32 %v55, 7
  %v57 = vsub.s32 0, %v56
  %v58 = vrot.slane %v34, %v57
  %v59 = vlaneseq
  %v60 = vshrl.u32 %v59, 7
  %v61 = vsub.s32 1, %v60
  %v62 = vrot.slane %v34, %v61
  %v65 = vadd.f32 %v50, %v58
  %v66 = vadd.f32 %v51, %v62
  %v67 = vadd.f32 %v52, %v58
  %v68 = vadd.f32 %v53, %v62
  %vm69 = vcmp.ge.f32.partialorder %v65, 0.0
  %vm70 = vcmp.ge.f32.partialorder %v66, 0.0
  %vm71 = vcmp.ge.f32.partialorder %v67, 0.0
  %vm72 = vcmp.ge.f32.partialorder %v68, 0.0
  %v73 = vmul.f32 %v65, 0.01
  %v74 = vmul.f32 %v66, 0.01
  %v75 = vmul.f32 %v67, 0.01
  %v76 = vmul.f32 %v68, 0.01
  %v77 = vsel %vm69, %v65, %v73
  %v78 = vsel %vm70, %v66, %v74
  %v79 = vsel %vm71, %v67, %v75
  %v80 = vsel %vm72, %v68, %v76
  %81 = vst [vmem:[%s5] sm:$0xff] %v77
  %82 = vst [vmem:[%s5 + $0x8] sm:$0xff] %v78
  %83 = vst [vmem:[%s5 + $0x10] sm:$0xff] %v79
  %84 = vst [vmem:[%s5 + $0x18] sm:$0xff] %v80
  // Predicated region
  $region22: #{mc_model_forward.25} parent=0 // pred_check
    _
  $region23: #{mc_model_forward.25} parent=0 // pred_check_branch
    %86 = sbr.rel (0) target = $region25
  $region24: #{mc_model_forward.25} parent=0 // pred_region
    _
  $region25: #{mc_model_forward.25} parent=0 // pred_fallthru
    _
  // Predicated region
  $region26: #{mc_model_forward.25} parent=0 // pred_check
    _
  $region27: #{mc_model_forward.25} parent=0 // pred_check_branch
    %88 = sbr.rel (0) target = $region29
  $region28: #{mc_model_forward.25} parent=0 // pred_region
    _
  $region29: #{mc_model_forward.25} parent=0 // pred_fallthru
    _

// kernel: mc_model_forward.24
$region0: #{mc_model_forward.24}
  #allocation0 [shape = 'u32[]', space=smem, size = 0x4, offset = 0x4, fixed_abs, tag = 'smem constant byte address 0x4 - core index']
  #allocation1 [shape = 'u32[144,128]{1,0:T(1,128)}', space=vmem, size = 0x12000, scoped, tag = 'internal scratch']
  %s0 = inlined_call_operand.vmem [shape: bf16[16,2048], index: 0, kind: input, shape index: {}]
  %s1 = inlined_call_operand.vmem [shape: bf16[2048,256], index: 1, kind: input, shape index: {}]
  %s2 = inlined_call_operand.vmem [shape: f32[16,256], index: 2, kind: output, shape index: {0}]
  %s3 = inlined_call_operand.vmem [shape: f32[1,1,256], index: 3, kind: output, shape index: {1}]
  %s4 = inlined_call_operand.vmem [shape: f32[1,1,256], index: 4, kind: output, shape index: {2}]
  %5 = xla_tuple %s2, %s3, %s4
  %s6 = sld [smem:[#allocation0]]
  $region34: #{mc_model_forward.24} parent=0
    _
  %s8 = ssub.s32 1, %s6
  %s9 = scalar_select 0, %s8, %s6
  // Predicated region
  $region2: #{mc_model_forward.24} parent=0 // pred_check
    _
  $region3: #{mc_model_forward.24} parent=0 // pred_check_branch
    %11 = sbr.rel (0) target = $region5
  $region4: #{mc_model_forward.24} parent=0 // pred_region
    _
  $region5: #{mc_model_forward.24} parent=0 // pred_fallthru
    _
  // Predicated region
  $region6: #{mc_model_forward.24} parent=0 // pred_check
    _
  $region7: #{mc_model_forward.24} parent=0 // pred_check_branch
    %13 = sbr.rel (0) target = $region9
  $region8: #{mc_model_forward.24} parent=0 // pred_region
    _
  $region9: #{mc_model_forward.24} parent=0 // pred_fallthru
    _
  %v14 = vld [vmem:[%s0] sm:$0xff]
  %v15 = vld [vmem:[%s0 + $0x8] sm:$0xff]
  %v16 = vld [vmem:[%s0 + $0x10] sm:$0xff]
  %v17 = vld [vmem:[%s0 + $0x18] sm:$0xff]
  %v18 = vld [vmem:[%s0 + $0x20] sm:$0xff]
  %v19 = vld [vmem:[%s0 + $0x28] sm:$0xff]
  %v20 = vld [vmem:[%s0 + $0x30] sm:$0xff]
  %v21 = vld [vmem:[%s0 + $0x38] sm:$0xff]
  %v22 = vld [vmem:[%s0 + $0x40] sm:$0xff]
  %v23 = vld [vmem:[%s0 + $0x48] sm:$0xff]
  %v24 = vld [vmem:[%s0 + $0x50] sm:$0xff]
  %v25 = vld [vmem:[%s0 + $0x58] sm:$0xff]
  %v26 = vld [vmem:[%s0 + $0x60] sm:$0xff]
  %v27 = vld [vmem:[%s0 + $0x68] sm:$0xff]
  %v28 = vld [vmem:[%s0 + $0x70] sm:$0xff]
  %v29 = vld [vmem:[%s0 + $0x78] sm:$0xff]
  %v30 = vld [vmem:[%s1] sm:$0xff]
  %v31 = vld [vmem:[%s1 + $0x8] sm:$0xff]
  %v32 = vld [vmem:[%s1 + $0x10] sm:$0xff]
  %v33 = vld [vmem:[%s1 + $0x18] sm:$0xff]
  %v34 = vld [vmem:[%s1 + $0x20] sm:$0xff]
  %v35 = vld [vmem:[%s1 + $0x28] sm:$0xff]
  %v36 = vld [vmem:[%s1 + $0x30] sm:$0xff]
  %v37 = vld [vmem:[%s1 + $0x38] sm:$0xff]
  %v38 = vld [vmem:[%s1 + $0x40] sm:$0xff]
  %v39 = vld [vmem:[%s1 + $0x48] sm:$0xff]
  %v40 = vld [vmem:[%s1 + $0x50] sm:$0xff]
  %v41 = vld [vmem:[%s1 + $0x58] sm:$0xff]
  %v42 = vld [vmem:[%s1 + $0x60] sm:$0xff]
  %v43 = vld [vmem:[%s1 + $0x68] sm:$0xff]
  %v44 = vld [vmem:[%s1 + $0x70] sm:$0xff]
  %v45 = vld [vmem:[%s1 + $0x78] sm:$0xff]
  %v46 = vld [vmem:[%s1 + $0x80] sm:$0xff]
  %v47 = vld [vmem:[%s1 + $0x88] sm:$0xff]
  %v48 = vld [vmem:[%s1 + $0x90] sm:$0xff]
  %v49 = vld [vmem:[%s1 + $0x98] sm:$0xff]
  %v50 = vld [vmem:[%s1 + $0xa0] sm:$0xff]
  %v51 = vld [vmem:[%s1 + $0xa8] sm:$0xff]
  %v52 = vld [vmem:[%s1 + $0xb0] sm:$0xff]
  %v53 = vld [vmem:[%s1 + $0xb8] sm:$0xff]
  %v54 = vld [vmem:[%s1 + $0xc0] sm:$0xff]
  %v55 = vld [vmem:[%s1 + $0xc8] sm:$0xff]
  %v56 = vld [vmem:[%s1 + $0xd0] sm:$0xff]
  %v57 = vld [vmem:[%s1 + $0xd8] sm:$0xff]
  %v58 = vld [vmem:[%s1 + $0xe0] sm:$0xff]
  %v59 = vld [vmem:[%s1 + $0xe8] sm:$0xff]
  %v60 = vld [vmem:[%s1 + $0xf0] sm:$0xff]
  %v61 = vld [vmem:[%s1 + $0xf8] sm:$0xff]
  %v62 = vld [vmem:[%s1 + $0x100] sm:$0xff]
  %v63 = vld [vmem:[%s1 + $0x108] sm:$0xff]
  %v64 = vld [vmem:[%s1 + $0x110] sm:$0xff]
  %v65 = vld [vmem:[%s1 + $0x118] sm:$0xff]
  %v66 = vld [vmem:[%s1 + $0x120] sm:$0xff]
  %v67 = vld [vmem:[%s1 + $0x128] sm:$0xff]
  %v68 = vld [vmem:[%s1 + $0x130] sm:$0xff]
  %v69 = vld [vmem:[%s1 + $0x138] sm:$0xff]
  %v70 = vld [vmem:[%s1 + $0x140] sm:$0xff]
  %v71 = vld [vmem:[%s1 + $0x148] sm:$0xff]
  %v72 = vld [vmem:[%s1 + $0x150] sm:$0xff]
  %v73 = vld [vmem:[%s1 + $0x158] sm:$0xff]
  %v74 = vld [vmem:[%s1 + $0x160] sm:$0xff]
  %v75 = vld [vmem:[%s1 + $0x168] sm:$0xff]
  %v76 = vld [vmem:[%s1 + $0x170] sm:$0xff]
  %v77 = vld [vmem:[%s1 + $0x178] sm:$0xff]
  %v78 = vld [vmem:[%s1 + $0x180] sm:$0xff]
  %v79 = vld [vmem:[%s1 + $0x188] sm:$0xff]
  %v80 = vld [vmem:[%s1 + $0x190] sm:$0xff]
  %v81 = vld [vmem:[%s1 + $0x198] sm:$0xff]
  %v82 = vld [vmem:[%s1 + $0x1a0] sm:$0xff]
  %v83 = vld [vmem:[%s1 + $0x1a8] sm:$0xff]
  %v84 = vld [vmem:[%s1 + $0x1b0] sm:$0xff]
  %v85 = vld [vmem:[%s1 + $0x1b8] sm:$0xff]
  %v86 = vld [vmem:[%s1 + $0x1c0] sm:$0xff]
  %v87 = vld [vmem:[%s1 + $0x1c8] sm:$0xff]
  %v88 = vld [vmem:[%s1 + $0x1d0] sm:$0xff]
  %v89 = vld [vmem:[%s1 + $0x1d8] sm:$0xff]
  %v90 = vld [vmem:[%s1 + $0x1e0] sm:$0xff]
  %v91 = vld [vmem:[%s1 + $0x1e8] sm:$0xff]
  %v92 = vld [vmem:[%s1 + $0x1f0] sm:$0xff]
  %v93 = vld [vmem:[%s1 + $0x1f8] sm:$0xff]
  %v94 = vld [vmem:[%s1 + $0x200] sm:$0xff]
  %v95 = vld [vmem:[%s1 + $0x208] sm:$0xff]
  %v96 = vld [vmem:[%s1 + $0x210] sm:$0xff]
  %v97 = vld [vmem:[%s1 + $0x218] sm:$0xff]
  %v98 = vld [vmem:[%s1 + $0x220] sm:$0xff]
  %v99 = vld [vmem:[%s1 + $0x228] sm:$0xff]
  %v100 = vld [vmem:[%s1 + $0x230] sm:$0xff]
  %v101 = vld [vmem:[%s1 + $0x238] sm:$0xff]
  %v102 = vld [vmem:[%s1 + $0x240] sm:$0xff]
  %v103 = vld [vmem:[%s1 + $0x248] sm:$0xff]
  %v104 = vld [vmem:[%s1 + $0x250] sm:$0xff]
  %v105 = vld [vmem:[%s1 + $0x258] sm:$0xff]
  %v106 = vld [vmem:[%s1 + $0x260] sm:$0xff]
  %v107 = vld [vmem:[%s1 + $0x268] sm:$0xff]
  %v108 = vld [vmem:[%s1 + $0x270] sm:$0xff]
  %v109 = vld [vmem:[%s1 + $0x278] sm:$0xff]
  %v110 = vld [vmem:[%s1 + $0x280] sm:$0xff]
  %v111 = vld [vmem:[%s1 + $0x288] sm:$0xff]
  %v112 = vld [vmem:[%s1 + $0x290] sm:$0xff]
  %v113 = vld [vmem:[%s1 + $0x298] sm:$0xff]
  %v114 = vld [vmem:[%s1 + $0x2a0] sm:$0xff]
  %v115 = vld [vmem:[%s1 + $0x2a8] sm:$0xff]
  %v116 = vld [vmem:[%s1 + $0x2b0] sm:$0xff]
  %v117 = vld [vmem:[%s1 + $0x2b8] sm:$0xff]
  %v118 = vld [vmem:[%s1 + $0x2c0] sm:$0xff]
  %v119 = vld [vmem:[%s1 + $0x2c8] sm:$0xff]
  %v120 = vld [vmem:[%s1 + $0x2d0] sm:$0xff]
  %v121 = vld [vmem:[%s1 + $0x2d8] sm:$0xff]
  %v122 = vld [vmem:[%s1 + $0x2e0] sm:$0xff]
  %v123 = vld [vmem:[%s1 + $0x2e8] sm:$0xff]
  %v124 = vld [vmem:[%s1 + $0x2f0] sm:$0xff]
  %v125 = vld [vmem:[%s1 + $0x2f8] sm:$0xff]
  %v126 = vld [vmem:[%s1 + $0x300] sm:$0xff]
  %v127 = vld [vmem:[%s1 + $0x308] sm:$0xff]
  %v128 = vld [vmem:[%s1 + $0x310] sm:$0xff]
  %v129 = vld [vmem:[%s1 + $0x318] sm:$0xff]
  %v130 = vld [vmem:[%s1 + $0x320] sm:$0xff]
  %v131 = vld [vmem:[%s1 + $0x328] sm:$0xff]
  %v132 = vld [vmem:[%s1 + $0x330] sm:$0xff]
  %v133 = vld [vmem:[%s1 + $0x338] sm:$0xff]
  %v134 = vld [vmem:[%s1 + $0x340] sm:$0xff]
  %v135 = vld [vmem:[%s1 + $0x348] sm:$0xff]
  %v136 = vld [vmem:[%s1 + $0x350] sm:$0xff]
  %v137 = vld [vmem:[%s1 + $0x358] sm:$0xff]
  %v138 = vld [vmem:[%s1 + $0x360] sm:$0xff]
  %v139 = vld [vmem:[%s1 + $0x368] sm:$0xff]
  %v140 = vld [vmem:[%s1 + $0x370] sm:$0xff]
  %v141 = vld [vmem:[%s1 + $0x378] sm:$0xff]
  %v142 = vld [vmem:[%s1 + $0x380] sm:$0xff]
  %v143 = vld [vmem:[%s1 + $0x388] sm:$0xff]
  %v144 = vld [vmem:[%s1 + $0x390] sm:$0xff]
  %v145 = vld [vmem:[%s1 + $0x398] sm:$0xff]
  %v146 = vld [vmem:[%s1 + $0x3a0] sm:$0xff]
  %v147 = vld [vmem:[%s1 + $0x3a8] sm:$0xff]
  %v148 = vld [vmem:[%s1 + $0x3b0] sm:$0xff]
  %v149 = vld [vmem:[%s1 + $0x3b8] sm:$0xff]
  %v150 = vld [vmem:[%s1 + $0x3c0] sm:$0xff]
  %v151 = vld [vmem:[%s1 + $0x3c8] sm:$0xff]
  %v152 = vld [vmem:[%s1 + $0x3d0] sm:$0xff]
  %v153 = vld [vmem:[%s1 + $0x3d8] sm:$0xff]
  %v154 = vld [vmem:[%s1 + $0x3e0] sm:$0xff]
  %v155 = vld [vmem:[%s1 + $0x3e8] sm:$0xff]
  %v156 = vld [vmem:[%s1 + $0x3f0] sm:$0xff]
  %v157 = vld [vmem:[%s1 + $0x3f8] sm:$0xff]
  %v158 = vld [vmem:[%s1 + $0x400] sm:$0xff]
  %v159 = vld [vmem:[%s1 + $0x408] sm:$0xff]
  %v160 = vld [vmem:[%s1 + $0x410] sm:$0xff]
  %v161 = vld [vmem:[%s1 + $0x418] sm:$0xff]
  %v162 = vld [vmem:[%s1 + $0x420] sm:$0xff]
  %v163 = vld [vmem:[%s1 + $0x428] sm:$0xff]
  %v164 = vld [vmem:[%s1 + $0x430] sm:$0xff]
  %v165 = vld [vmem:[%s1 + $0x438] sm:$0xff]
  %v166 = vld [vmem:[%s1 + $0x440] sm:$0xff]
  %v167 = vld [vmem:[%s1 + $0x448] sm:$0xff]
  %v168 = vld [vmem:[%s1 + $0x450] sm:$0xff]
  %v169 = vld [vmem:[%s1 + $0x458] sm:$0xff]
  %v170 = vld [vmem:[%s1 + $0x460] sm:$0xff]
  %v171 = vld [vmem:[%s1 + $0x468] sm:$0xff]
  %v172 = vld [vmem:[%s1 + $0x470] sm:$0xff]
  %v173 = vld [vmem:[%s1 + $0x478] sm:$0xff]
  %v174 = vld [vmem:[%s1 + $0x480] sm:$0xff]
  %v175 = vld [vmem:[%s1 + $0x488] sm:$0xff]
  %v176 = vld [vmem:[%s1 + $0x490] sm:$0xff]
  %v177 = vld [vmem:[%s1 + $0x498] sm:$0xff]
  %v178 = vld [vmem:[%s1 + $0x4a0] sm:$0xff]
  %v179 = vld [vmem:[%s1 + $0x4a8] sm:$0xff]
  %v180 = vld [vmem:[%s1 + $0x4b0] sm:$0xff]
  %v181 = vld [vmem:[%s1 + $0x4b8] sm:$0xff]
  %v182 = vld [vmem:[%s1 + $0x4c0] sm:$0xff]
  %v183 = vld [vmem:[%s1 + $0x4c8] sm:$0xff]
  %v184 = vld [vmem:[%s1 + $0x4d0] sm:$0xff]
  %v185 = vld [vmem:[%s1 + $0x4d8] sm:$0xff]
  %v186 = vld [vmem:[%s1 + $0x4e0] sm:$0xff]
  %v187 = vld [vmem:[%s1 + $0x4e8] sm:$0xff]
  %v188 = vld [vmem:[%s1 + $0x4f0] sm:$0xff]
  %v189 = vld [vmem:[%s1 + $0x4f8] sm:$0xff]
  %v190 = vld [vmem:[%s1 + $0x500] sm:$0xff]
  %v191 = vld [vmem:[%s1 + $0x508] sm:$0xff]
  %v192 = vld [vmem:[%s1 + $0x510] sm:$0xff]
  %v193 = vld [vmem:[%s1 + $0x518] sm:$0xff]
  %v194 = vld [vmem:[%s1 + $0x520] sm:$0xff]
  %v195 = vld [vmem:[%s1 + $0x528] sm:$0xff]
  %v196 = vld [vmem:[%s1 + $0x530] sm:$0xff]
  %v197 = vld [vmem:[%s1 + $0x538] sm:$0xff]
  %v198 = vld [vmem:[%s1 + $0x540] sm:$0xff]
  %v199 = vld [vmem:[%s1 + $0x548] sm:$0xff]
  %v200 = vld [vmem:[%s1 + $0x550] sm:$0xff]
  %v201 = vld [vmem:[%s1 + $0x558] sm:$0xff]
  %v202 = vld [vmem:[%s1 + $0x560] sm:$0xff]
  %v203 = vld [vmem:[%s1 + $0x568] sm:$0xff]
  %v204 = vld [vmem:[%s1 + $0x570] sm:$0xff]
  %v205 = vld [vmem:[%s1 + $0x578] sm:$0xff]
  %v206 = vld [vmem:[%s1 + $0x580] sm:$0xff]
  %v207 = vld [vmem:[%s1 + $0x588] sm:$0xff]
  %v208 = vld [vmem:[%s1 + $0x590] sm:$0xff]
  %v209 = vld [vmem:[%s1 + $0x598] sm:$0xff]
  %v210 = vld [vmem:[%s1 + $0x5a0] sm:$0xff]
  %v211 = vld [vmem:[%s1 + $0x5a8] sm:$0xff]
  %v212 = vld [vmem:[%s1 + $0x5b0] sm:$0xff]
  %v213 = vld [vmem:[%s1 + $0x5b8] sm:$0xff]
  %v214 = vld [vmem:[%s1 + $0x5c0] sm:$0xff]
  %v215 = vld [vmem:[%s1 + $0x5c8] sm:$0xff]
  %v216 = vld [vmem:[%s1 + $0x5d0] sm:$0xff]
  %v217 = vld [vmem:[%s1 + $0x5d8] sm:$0xff]
  %v218 = vld [vmem:[%s1 + $0x5e0] sm:$0xff]
  %v219 = vld [vmem:[%s1 + $0x5e8] sm:$0xff]
  %v220 = vld [vmem:[%s1 + $0x5f0] sm:$0xff]
  %v221 = vld [vmem:[%s1 + $0x5f8] sm:$0xff]
  %v222 = vld [vmem:[%s1 + $0x600] sm:$0xff]
  %v223 = vld [vmem:[%s1 + $0x608] sm:$0xff]
  %v224 = vld [vmem:[%s1 + $0x610] sm:$0xff]
  %v225 = vld [vmem:[%s1 + $0x618] sm:$0xff]
  %v226 = vld [vmem:[%s1 + $0x620] sm:$0xff]
  %v227 = vld [vmem:[%s1 + $0x628] sm:$0xff]
  %v228 = vld [vmem:[%s1 + $0x630] sm:$0xff]
  %v229 = vld [vmem:[%s1 + $0x638] sm:$0xff]
  %v230 = vld [vmem:[%s1 + $0x640] sm:$0xff]
  %v231 = vld [vmem:[%s1 + $0x648] sm:$0xff]
  %v232 = vld [vmem:[%s1 + $0x650] sm:$0xff]
  %v233 = vld [vmem:[%s1 + $0x658] sm:$0xff]
  %v234 = vld [vmem:[%s1 + $0x660] sm:$0xff]
  %v235 = vld [vmem:[%s1 + $0x668] sm:$0xff]
  %v236 = vld [vmem:[%s1 + $0x670] sm:$0xff]
  %v237 = vld [vmem:[%s1 + $0x678] sm:$0xff]
  %v238 = vld [vmem:[%s1 + $0x680] sm:$0xff]
  %v239 = vld [vmem:[%s1 + $0x688] sm:$0xff]
  %v240 = vld [vmem:[%s1 + $0x690] sm:$0xff]
  %v241 = vld [vmem:[%s1 + $0x698] sm:$0xff]
  %v242 = vld [vmem:[%s1 + $0x6a0] sm:$0xff]
  %v243 = vld [vmem:[%s1 + $0x6a8] sm:$0xff]
  %v244 = vld [vmem:[%s1 + $0x6b0] sm:$0xff]
  %v245 = vld [vmem:[%s1 + $0x6b8] sm:$0xff]
  %v246 = vld [vmem:[%s1 + $0x6c0] sm:$0xff]
  %v247 = vld [vmem:[%s1 + $0x6c8] sm:$0xff]
  %v248 = vld [vmem:[%s1 + $0x6d0] sm:$0xff]
  %v249 = vld [vmem:[%s1 + $0x6d8] sm:$0xff]
  %v250 = vld [vmem:[%s1 + $0x6e0] sm:$0xff]
  %v251 = vld [vmem:[%s1 + $0x6e8] sm:$0xff]
  %v252 = vld [vmem:[%s1 + $0x6f0] sm:$0xff]
  %v253 = vld [vmem:[%s1 + $0x6f8] sm:$0xff]
  %v254 = vld [vmem:[%s1 + $0x700] sm:$0xff]
  %v255 = vld [vmem:[%s1 + $0x708] sm:$0xff]
  %v256 = vld [vmem:[%s1 + $0x710] sm:$0xff]
  %v257 = vld [vmem:[%s1 + $0x718] sm:$0xff]
  %v258 = vld [vmem:[%s1 + $0x720] sm:$0xff]
  %v259 = vld [vmem:[%s1 + $0x728] sm:$0xff]
  %v260 = vld [vmem:[%s1 + $0x730] sm:$0xff]
  %v261 = vld [vmem:[%s1 + $0x738] sm:$0xff]
  %v262 = vld [vmem:[%s1 + $0x740] sm:$0xff]
  %v263 = vld [vmem:[%s1 + $0x748] sm:$0xff]
  %v264 = vld [vmem:[%s1 + $0x750] sm:$0xff]
  %v265 = vld [vmem:[%s1 + $0x758] sm:$0xff]
  %v266 = vld [vmem:[%s1 + $0x760] sm:$0xff]
  %v267 = vld [vmem:[%s1 + $0x768] sm:$0xff]
  %v268 = vld [vmem:[%s1 + $0x770] sm:$0xff]
  %v269 = vld [vmem:[%s1 + $0x778] sm:$0xff]
  %v270 = vld [vmem:[%s1 + $0x780] sm:$0xff]
  %v271 = vld [vmem:[%s1 + $0x788] sm:$0xff]
  %v272 = vld [vmem:[%s1 + $0x790] sm:$0xff]
  %v273 = vld [vmem:[%s1 + $0x798] sm:$0xff]
  %v274 = vld [vmem:[%s1 + $0x7a0] sm:$0xff]
  %v275 = vld [vmem:[%s1 + $0x7a8] sm:$0xff]
  %v276 = vld [vmem:[%s1 + $0x7b0] sm:$0xff]
  %v277 = vld [vmem:[%s1 + $0x7b8] sm:$0xff]
  %v278 = vld [vmem:[%s1 + $0x7c0] sm:$0xff]
  %v279 = vld [vmem:[%s1 + $0x7c8] sm:$0xff]
  %v280 = vld [vmem:[%s1 + $0x7d0] sm:$0xff]
  %v281 = vld [vmem:[%s1 + $0x7d8] sm:$0xff]
  %v282 = vld [vmem:[%s1 + $0x7e0] sm:$0xff]
  %v283 = vld [vmem:[%s1 + $0x7e8] sm:$0xff]
  %v284 = vld [vmem:[%s1 + $0x7f0] sm:$0xff]
  %v285 = vld [vmem:[%s1 + $0x7f8] sm:$0xff]
  %v302 = vunpack.c.l.b16 %v14
  %v303 = vunpack.c.h.b16 %v14
  %v304 = vunpack.c.l.b16 %v15
  %v305 = vunpack.c.h.b16 %v15
  %v306 = vunpack.c.l.b16 %v16
  %v307 = vunpack.c.h.b16 %v16
  %v308 = vunpack.c.l.b16 %v17
  %v309 = vunpack.c.h.b16 %v17
  %v310 = vunpack.c.l.b16 %v18
  %v311 = vunpack.c.h.b16 %v18
  %v312 = vunpack.c.l.b16 %v19
  %v313 = vunpack.c.h.b16 %v19
  %v314 = vunpack.c.l.b16 %v20
  %v315 = vunpack.c.h.b16 %v20
  %v316 = vunpack.c.l.b16 %v21
  %v317 = vunpack.c.h.b16 %v21
  %v318 = vunpack.c.l.b16 %v22
  %v319 = vunpack.c.h.b16 %v22
  %v320 = vunpack.c.l.b16 %v23
  %v321 = vunpack.c.h.b16 %v23
  %v322 = vunpack.c.l.b16 %v24
  %v323 = vunpack.c.h.b16 %v24
  %v324 = vunpack.c.l.b16 %v25
  %v325 = vunpack.c.h.b16 %v25
  %v326 = vunpack.c.l.b16 %v26
  %v327 = vunpack.c.h.b16 %v26
  %v328 = vunpack.c.l.b16 %v27
  %v329 = vunpack.c.h.b16 %v27
  %v330 = vunpack.c.l.b16 %v28
  %v331 = vunpack.c.h.b16 %v28
  %v332 = vunpack.c.l.b16 %v29
  %v333 = vunpack.c.h.b16 %v29
  %v334 = vpack.c.b16 %v318, %v302
  %v335 = vpack.c.b16 %v319, %v303
  %v336 = vpack.c.b16 %v320, %v304
  %v337 = vpack.c.b16 %v321, %v305
  %v338 = vpack.c.b16 %v322, %v306
  %v339 = vpack.c.b16 %v323, %v307
  %v340 = vpack.c.b16 %v324, %v308
  %v341 = vpack.c.b16 %v325, %v309
  %v342 = vpack.c.b16 %v326, %v310
  %v343 = vpack.c.b16 %v327, %v311
  %v344 = vpack.c.b16 %v328, %v312
  %v345 = vpack.c.b16 %v329, %v313
  %v346 = vpack.c.b16 %v330, %v314
  %v347 = vpack.c.b16 %v331, %v315
  %v348 = vpack.c.b16 %v332, %v316
  %v349 = vpack.c.b16 %v333, %v317
  %v622 = vunpack.c.l.b16 %v30
  %v623 = vunpack.c.h.b16 %v30
  %v624 = vunpack.c.l.b16 %v31
  %v625 = vunpack.c.h.b16 %v31
  %v626 = vunpack.c.l.b16 %v32
  %v627 = vunpack.c.h.b16 %v32
  %v628 = vunpack.c.l.b16 %v33
  %v629 = vunpack.c.h.b16 %v33
  %v630 = vunpack.c.l.b16 %v34
  %v631 = vunpack.c.h.b16 %v34
  %v632 = vunpack.c.l.b16 %v35
  %v633 = vunpack.c.h.b16 %v35
  %v634 = vunpack.c.l.b16 %v36
  %v635 = vunpack.c.h.b16 %v36
  %v636 = vunpack.c.l.b16 %v37
  %v637 = vunpack.c.h.b16 %v37
  %v638 = vunpack.c.l.b16 %v38
  %v639 = vunpack.c.h.b16 %v38
  %v640 = vunpack.c.l.b16 %v39
  %v641 = vunpack.c.h.b16 %v39
  %v642 = vunpack.c.l.b16 %v40
  %v643 = vunpack.c.h.b16 %v40
  %v644 = vunpack.c.l.b16 %v41
  %v645 = vunpack.c.h.b16 %v41
  %v646 = vunpack.c.l.b16 %v42
  %v647 = vunpack.c.h.b16 %v42
  %v648 = vunpack.c.l.b16 %v43
  %v649 = vunpack.c.h.b16 %v43
  %v650 = vunpack.c.l.b16 %v44
  %v651 = vunpack.c.h.b16 %v44
  %v652 = vunpack.c.l.b16 %v45
  %v653 = vunpack.c.h.b16 %v45
  %v654 = vunpack.c.l.b16 %v46
  %v655 = vunpack.c.h.b16 %v46
  %v656 = vunpack.c.l.b16 %v47
  %v657 = vunpack.c.h.b16 %v47
  %v658 = vunpack.c.l.b16 %v48
  %v659 = vunpack.c.h.b16 %v48
  %v660 = vunpack.c.l.b16 %v49
  %v661 = vunpack.c.h.b16 %v49
  %v662 = vunpack.c.l.b16 %v50
  %v663 = vunpack.c.h.b16 %v50
  %v664 = vunpack.c.l.b16 %v51
  %v665 = vunpack.c.h.b16 %v51
  %v666 = vunpack.c.l.b16 %v52
  %v667 = vunpack.c.h.b16 %v52
  %v668 = vunpack.c.l.b16 %v53
  %v669 = vunpack.c.h.b16 %v53
  %v670 = vunpack.c.l.b16 %v54
  %v671 = vunpack.c.h.b16 %v54
  %v672 = vunpack.c.l.b16 %v55
  %v673 = vunpack.c.h.b16 %v55
  %v674 = vunpack.c.l.b16 %v56
  %v675 = vunpack.c.h.b16 %v56
  %v676 = vunpack.c.l.b16 %v57
  %v677 = vunpack.c.h.b16 %v57
  %v678 = vunpack.c.l.b16 %v58
  %v679 = vunpack.c.h.b16 %v58
  %v680 = vunpack.c.l.b16 %v59
  %v681 = vunpack.c.h.b16 %v59
  %v682 = vunpack.c.l.b16 %v60
  %v683 = vunpack.c.h.b16 %v60
  %v684 = vunpack.c.l.b16 %v61
  %v685 = vunpack.c.h.b16 %v61
  %v686 = vunpack.c.l.b16 %v62
  %v687 = vunpack.c.h.b16 %v62
  %v688 = vunpack.c.l.b16 %v63
  %v689 = vunpack.c.h.b16 %v63
  %v690 = vunpack.c.l.b16 %v64
  %v691 = vunpack.c.h.b16 %v64
  %v692 = vunpack.c.l.b16 %v65
  %v693 = vunpack.c.h.b16 %v65
  %v694 = vunpack.c.l.b16 %v66
  %v695 = vunpack.c.h.b16 %v66
  %v696 = vunpack.c.l.b16 %v67
  %v697 = vunpack.c.h.b16 %v67
  %v698 = vunpack.c.l.b16 %v68
  %v699 = vunpack.c.h.b16 %v68
  %v700 = vunpack.c.l.b16 %v69
  %v701 = vunpack.c.h.b16 %v69
  %v702 = vunpack.c.l.b16 %v70
  %v703 = vunpack.c.h.b16 %v70
  %v704 = vunpack.c.l.b16 %v71
  %v705 = vunpack.c.h.b16 %v71
  %v706 = vunpack.c.l.b16 %v72
  %v707 = vunpack.c.h.b16 %v72
  %v708 = vunpack.c.l.b16 %v73
  %v709 = vunpack.c.h.b16 %v73
  %v710 = vunpack.c.l.b16 %v74
  %v711 = vunpack.c.h.b16 %v74
  %v712 = vunpack.c.l.b16 %v75
  %v713 = vunpack.c.h.b16 %v75
  %v714 = vunpack.c.l.b16 %v76
  %v715 = vunpack.c.h.b16 %v76
  %v716 = vunpack.c.l.b16 %v77
  %v717 = vunpack.c.h.b16 %v77
  %v718 = vunpack.c.l.b16 %v78
  %v719 = vunpack.c.h.b16 %v78
  %v720 = vunpack.c.l.b16 %v79
  %v721 = vunpack.c.h.b16 %v79
  %v722 = vunpack.c.l.b16 %v80
  %v723 = vunpack.c.h.b16 %v80
  %v724 = vunpack.c.l.b16 %v81
  %v725 = vunpack.c.h.b16 %v81
  %v726 = vunpack.c.l.b16 %v82
  %v727 = vunpack.c.h.b16 %v82
  %v728 = vunpack.c.l.b16 %v83
  %v729 = vunpack.c.h.b16 %v83
  %v730 = vunpack.c.l.b16 %v84
  %v731 = vunpack.c.h.b16 %v84
  %v732 = vunpack.c.l.b16 %v85
  %v733 = vunpack.c.h.b16 %v85
  %v734 = vunpack.c.l.b16 %v86
  %v735 = vunpack.c.h.b16 %v86
  %v736 = vunpack.c.l.b16 %v87
  %v737 = vunpack.c.h.b16 %v87
  %v738 = vunpack.c.l.b16 %v88
  %v739 = vunpack.c.h.b16 %v88
  %v740 = vunpack.c.l.b16 %v89
  %v741 = vunpack.c.h.b16 %v89
  %v742 = vunpack.c.l.b16 %v90
  %v743 = vunpack.c.h.b16 %v90
  %v744 = vunpack.c.l.b16 %v91
  %v745 = vunpack.c.h.b16 %v91
  %v746 = vunpack.c.l.b16 %v92
  %v747 = vunpack.c.h.b16 %v92
  %v748 = vunpack.c.l.b16 %v93
  %v749 = vunpack.c.h.b16 %v93
  %v750 = vunpack.c.l.b16 %v94
  %v751 = vunpack.c.h.b16 %v94
  %v752 = vunpack.c.l.b16 %v95
  %v753 = vunpack.c.h.b16 %v95
  %v754 = vunpack.c.l.b16 %v96
  %v755 = vunpack.c.h.b16 %v96
  %v756 = vunpack.c.l.b16 %v97
  %v757 = vunpack.c.h.b16 %v97
  %v758 = vunpack.c.l.b16 %v98
  %v759 = vunpack.c.h.b16 %v98
  %v760 = vunpack.c.l.b16 %v99
  %v761 = vunpack.c.h.b16 %v99
  %v762 = vunpack.c.l.b16 %v100
  %v763 = vunpack.c.h.b16 %v100
  %v764 = vunpack.c.l.b16 %v101
  %v765 = vunpack.c.h.b16 %v101
  %v766 = vunpack.c.l.b16 %v102
  %v767 = vunpack.c.h.b16 %v102
  %v768 = vunpack.c.l.b16 %v103
  %v769 = vunpack.c.h.b16 %v103
  %v770 = vunpack.c.l.b16 %v104
  %v771 = vunpack.c.h.b16 %v104
  %v772 = vunpack.c.l.b16 %v105
  %v773 = vunpack.c.h.b16 %v105
  %v774 = vunpack.c.l.b16 %v106
  %v775 = vunpack.c.h.b16 %v106
  %v776 = vunpack.c.l.b16 %v107
  %v777 = vunpack.c.h.b16 %v107
  %v778 = vunpack.c.l.b16 %v108
  %v779 = vunpack.c.h.b16 %v108
  %v780 = vunpack.c.l.b16 %v109
  %v781 = vunpack.c.h.b16 %v109
  %v782 = vunpack.c.l.b16 %v110
  %v783 = vunpack.c.h.b16 %v110
  %v784 = vunpack.c.l.b16 %v111
  %v785 = vunpack.c.h.b16 %v111
  %v786 = vunpack.c.l.b16 %v112
  %v787 = vunpack.c.h.b16 %v112
  %v788 = vunpack.c.l.b16 %v113
  %v789 = vunpack.c.h.b16 %v113
  %v790 = vunpack.c.l.b16 %v114
  %v791 = vunpack.c.h.b16 %v114
  %v792 = vunpack.c.l.b16 %v115
  %v793 = vunpack.c.h.b16 %v115
  %v794 = vunpack.c.l.b16 %v116
  %v795 = vunpack.c.h.b16 %v116
  %v796 = vunpack.c.l.b16 %v117
  %v797 = vunpack.c.h.b16 %v117
  %v798 = vunpack.c.l.b16 %v118
  %v799 = vunpack.c.h.b16 %v118
  %v800 = vunpack.c.l.b16 %v119
  %v801 = vunpack.c.h.b16 %v119
  %v802 = vunpack.c.l.b16 %v120
  %v803 = vunpack.c.h.b16 %v120
  %v804 = vunpack.c.l.b16 %v121
  %v805 = vunpack.c.h.b16 %v121
  %v806 = vunpack.c.l.b16 %v122
  %v807 = vunpack.c.h.b16 %v122
  %v808 = vunpack.c.l.b16 %v123
  %v809 = vunpack.c.h.b16 %v123
  %v810 = vunpack.c.l.b16 %v124
  %v811 = vunpack.c.h.b16 %v124
  %v812 = vunpack.c.l.b16 %v125
  %v813 = vunpack.c.h.b16 %v125
  %v814 = vunpack.c.l.b16 %v126
  %v815 = vunpack.c.h.b16 %v126
  %v816 = vunpack.c.l.b16 %v127
  %v817 = vunpack.c.h.b16 %v127
  %v818 = vunpack.c.l.b16 %v128
  %v819 = vunpack.c.h.b16 %v128
  %v820 = vunpack.c.l.b16 %v129
  %v821 = vunpack.c.h.b16 %v129
  %v822 = vunpack.c.l.b16 %v130
  %v823 = vunpack.c.h.b16 %v130
  %v824 = vunpack.c.l.b16 %v131
  %v825 = vunpack.c.h.b16 %v131
  %v826 = vunpack.c.l.b16 %v132
  %v827 = vunpack.c.h.b16 %v132
  %v828 = vunpack.c.l.b16 %v133
  %v829 = vunpack.c.h.b16 %v133
  %v830 = vunpack.c.l.b16 %v134
  %v831 = vunpack.c.h.b16 %v134
  %v832 = vunpack.c.l.b16 %v135
  %v833 = vunpack.c.h.b16 %v135
  %v834 = vunpack.c.l.b16 %v136
  %v835 = vunpack.c.h.b16 %v136
  %v836 = vunpack.c.l.b16 %v137
  %v837 = vunpack.c.h.b16 %v137
  %v838 = vunpack.c.l.b16 %v138
  %v839 = vunpack.c.h.b16 %v138
  %v840 = vunpack.c.l.b16 %v139
  %v841 = vunpack.c.h.b16 %v139
  %v842 = vunpack.c.l.b16 %v140
  %v843 = vunpack.c.h.b16 %v140
  %v844 = vunpack.c.l.b16 %v141
  %v845 = vunpack.c.h.b16 %v141
  %v846 = vunpack.c.l.b16 %v142
  %v847 = vunpack.c.h.b16 %v142
  %v848 = vunpack.c.l.b16 %v143
  %v849 = vunpack.c.h.b16 %v143
  %v850 = vunpack.c.l.b16 %v144
  %v851 = vunpack.c.h.b16 %v144
  %v852 = vunpack.c.l.b16 %v145
  %v853 = vunpack.c.h.b16 %v145
  %v854 = vunpack.c.l.b16 %v146
  %v855 = vunpack.c.h.b16 %v146
  %v856 = vunpack.c.l.b16 %v147
  %v857 = vunpack.c.h.b16 %v147
  %v858 = vunpack.c.l.b16 %v148
  %v859 = vunpack.c.h.b16 %v148
  %v860 = vunpack.c.l.b16 %v149
  %v861 = vunpack.c.h.b16 %v149
  %v862 = vunpack.c.l.b16 %v150
  %v863 = vunpack.c.h.b16 %v150
  %v864 = vunpack.c.l.b16 %v151
  %v865 = vunpack.c.h.b16 %v151
  %v866 = vunpack.c.l.b16 %v152
  %v867 = vunpack.c.h.b16 %v152
  %v868 = vunpack.c.l.b16 %v153
  %v869 = vunpack.c.h.b16 %v153
  %v870 = vunpack.c.l.b16 %v154
  %v871 = vunpack.c.h.b16 %v154
  %v872 = vunpack.c.l.b16 %v155
  %v873 = vunpack.c.h.b16 %v155
  %v874 = vunpack.c.l.b16 %v156
  %v875 = vunpack.c.h.b16 %v156
  %v876 = vunpack.c.l.b16 %v157
  %v877 = vunpack.c.h.b16 %v157
  %v878 = vunpack.c.l.b16 %v158
  %v879 = vunpack.c.h.b16 %v158
  %v880 = vunpack.c.l.b16 %v159
  %v881 = vunpack.c.h.b16 %v159
  %v882 = vunpack.c.l.b16 %v160
  %v883 = vunpack.c.h.b16 %v160
  %v884 = vunpack.c.l.b16 %v161
  %v885 = vunpack.c.h.b16 %v161
  %v886 = vunpack.c.l.b16 %v162
  %v887 = vunpack.c.h.b16 %v162
  %v888 = vunpack.c.l.b16 %v163
  %v889 = vunpack.c.h.b16 %v163
  %v890 = vunpack.c.l.b16 %v164
  %v891 = vunpack.c.h.b16 %v164
  %v892 = vunpack.c.l.b16 %v165
  %v893 = vunpack.c.h.b16 %v165
  %v894 = vunpack.c.l.b16 %v166
  %v895 = vunpack.c.h.b16 %v166
  %v896 = vunpack.c.l.b16 %v167
  %v897 = vunpack.c.h.b16 %v167
  %v898 = vunpack.c.l.b16 %v168
  %v899 = vunpack.c.h.b16 %v168
  %v900 = vunpack.c.l.b16 %v169
  %v901 = vunpack.c.h.b16 %v169
  %v902 = vunpack.c.l.b16 %v170
  %v903 = vunpack.c.h.b16 %v170
  %v904 = vunpack.c.l.b16 %v171
  %v905 = vunpack.c.h.b16 %v171
  %v906 = vunpack.c.l.b16 %v172
  %v907 = vunpack.c.h.b16 %v172
  %v908 = vunpack.c.l.b16 %v173
  %v909 = vunpack.c.h.b16 %v173
  %v910 = vunpack.c.l.b16 %v174
  %v911 = vunpack.c.h.b16 %v174
  %v912 = vunpack.c.l.b16 %v175
  %v913 = vunpack.c.h.b16 %v175
  %v914 = vunpack.c.l.b16 %v176
  %v915 = vunpack.c.h.b16 %v176
  %v916 = vunpack.c.l.b16 %v177
  %v917 = vunpack.c.h.b16 %v177
  %v918 = vunpack.c.l.b16 %v178
  %v919 = vunpack.c.h.b16 %v178
  %v920 = vunpack.c.l.b16 %v179
  %v921 = vunpack.c.h.b16 %v179
  %v922 = vunpack.c.l.b16 %v180
  %v923 = vunpack.c.h.b16 %v180
  %v924 = vunpack.c.l.b16 %v181
  %v925 = vunpack.c.h.b16 %v181
  %v926 = vunpack.c.l.b16 %v182
  %v927 = vunpack.c.h.b16 %v182
  %v928 = vunpack.c.l.b16 %v183
  %v929 = vunpack.c.h.b16 %v183
  %v930 = vunpack.c.l.b16 %v184
  %v931 = vunpack.c.h.b16 %v184
  %v932 = vunpack.c.l.b16 %v185
  %v933 = vunpack.c.h.b16 %v185
  %v934 = vunpack.c.l.b16 %v186
  %v935 = vunpack.c.h.b16 %v186
  %v936 = vunpack.c.l.b16 %v187
  %v937 = vunpack.c.h.b16 %v187
  %v938 = vunpack.c.l.b16 %v188
  %v939 = vunpack.c.h.b16 %v188
  %v940 = vunpack.c.l.b16 %v189
  %v941 = vunpack.c.h.b16 %v189
  %v942 = vunpack.c.l.b16 %v190
  %v943 = vunpack.c.h.b16 %v190
  %v944 = vunpack.c.l.b16 %v191
  %v945 = vunpack.c.h.b16 %v191
  %v946 = vunpack.c.l.b16 %v192
  %v947 = vunpack.c.h.b16 %v192
  %v948 = vunpack.c.l.b16 %v193
  %v949 = vunpack.c.h.b16 %v193
  %v950 = vunpack.c.l.b16 %v194
  %v951 = vunpack.c.h.b16 %v194
  %v952 = vunpack.c.l.b16 %v195
  %v953 = vunpack.c.h.b16 %v195
  %v954 = vunpack.c.l.b16 %v196
  %v955 = vunpack.c.h.b16 %v196
  %v956 = vunpack.c.l.b16 %v197
  %v957 = vunpack.c.h.b16 %v197
  %v958 = vunpack.c.l.b16 %v198
  %v959 = vunpack.c.h.b16 %v198
  %v960 = vunpack.c.l.b16 %v199
  %v961 = vunpack.c.h.b16 %v199
  %v962 = vunpack.c.l.b16 %v200
  %v963 = vunpack.c.h.b16 %v200
  %v964 = vunpack.c.l.b16 %v201
  %v965 = vunpack.c.h.b16 %v201
  %v966 = vunpack.c.l.b16 %v202
  %v967 = vunpack.c.h.b16 %v202
  %v968 = vunpack.c.l.b16 %v203
  %v969 = vunpack.c.h.b16 %v203
  %v970 = vunpack.c.l.b16 %v204
  %v971 = vunpack.c.h.b16 %v204
  %v972 = vunpack.c.l.b16 %v205
  %v973 = vunpack.c.h.b16 %v205
  %v974 = vunpack.c.l.b16 %v206
  %v975 = vunpack.c.h.b16 %v206
  %v976 = vunpack.c.l.b16 %v207
  %v977 = vunpack.c.h.b16 %v207
  %v978 = vunpack.c.l.b16 %v208
  %v979 = vunpack.c.h.b16 %v208
  %v980 = vunpack.c.l.b16 %v209
  %v981 = vunpack.c.h.b16 %v209
  %v982 = vunpack.c.l.b16 %v210
  %v983 = vunpack.c.h.b16 %v210
  %v984 = vunpack.c.l.b16 %v211
  %v985 = vunpack.c.h.b16 %v211
  %v986 = vunpack.c.l.b16 %v212
  %v987 = vunpack.c.h.b16 %v212
  %v988 = vunpack.c.l.b16 %v213
  %v989 = vunpack.c.h.b16 %v213
  %v990 = vunpack.c.l.b16 %v214
  %v991 = vunpack.c.h.b16 %v214
  %v992 = vunpack.c.l.b16 %v215
  %v993 = vunpack.c.h.b16 %v215
  %v994 = vunpack.c.l.b16 %v216
  %v995 = vunpack.c.h.b16 %v216
  %v996 = vunpack.c.l.b16 %v217
  %v997 = vunpack.c.h.b16 %v217
  %v998 = vunpack.c.l.b16 %v218
  %v999 = vunpack.c.h.b16 %v218
  %v1000 = vunpack.c.l.b16 %v219
  %v1001 = vunpack.c.h.b16 %v219
  %v1002 = vunpack.c.l.b16 %v220
  %v1003 = vunpack.c.h.b16 %v220
  %v1004 = vunpack.c.l.b16 %v221
  %v1005 = vunpack.c.h.b16 %v221
  %v1006 = vunpack.c.l.b16 %v222
  %v1007 = vunpack.c.h.b16 %v222
  %v1008 = vunpack.c.l.b16 %v223
  %v1009 = vunpack.c.h.b16 %v223
  %v1010 = vunpack.c.l.b16 %v224
  %v1011 = vunpack.c.h.b16 %v224
  %v1012 = vunpack.c.l.b16 %v225
  %v1013 = vunpack.c.h.b16 %v225
  %v1014 = vunpack.c.l.b16 %v226
  %v1015 = vunpack.c.h.b16 %v226
  %v1016 = vunpack.c.l.b16 %v227
  %v1017 = vunpack.c.h.b16 %v227
  %v1018 = vunpack.c.l.b16 %v228
  %v1019 = vunpack.c.h.b16 %v228
  %v1020 = vunpack.c.l.b16 %v229
  %v1021 = vunpack.c.h.b16 %v229
  %v1022 = vunpack.c.l.b16 %v230
  %v1023 = vunpack.c.h.b16 %v230
  %v1024 = vunpack.c.l.b16 %v231
  %v1025 = vunpack.c.h.b16 %v231
  %v1026 = vunpack.c.l.b16 %v232
  %v1027 = vunpack.c.h.b16 %v232
  %v1028 = vunpack.c.l.b16 %v233
  %v1029 = vunpack.c.h.b16 %v233
  %v1030 = vunpack.c.l.b16 %v234
  %v1031 = vunpack.c.h.b16 %v234
  %v1032 = vunpack.c.l.b16 %v235
  %v1033 = vunpack.c.h.b16 %v235
  %v1034 = vunpack.c.l.b16 %v236
  %v1035 = vunpack.c.h.b16 %v236
  %v1036 = vunpack.c.l.b16 %v237
  %v1037 = vunpack.c.h.b16 %v237
  %v1038 = vunpack.c.l.b16 %v238
  %v1039 = vunpack.c.h.b16 %v238
  %v1040 = vunpack.c.l.b16 %v239
  %v1041 = vunpack.c.h.b16 %v239
  %v1042 = vunpack.c.l.b16 %v240
  %v1043 = vunpack.c.h.b16 %v240
  %v1044 = vunpack.c.l.b16 %v241
  %v1045 = vunpack.c.h.b16 %v241
  %v1046 = vunpack.c.l.b16 %v242
  %v1047 = vunpack.c.h.b16 %v242
  %v1048 = vunpack.c.l.b16 %v243
  %v1049 = vunpack.c.h.b16 %v243
  %v1050 = vunpack.c.l.b16 %v244
  %v1051 = vunpack.c.h.b16 %v244
  %v1052 = vunpack.c.l.b16 %v245
  %v1053 = vunpack.c.h.b16 %v245
  %v1054 = vunpack.c.l.b16 %v246
  %v1055 = vunpack.c.h.b16 %v246
  %v1056 = vunpack.c.l.b16 %v247
  %v1057 = vunpack.c.h.b16 %v247
  %v1058 = vunpack.c.l.b16 %v248
  %v1059 = vunpack.c.h.b16 %v248
  %v1060 = vunpack.c.l.b16 %v249
  %v1061 = vunpack.c.h.b16 %v249
  %v1062 = vunpack.c.l.b16 %v250
  %v1063 = vunpack.c.h.b16 %v250
  %v1064 = vunpack.c.l.b16 %v251
  %v1065 = vunpack.c.h.b16 %v251
  %v1066 = vunpack.c.l.b16 %v252
  %v1067 = vunpack.c.h.b16 %v252
  %v1068 = vunpack.c.l.b16 %v253
  %v1069 = vunpack.c.h.b16 %v253
  %v1070 = vunpack.c.l.b16 %v254
  %v1071 = vunpack.c.h.b16 %v254
  %v1072 = vunpack.c.l.b16 %v255
  %v1073 = vunpack.c.h.b16 %v255
  %v1074 = vunpack.c.l.b16 %v256
  %v1075 = vunpack.c.h.b16 %v256
  %v1076 = vunpack.c.l.b16 %v257
  %v1077 = vunpack.c.h.b16 %v257
  %v1078 = vunpack.c.l.b16 %v258
  %v1079 = vunpack.c.h.b16 %v258
  %v1080 = vunpack.c.l.b16 %v259
  %v1081 = vunpack.c.h.b16 %v259
  %v1082 = vunpack.c.l.b16 %v260
  %v1083 = vunpack.c.h.b16 %v260
  %v1084 = vunpack.c.l.b16 %v261
  %v1085 = vunpack.c.h.b16 %v261
  %v1086 = vunpack.c.l.b16 %v262
  %v1087 = vunpack.c.h.b16 %v262
  %v1088 = vunpack.c.l.b16 %v263
  %v1089 = vunpack.c.h.b16 %v263
  %v1090 = vunpack.c.l.b16 %v264
  %v1091 = vunpack.c.h.b16 %v264
  %v1092 = vunpack.c.l.b16 %v265
  %v1093 = vunpack.c.h.b16 %v265
  %v1094 = vunpack.c.l.b16 %v266
  %v1095 = vunpack.c.h.b16 %v266
  %v1096 = vunpack.c.l.b16 %v267
  %v1097 = vunpack.c.h.b16 %v267
  %v1098 = vunpack.c.l.b16 %v268
  %v1099 = vunpack.c.h.b16 %v268
  %v1100 = vunpack.c.l.b16 %v269
  %v1101 = vunpack.c.h.b16 %v269
  %v1102 = vunpack.c.l.b16 %v270
  %v1103 = vunpack.c.h.b16 %v270
  %v1104 = vunpack.c.l.b16 %v271
  %v1105 = vunpack.c.h.b16 %v271
  %v1106 = vunpack.c.l.b16 %v272
  %v1107 = vunpack.c.h.b16 %v272
  %v1108 = vunpack.c.l.b16 %v273
  %v1109 = vunpack.c.h.b16 %v273
  %v1110 = vunpack.c.l.b16 %v274
  %v1111 = vunpack.c.h.b16 %v274
  %v1112 = vunpack.c.l.b16 %v275
  %v1113 = vunpack.c.h.b16 %v275
  %v1114 = vunpack.c.l.b16 %v276
  %v1115 = vunpack.c.h.b16 %v276
  %v1116 = vunpack.c.l.b16 %v277
  %v1117 = vunpack.c.h.b16 %v277
  %v1118 = vunpack.c.l.b16 %v278
  %v1119 = vunpack.c.h.b16 %v278
  %v1120 = vunpack.c.l.b16 %v279
  %v1121 = vunpack.c.h.b16 %v279
  %v1122 = vunpack.c.l.b16 %v280
  %v1123 = vunpack.c.h.b16 %v280
  %v1124 = vunpack.c.l.b16 %v281
  %v1125 = vunpack.c.h.b16 %v281
  %v1126 = vunpack.c.l.b16 %v282
  %v1127 = vunpack.c.h.b16 %v282
  %v1128 = vunpack.c.l.b16 %v283
  %v1129 = vunpack.c.h.b16 %v283
  %v1130 = vunpack.c.l.b16 %v284
  %v1131 = vunpack.c.h.b16 %v284
  %v1132 = vunpack.c.l.b16 %v285
  %v1133 = vunpack.c.h.b16 %v285
  %v1134 = vpack.c.b16 %v624, %v622
  %v1135 = vpack.c.b16 %v625, %v623
  %v1136 = vpack.c.b16 %v628, %v626
  %v1137 = vpack.c.b16 %v629, %v627
  %v1138 = vpack.c.b16 %v632, %v630
  %v1139 = vpack.c.b16 %v633, %v631
  %v1140 = vpack.c.b16 %v636, %v634
  %v1141 = vpack.c.b16 %v637, %v635
  %v1142 = vpack.c.b16 %v640, %v638
  %v1143 = vpack.c.b16 %v641, %v639
  %v1144 = vpack.c.b16 %v644, %v642
  %v1145 = vpack.c.b16 %v645, %v643
  %v1146 = vpack.c.b16 %v648, %v646
  %v1147 = vpack.c.b16 %v649, %v647
  %v1148 = vpack.c.b16 %v652, %v650
  %v1149 = vpack.c.b16 %v653, %v651
  %v1150 = vpack.c.b16 %v656, %v654
  %v1151 = vpack.c.b16 %v657, %v655
  %v1152 = vpack.c.b16 %v660, %v658
  %v1153 = vpack.c.b16 %v661, %v659
  %v1154 = vpack.c.b16 %v664, %v662
  %v1155 = vpack.c.b16 %v665, %v663
  %v1156 = vpack.c.b16 %v668, %v666
  %v1157 = vpack.c.b16 %v669, %v667
  %v1158 = vpack.c.b16 %v672, %v670
  %v1159 = vpack.c.b16 %v673, %v671
  %v1160 = vpack.c.b16 %v676, %v674
  %v1161 = vpack.c.b16 %v677, %v675
  %v1162 = vpack.c.b16 %v680, %v678
  %v1163 = vpack.c.b16 %v681, %v679
  %v1164 = vpack.c.b16 %v684, %v682
  %v1165 = vpack.c.b16 %v685, %v683
  %v1166 = vpack.c.b16 %v688, %v686
  %v1167 = vpack.c.b16 %v689, %v687
  %v1168 = vpack.c.b16 %v692, %v690
  %v1169 = vpack.c.b16 %v693, %v691
  %v1170 = vpack.c.b16 %v696, %v694
  %v1171 = vpack.c.b16 %v697, %v695
  %v1172 = vpack.c.b16 %v700, %v698
  %v1173 = vpack.c.b16 %v701, %v699
  %v1174 = vpack.c.b16 %v704, %v702
  %v1175 = vpack.c.b16 %v705, %v703
  %v1176 = vpack.c.b16 %v708, %v706
  %v1177 = vpack.c.b16 %v709, %v707
  %v1178 = vpack.c.b16 %v712, %v710
  %v1179 = vpack.c.b16 %v713, %v711
  %v1180 = vpack.c.b16 %v716, %v714
  %v1181 = vpack.c.b16 %v717, %v715
  %v1182 = vpack.c.b16 %v720, %v718
  %v1183 = vpack.c.b16 %v721, %v719
  %v1184 = vpack.c.b16 %v724, %v722
  %v1185 = vpack.c.b16 %v725, %v723
  %v1186 = vpack.c.b16 %v728, %v726
  %v1187 = vpack.c.b16 %v729, %v727
  %v1188 = vpack.c.b16 %v732, %v730
  %v1189 = vpack.c.b16 %v733, %v731
  %v1190 = vpack.c.b16 %v736, %v734
  %v1191 = vpack.c.b16 %v737, %v735
  %v1192 = vpack.c.b16 %v740, %v738
  %v1193 = vpack.c.b16 %v741, %v739
  %v1194 = vpack.c.b16 %v744, %v742
  %v1195 = vpack.c.b16 %v745, %v743
  %v1196 = vpack.c.b16 %v748, %v746
  %v1197 = vpack.c.b16 %v749, %v747
  %v1198 = vpack.c.b16 %v752, %v750
  %v1199 = vpack.c.b16 %v753, %v751
  %v1200 = vpack.c.b16 %v756, %v754
  %v1201 = vpack.c.b16 %v757, %v755
  %v1202 = vpack.c.b16 %v760, %v758
  %v1203 = vpack.c.b16 %v761, %v759
  %v1204 = vpack.c.b16 %v764, %v762
  %v1205 = vpack.c.b16 %v765, %v763
  %v1206 = vpack.c.b16 %v768, %v766
  %v1207 = vpack.c.b16 %v769, %v767
  %v1208 = vpack.c.b16 %v772, %v770
  %v1209 = vpack.c.b16 %v773, %v771
  %v1210 = vpack.c.b16 %v776, %v774
  %v1211 = vpack.c.b16 %v777, %v775
  %v1212 = vpack.c.b16 %v780, %v778
  %v1213 = vpack.c.b16 %v781, %v779
  %v1214 = vpack.c.b16 %v784, %v782
  %v1215 = vpack.c.b16 %v785, %v783
  %v1216 = vpack.c.b16 %v788, %v786
  %v1217 = vpack.c.b16 %v789, %v787
  %v1218 = vpack.c.b16 %v792, %v790
  %v1219 = vpack.c.b16 %v793, %v791
  %v1220 = vpack.c.b16 %v796, %v794
  %v1221 = vpack.c.b16 %v797, %v795
  %v1222 = vpack.c.b16 %v800, %v798
  %v1223 = vpack.c.b16 %v801, %v799
  %v1224 = vpack.c.b16 %v804, %v802
  %v1225 = vpack.c.b16 %v805, %v803
  %v1226 = vpack.c.b16 %v808, %v806
  %v1227 = vpack.c.b16 %v809, %v807
  %v1228 = vpack.c.b16 %v812, %v810
  %v1229 = vpack.c.b16 %v813, %v811
  %v1230 = vpack.c.b16 %v816, %v814
  %v1231 = vpack.c.b16 %v817, %v815
  %v1232 = vpack.c.b16 %v820, %v818
  %v1233 = vpack.c.b16 %v821, %v819
  %v1234 = vpack.c.b16 %v824, %v822
  %v1235 = vpack.c.b16 %v825, %v823
  %v1236 = vpack.c.b16 %v828, %v826
  %v1237 = vpack.c.b16 %v829, %v827
  %v1238 = vpack.c.b16 %v832, %v830
  %v1239 = vpack.c.b16 %v833, %v831
  %v1240 = vpack.c.b16 %v836, %v834
  %v1241 = vpack.c.b16 %v837, %v835
  %v1242 = vpack.c.b16 %v840, %v838
  %v1243 = vpack.c.b16 %v841, %v839
  %v1244 = vpack.c.b16 %v844, %v842
  %v1245 = vpack.c.b16 %v845, %v843
  %v1246 = vpack.c.b16 %v848, %v846
  %v1247 = vpack.c.b16 %v849, %v847
  %v1248 = vpack.c.b16 %v852, %v850
  %v1249 = vpack.c.b16 %v853, %v851
  %v1250 = vpack.c.b16 %v856, %v854
  %v1251 = vpack.c.b16 %v857, %v855
  %v1252 = vpack.c.b16 %v860, %v858
  %v1253 = vpack.c.b16 %v861, %v859
  %v1254 = vpack.c.b16 %v864, %v862
  %v1255 = vpack.c.b16 %v865, %v863
  %v1256 = vpack.c.b16 %v868, %v866
  %v1257 = vpack.c.b16 %v869, %v867
  %v1258 = vpack.c.b16 %v872, %v870
  %v1259 = vpack.c.b16 %v873, %v871
  %v1260 = vpack.c.b16 %v876, %v874
  %v1261 = vpack.c.b16 %v877, %v875
  %v1262 = vpack.c.b16 %v880, %v878
  %v1263 = vpack.c.b16 %v881, %v879
  %v1264 = vpack.c.b16 %v884, %v882
  %v1265 = vpack.c.b16 %v885, %v883
  %v1266 = vpack.c.b16 %v888, %v886
  %v1267 = vpack.c.b16 %v889, %v887
  %v1268 = vpack.c.b16 %v892, %v890
  %v1269 = vpack.c.b16 %v893, %v891
  %v1270 = vpack.c.b16 %v896, %v894
  %v1271 = vpack.c.b16 %v897, %v895
  %v1272 = vpack.c.b16 %v900, %v898
  %v1273 = vpack.c.b16 %v901, %v899
  %v1274 = vpack.c.b16 %v904, %v902
  %v1275 = vpack.c.b16 %v905, %v903
  %v1276 = vpack.c.b16 %v908, %v906
  %v1277 = vpack.c.b16 %v909, %v907
  %v1278 = vpack.c.b16 %v912, %v910
  %v1279 = vpack.c.b16 %v913, %v911
  %v1280 = vpack.c.b16 %v916, %v914
  %v1281 = vpack.c.b16 %v917, %v915
  %v1282 = vpack.c.b16 %v920, %v918
  %v1283 = vpack.c.b16 %v921, %v919
  %v1284 = vpack.c.b16 %v924, %v922
  %v1285 = vpack.c.b16 %v925, %v923
  %v1286 = vpack.c.b16 %v928, %v926
  %v1287 = vpack.c.b16 %v929, %v927
  %v1288 = vpack.c.b16 %v932, %v930
  %v1289 = vpack.c.b16 %v933, %v931
  %v1290 = vpack.c.b16 %v936, %v934
  %v1291 = vpack.c.b16 %v937, %v935
  %v1292 = vpack.c.b16 %v940, %v938
  %v1293 = vpack.c.b16 %v941, %v939
  %v1294 = vpack.c.b16 %v944, %v942
  %v1295 = vpack.c.b16 %v945, %v943
  %v1296 = vpack.c.b16 %v948, %v946
  %v1297 = vpack.c.b16 %v949, %v947
  %v1298 = vpack.c.b16 %v952, %v950
  %v1299 = vpack.c.b16 %v953, %v951
  %v1300 = vpack.c.b16 %v956, %v954
  %v1301 = vpack.c.b16 %v957, %v955
  %v1302 = vpack.c.b16 %v960, %v958
  %v1303 = vpack.c.b16 %v961, %v959
  %v1304 = vpack.c.b16 %v964, %v962
  %v1305 = vpack.c.b16 %v965, %v963
  %v1306 = vpack.c.b16 %v968, %v966
  %v1307 = vpack.c.b16 %v969, %v967
  %v1308 = vpack.c.b16 %v972, %v970
  %v1309 = vpack.c.b16 %v973, %v971
  %v1310 = vpack.c.b16 %v976, %v974
  %v1311 = vpack.c.b16 %v977, %v975
  %v1312 = vpack.c.b16 %v980, %v978
  %v1313 = vpack.c.b16 %v981, %v979
  %v1314 = vpack.c.b16 %v984, %v982
  %v1315 = vpack.c.b16 %v985, %v983
  %v1316 = vpack.c.b16 %v988, %v986
  %v1317 = vpack.c.b16 %v989, %v987
  %v1318 = vpack.c.b16 %v992, %v990
  %v1319 = vpack.c.b16 %v993, %v991
  %v1320 = vpack.c.b16 %v996, %v994
  %v1321 = vpack.c.b16 %v997, %v995
  %v1322 = vpack.c.b16 %v1000, %v998
  %v1323 = vpack.c.b16 %v1001, %v999
  %v1324 = vpack.c.b16 %v1004, %v1002
  %v1325 = vpack.c.b16 %v1005, %v1003
  %v1326 = vpack.c.b16 %v1008, %v1006
  %v1327 = vpack.c.b16 %v1009, %v1007
  %v1328 = vpack.c.b16 %v1012, %v1010
  %v1329 = vpack.c.b16 %v1013, %v1011
  %v1330 = vpack.c.b16 %v1016, %v1014
  %v1331 = vpack.c.b16 %v1017, %v1015
  %v1332 = vpack.c.b16 %v1020, %v1018
  %v1333 = vpack.c.b16 %v1021, %v1019
  %v1334 = vpack.c.b16 %v1024, %v1022
  %v1335 = vpack.c.b16 %v1025, %v1023
  %v1336 = vpack.c.b16 %v1028, %v1026
  %v1337 = vpack.c.b16 %v1029, %v1027
  %v1338 = vpack.c.b16 %v1032, %v1030
  %v1339 = vpack.c.b16 %v1033, %v1031
  %v1340 = vpack.c.b16 %v1036, %v1034
  %v1341 = vpack.c.b16 %v1037, %v1035
  %v1342 = vpack.c.b16 %v1040, %v1038
  %v1343 = vpack.c.b16 %v1041, %v1039
  %v1344 = vpack.c.b16 %v1044, %v1042
  %v1345 = vpack.c.b16 %v1045, %v1043
  %v1346 = vpack.c.b16 %v1048, %v1046
  %v1347 = vpack.c.b16 %v1049, %v1047
  %v1348 = vpack.c.b16 %v1052, %v1050
  %v1349 = vpack.c.b16 %v1053, %v1051
  %v1350 = vpack.c.b16 %v1056, %v1054
  %v1351 = vpack.c.b16 %v1057, %v1055
  %v1352 = vpack.c.b16 %v1060, %v1058
  %v1353 = vpack.c.b16 %v1061, %v1059
  %v1354 = vpack.c.b16 %v1064, %v1062
  %v1355 = vpack.c.b16 %v1065, %v1063
  %v1356 = vpack.c.b16 %v1068, %v1066
  %v1357 = vpack.c.b16 %v1069, %v1067
  %v1358 = vpack.c.b16 %v1072, %v1070
  %v1359 = vpack.c.b16 %v1073, %v1071
  %v1360 = vpack.c.b16 %v1076, %v1074
  %v1361 = vpack.c.b16 %v1077, %v1075
  %v1362 = vpack.c.b16 %v1080, %v1078
  %v1363 = vpack.c.b16 %v1081, %v1079
  %v1364 = vpack.c.b16 %v1084, %v1082
  %v1365 = vpack.c.b16 %v1085, %v1083
  %v1366 = vpack.c.b16 %v1088, %v1086
  %v1367 = vpack.c.b16 %v1089, %v1087
  %v1368 = vpack.c.b16 %v1092, %v1090
  %v1369 = vpack.c.b16 %v1093, %v1091
  %v1370 = vpack.c.b16 %v1096, %v1094
  %v1371 = vpack.c.b16 %v1097, %v1095
  %v1372 = vpack.c.b16 %v1100, %v1098
  %v1373 = vpack.c.b16 %v1101, %v1099
  %v1374 = vpack.c.b16 %v1104, %v1102
  %v1375 = vpack.c.b16 %v1105, %v1103
  %v1376 = vpack.c.b16 %v1108, %v1106
  %v1377 = vpack.c.b16 %v1109, %v1107
  %v1378 = vpack.c.b16 %v1112, %v1110
  %v1379 = vpack.c.b16 %v1113, %v1111
  %v1380 = vpack.c.b16 %v1116, %v1114
  %v1381 = vpack.c.b16 %v1117, %v1115
  %v1382 = vpack.c.b16 %v1120, %v1118
  %v1383 = vpack.c.b16 %v1121, %v1119
  %v1384 = vpack.c.b16 %v1124, %v1122
  %v1385 = vpack.c.b16 %v1125, %v1123
  %v1386 = vpack.c.b16 %v1128, %v1126
  %v1387 = vpack.c.b16 %v1129, %v1127
  %v1388 = vpack.c.b16 %v1132, %v1130
  %v1389 = vpack.c.b16 %v1133, %v1131
  %1646 = vmatprep.subr.bf16.mxu0 %v1135
  %1647 = vmatpush1.bf16.msra.mxu0 %v1134
  %1648 = vmatprep.subr.bf16.mxu0 %v1137
  %1649 = vmatpush1.bf16.msra.mxu0 %v1136
  %1650 = vmatprep.subr.bf16.mxu0 %v1139
  %1651 = vmatpush1.bf16.msra.mxu0 %v1138
  %1652 = vmatprep.subr.bf16.mxu0 %v1141
  %1653 = vmatpush1.bf16.msra.mxu0 %v1140
  %1654 = vmatprep.subr.bf16.mxu0 %v1143
  %1655 = vmatpush1.bf16.msra.mxu0 %v1142
  %1656 = vmatprep.subr.bf16.mxu0 %v1145
  %1657 = vmatpush1.bf16.msra.mxu0 %v1144
  %1658 = vmatprep.subr.bf16.mxu0 %v1147
  %1659 = vmatpush1.bf16.msra.mxu0 %v1146
  %1660 = vmatprep.subr.bf16.mxu0 %v1149
  %1661 = vmatpush1.bf16.msra.mxu0 %v1148
  %1662 = vmatprep.subr.bf16.mxu0 %v1151
  %1663 = vmatpush1.bf16.msra.mxu0 %v1150
  %1664 = vmatprep.subr.bf16.mxu0 %v1153
  %1665 = vmatpush1.bf16.msra.mxu0 %v1152
  %1666 = vmatprep.subr.bf16.mxu0 %v1155
  %1667 = vmatpush1.bf16.msra.mxu0 %v1154
  %1668 = vmatprep.subr.bf16.mxu0 %v1157
  %1669 = vmatpush1.bf16.msra.mxu0 %v1156
  %1670 = vmatprep.subr.bf16.mxu0 %v1159
  %1671 = vmatpush1.bf16.msra.mxu0 %v1158
  %1672 = vmatprep.subr.bf16.mxu0 %v1161
  %1673 = vmatpush1.bf16.msra.mxu0 %v1160
  %1674 = vmatprep.subr.bf16.mxu0 %v1163
  %1675 = vmatpush1.bf16.msra.mxu0 %v1162
  %1676 = vmatprep.subr.bf16.mxu0 %v1165
  %1677 = vmatpush1.bf16.msra.mxu0 %v1164
  %1678 = vmatprep.mubr.bf16.mxu0 %v335
  %1679 = vmatmul.mubr.bf16.gmra.mrb[0].mxu0 %v334
  %v1680 = vpop.f32.mrb[0].mxu0
  %v1681 = vadd.f32 0.0, %v1680
  %v1682 = vpop.f32.mrb[0].mxu0
  %v1683 = vadd.f32 0.0, %v1682
  %v1684 = vpop.f32.mrb[0].mxu0
  %v1685 = vadd.f32 0.0, %v1684
  %v1686 = vpop.f32.mrb[0].mxu0
  %v1687 = vadd.f32 0.0, %v1686
  %1688 = vdwg.mxu0
  %1689 = vmatprep.subr.bf16.mxu0 %v1167
  %1690 = vmatpush1.bf16.msra.mxu0 %v1166
  %1691 = vmatprep.subr.bf16.mxu0 %v1169
  %1692 = vmatpush1.bf16.msra.mxu0 %v1168
  %1693 = vmatprep.subr.bf16.mxu0 %v1171
  %1694 = vmatpush1.bf16.msra.mxu0 %v1170
  %1695 = vmatprep.subr.bf16.mxu0 %v1173
  %1696 = vmatpush1.bf16.msra.mxu0 %v1172
  %1697 = vmatprep.subr.bf16.mxu0 %v1175
  %1698 = vmatpush1.bf16.msra.mxu0 %v1174
  %1699 = vmatprep.subr.bf16.mxu0 %v1177
  %1700 = vmatpush1.bf16.msra.mxu0 %v1176
  %1701 = vmatprep.subr.bf16.mxu0 %v1179
  %1702 = vmatpush1.bf16.msra.mxu0 %v1178
  %1703 = vmatprep.subr.bf16.mxu0 %v1181
  %1704 = vmatpush1.bf16.msra.mxu0 %v1180
  %1705 = vmatprep.subr.bf16.mxu0 %v1183
  %1706 = vmatpush1.bf16.msra.mxu0 %v1182
  %1707 = vmatprep.subr.bf16.mxu0 %v1185
  %1708 = vmatpush1.bf16.msra.mxu0 %v1184
  %1709 = vmatprep.subr.bf16.mxu0 %v1187
  %1710 = vmatpush1.bf16.msra.mxu0 %v1186
  %1711 = vmatprep.subr.bf16.mxu0 %v1189
  %1712 = vmatpush1.bf16.msra.mxu0 %v1188
  %1713 = vmatprep.subr.bf16.mxu0 %v1191
  %1714 = vmatpush1.bf16.msra.mxu0 %v1190
  %1715 = vmatprep.subr.bf16.mxu0 %v1193
  %1716 = vmatpush1.bf16.msra.mxu0 %v1192
  %1717 = vmatprep.subr.bf16.mxu0 %v1195
  %1718 = vmatpush1.bf16.msra.mxu0 %v1194
  %1719 = vmatprep.subr.bf16.mxu0 %v1197
  %1720 = vmatpush1.bf16.msra.mxu0 %v1196
  %1721 = vmatprep.mubr.bf16.mxu0 %v337
  %1722 = vmatmul.mubr.bf16.gmra.mrb[0].mxu0 %v336
  %v1723 = vpop.f32.mrb[0].mxu0
  %v1724 = vadd.f32 %v1681, %v1723
  %v1725 = vpop.f32.mrb[0].mxu0
  %v1726 = vadd.f32 %v1683, %v1725
  %v1727 = vpop.f32.mrb[0].mxu0
  %v1728 = vadd.f32 %v1685, %v1727
  %v1729 = vpop.f32.mrb[0].mxu0
  %v1730 = vadd.f32 %v1687, %v1729
  %1731 = vdwg.mxu0
  %1732 = vmatprep.subr.bf16.mxu0 %v1199
  %1733 = vmatpush1.bf16.msra.mxu0 %v1198
  %1734 = vmatprep.subr.bf16.mxu0 %v1201
  %1735 = vmatpush1.bf16.msra.mxu0 %v1200
  %1736 = vmatprep.subr.bf16.mxu0 %v1203
  %1737 = vmatpush1.bf16.msra.mxu0 %v1202
  %1738 = vmatprep.subr.bf16.mxu0 %v1205
  %1739 = vmatpush1.bf16.msra.mxu0 %v1204
  %1740 = vmatprep.subr.bf16.mxu0 %v1207
  %1741 = vmatpush1.bf16.msra.mxu0 %v1206
  %1742 = vmatprep.subr.bf16.mxu0 %v1209
  %1743 = vmatpush1.bf16.msra.mxu0 %v1208
  %1744 = vmatprep.subr.bf16.mxu0 %v1211
  %1745 = vmatpush1.bf16.msra.mxu0 %v1210
  %1746 = vmatprep.subr.bf16.mxu0 %v1213
  %1747 = vmatpush1.bf16.msra.mxu0 %v1212
  %1748 = vmatprep.subr.bf16.mxu0 %v1215
  %1749 = vmatpush1.bf16.msra.mxu0 %v1214
  %1750 = vmatprep.subr.bf16.mxu0 %v1217
  %1751 = vmatpush1.bf16.msra.mxu0 %v1216
  %1752 = vmatprep.subr.bf16.mxu0 %v1219
  %1753 = vmatpush1.bf16.msra.mxu0 %v1218
  %1754 = vmatprep.subr.bf16.mxu0 %v1221
  %1755 = vmatpush1.bf16.msra.mxu0 %v1220
  %1756 = vmatprep.subr.bf16.mxu0 %v1223
  %1757 = vmatpush1.bf16.msra.mxu0 %v1222
  %1758 = vmatprep.subr.bf16.mxu0 %v1225
  %1759 = vmatpush1.bf16.msra.mxu0 %v1224
  %1760 = vmatprep.subr.bf16.mxu0 %v1227
  %1761 = vmatpush1.bf16.msra.mxu0 %v1226
  %1762 = vmatprep.subr.bf16.mxu0 %v1229
  %1763 = vmatpush1.bf16.msra.mxu0 %v1228
  %1764 = vmatprep.mubr.bf16.mxu0 %v339
  %1765 = vmatmul.mubr.bf16.gmra.mrb[0].mxu0 %v338
  %v1766 = vpop.f32.mrb[0].mxu0
  %v1767 = vadd.f32 %v1724, %v1766
  %v1768 = vpop.f32.mrb[0].mxu0
  %v1769 = vadd.f32 %v1726, %v1768
  %v1770 = vpop.f32.mrb[0].mxu0
  %v1771 = vadd.f32 %v1728, %v1770
  %v1772 = vpop.f32.mrb[0].mxu0
  %v1773 = vadd.f32 %v1730, %v1772
  %1774 = vdwg.mxu0
  %1775 = vmatprep.subr.bf16.mxu0 %v1231
  %1776 = vmatpush1.bf16.msra.mxu0 %v1230
  %1777 = vmatprep.subr.bf16.mxu0 %v1233
  %1778 = vmatpush1.bf16.msra.mxu0 %v1232
  %1779 = vmatprep.subr.bf16.mxu0 %v1235
  %1780 = vmatpush1.bf16.msra.mxu0 %v1234
  %1781 = vmatprep.subr.bf16.mxu0 %v1237
  %1782 = vmatpush1.bf16.msra.mxu0 %v1236
  %1783 = vmatprep.subr.bf16.mxu0 %v1239
  %1784 = vmatpush1.bf16.msra.mxu0 %v1238
  %1785 = vmatprep.subr.bf16.mxu0 %v1241
  %1786 = vmatpush1.bf16.msra.mxu0 %v1240
  %1787 = vmatprep.subr.bf16.mxu0 %v1243
  %1788 = vmatpush1.bf16.msra.mxu0 %v1242
  %1789 = vmatprep.subr.bf16.mxu0 %v1245
  %1790 = vmatpush1.bf16.msra.mxu0 %v1244
  %1791 = vmatprep.subr.bf16.mxu0 %v1247
  %1792 = vmatpush1.bf16.msra.mxu0 %v1246
  %1793 = vmatprep.subr.bf16.mxu0 %v1249
  %1794 = vmatpush1.bf16.msra.mxu0 %v1248
  %1795 = vmatprep.subr.bf16.mxu0 %v1251
  %1796 = vmatpush1.bf16.msra.mxu0 %v1250
  %1797 = vmatprep.subr.bf16.mxu0 %v1253
  %1798 = vmatpush1.bf16.msra.mxu0 %v1252
  %1799 = vmatprep.subr.bf16.mxu0 %v1255
  %1800 = vmatpush1.bf16.msra.mxu0 %v1254
  %1801 = vmatprep.subr.bf16.mxu0 %v1257
  %1802 = vmatpush1.bf16.msra.mxu0 %v1256
  %1803 = vmatprep.subr.bf16.mxu0 %v1259
  %1804 = vmatpush1.bf16.msra.mxu0 %v1258
  %1805 = vmatprep.subr.bf16.mxu0 %v1261
  %1806 = vmatpush1.bf16.msra.mxu0 %v1260
  %1807 = vmatprep.mubr.bf16.mxu0 %v341
  %1808 = vmatmul.mubr.bf16.gmra.mrb[0].mxu0 %v340
  %v1809 = vpop.f32.mrb[0].mxu0
  %v1810 = vadd.f32 %v1767, %v1809
  %v1811 = vpop.f32.mrb[0].mxu0
  %v1812 = vadd.f32 %v1769, %v1811
  %v1813 = vpop.f32.mrb[0].mxu0
  %v1814 = vadd.f32 %v1771, %v1813
  %v1815 = vpop.f32.mrb[0].mxu0
  %v1816 = vadd.f32 %v1773, %v1815
  %1817 = vdwg.mxu0
  %1818 = vmatprep.subr.bf16.mxu0 %v1263
  %1819 = vmatpush1.bf16.msra.mxu0 %v1262
  %1820 = vmatprep.subr.bf16.mxu0 %v1265
  %1821 = vmatpush1.bf16.msra.mxu0 %v1264
  %1822 = vmatprep.subr.bf16.mxu0 %v1267
  %1823 = vmatpush1.bf16.msra.mxu0 %v1266
  %1824 = vmatprep.subr.bf16.mxu0 %v1269
  %1825 = vmatpush1.bf16.msra.mxu0 %v1268
  %1826 = vmatprep.subr.bf16.mxu0 %v1271
  %1827 = vmatpush1.bf16.msra.mxu0 %v1270
  %1828 = vmatprep.subr.bf16.mxu0 %v1273
  %1829 = vmatpush1.bf16.msra.mxu0 %v1272
  %1830 = vmatprep.subr.bf16.mxu0 %v1275
  %1831 = vmatpush1.bf16.msra.mxu0 %v1274
  %1832 = vmatprep.subr.bf16.mxu0 %v1277
  %1833 = vmatpush1.bf16.msra.mxu0 %v1276
  %1834 = vmatprep.subr.bf16.mxu0 %v1279
  %1835 = vmatpush1.bf16.msra.mxu0 %v1278
  %1836 = vmatprep.subr.bf16.mxu0 %v1281
  %1837 = vmatpush1.bf16.msra.mxu0 %v1280
  %1838 = vmatprep.subr.bf16.mxu0 %v1283
  %1839 = vmatpush1.bf16.msra.mxu0 %v1282
  %1840 = vmatprep.subr.bf16.mxu0 %v1285
  %1841 = vmatpush1.bf16.msra.mxu0 %v1284
  %1842 = vmatprep.subr.bf16.mxu0 %v1287
  %1843 = vmatpush1.bf16.msra.mxu0 %v1286
  %1844 = vmatprep.subr.bf16.mxu0 %v1289
  %1845 = vmatpush1.bf16.msra.mxu0 %v1288
  %1846 = vmatprep.subr.bf16.mxu0 %v1291
  %1847 = vmatpush1.bf16.msra.mxu0 %v1290
  %1848 = vmatprep.subr.bf16.mxu0 %v1293
  %1849 = vmatpush1.bf16.msra.mxu0 %v1292
  %1850 = vmatprep.mubr.bf16.mxu0 %v343
  %1851 = vmatmul.mubr.bf16.gmra.mrb[0].mxu0 %v342
  %v1852 = vpop.f32.mrb[0].mxu0
  %v1853 = vadd.f32 %v1810, %v1852
  %v1854 = vpop.f32.mrb[0].mxu0
  %v1855 = vadd.f32 %v1812, %v1854
  %v1856 = vpop.f32.mrb[0].mxu0
  %v1857 = vadd.f32 %v1814, %v1856
  %v1858 = vpop.f32.mrb[0].mxu0
  %v1859 = vadd.f32 %v1816, %v1858
  %1860 = vdwg.mxu0
  %1861 = vmatprep.subr.bf16.mxu0 %v1295
  %1862 = vmatpush1.bf16.msra.mxu0 %v1294
  %1863 = vmatprep.subr.bf16.mxu0 %v1297
  %1864 = vmatpush1.bf16.msra.mxu0 %v1296
  %1865 = vmatprep.subr.bf16.mxu0 %v1299
  %1866 = vmatpush1.bf16.msra.mxu0 %v1298
  %1867 = vmatprep.subr.bf16.mxu0 %v1301
  %1868 = vmatpush1.bf16.msra.mxu0 %v1300
  %1869 = vmatprep.subr.bf16.mxu0 %v1303
  %1870 = vmatpush1.bf16.msra.mxu0 %v1302
  %1871 = vmatprep.subr.bf16.mxu0 %v1305
  %1872 = vmatpush1.bf16.msra.mxu0 %v1304
  %1873 = vmatprep.subr.bf16.mxu0 %v1307
  %1874 = vmatpush1.bf16.msra.mxu0 %v1306
  %1875 = vmatprep.subr.bf16.mxu0 %v1309
  %1876 = vmatpush1.bf16.msra.mxu0 %v1308
  %1877 = vmatprep.subr.bf16.mxu0 %v1311
  %1878 = vmatpush1.bf16.msra.mxu0 %v1310
  %1879 = vmatprep.subr.bf16.mxu0 %v1313
  %1880 = vmatpush1.bf16.msra.mxu0 %v1312
  %1881 = vmatprep.subr.bf16.mxu0 %v1315
  %1882 = vmatpush1.bf16.msra.mxu0 %v1314
  %1883 = vmatprep.subr.bf16.mxu0 %v1317
  %1884 = vmatpush1.bf16.msra.mxu0 %v1316
  %1885 = vmatprep.subr.bf16.mxu0 %v1319
  %1886 = vmatpush1.bf16.msra.mxu0 %v1318
  %1887 = vmatprep.subr.bf16.mxu0 %v1321
  %1888 = vmatpush1.bf16.msra.mxu0 %v1320
  %1889 = vmatprep.subr.bf16.mxu0 %v1323
  %1890 = vmatpush1.bf16.msra.mxu0 %v1322
  %1891 = vmatprep.subr.bf16.mxu0 %v1325
  %1892 = vmatpush1.bf16.msra.mxu0 %v1324
  %1893 = vmatprep.mubr.bf16.mxu0 %v345
  %1894 = vmatmul.mubr.bf16.gmra.mrb[0].mxu0 %v344
  %v1895 = vpop.f32.mrb[0].mxu0
  %v1896 = vadd.f32 %v1853, %v1895
  %v1897 = vpop.f32.mrb[0].mxu0
  %v1898 = vadd.f32 %v1855, %v1897
  %v1899 = vpop.f32.mrb[0].mxu0
  %v1900 = vadd.f32 %v1857, %v1899
  %v1901 = vpop.f32.mrb[0].mxu0
  %v1902 = vadd.f32 %v1859, %v1901
  %1903 = vdwg.mxu0
  %1904 = vmatprep.subr.bf16.mxu0 %v1327
  %1905 = vmatpush1.bf16.msra.mxu0 %v1326
  %1906 = vmatprep.subr.bf16.mxu0 %v1329
  %1907 = vmatpush1.bf16.msra.mxu0 %v1328
  %1908 = vmatprep.subr.bf16.mxu0 %v1331
  %1909 = vmatpush1.bf16.msra.mxu0 %v1330
  %1910 = vmatprep.subr.bf16.mxu0 %v1333
  %1911 = vmatpush1.bf16.msra.mxu0 %v1332
  %1912 = vmatprep.subr.bf16.mxu0 %v1335
  %1913 = vmatpush1.bf16.msra.mxu0 %v1334
  %1914 = vmatprep.subr.bf16.mxu0 %v1337
  %1915 = vmatpush1.bf16.msra.mxu0 %v1336
  %1916 = vmatprep.subr.bf16.mxu0 %v1339
  %1917 = vmatpush1.bf16.msra.mxu0 %v1338
  %1918 = vmatprep.subr.bf16.mxu0 %v1341
  %1919 = vmatpush1.bf16.msra.mxu0 %v1340
  %1920 = vmatprep.subr.bf16.mxu0 %v1343
  %1921 = vmatpush1.bf16.msra.mxu0 %v1342
  %1922 = vmatprep.subr.bf16.mxu0 %v1345
  %1923 = vmatpush1.bf16.msra.mxu0 %v1344
  %1924 = vmatprep.subr.bf16.mxu0 %v1347
  %1925 = vmatpush1.bf16.msra.mxu0 %v1346
  %1926 = vmatprep.subr.bf16.mxu0 %v1349
  %1927 = vmatpush1.bf16.msra.mxu0 %v1348
  %1928 = vmatprep.subr.bf16.mxu0 %v1351
  %1929 = vmatpush1.bf16.msra.mxu0 %v1350
  %1930 = vmatprep.subr.bf16.mxu0 %v1353
  %1931 = vmatpush1.bf16.msra.mxu0 %v1352
  %1932 = vmatprep.subr.bf16.mxu0 %v1355
  %1933 = vmatpush1.bf16.msra.mxu0 %v1354
  %1934 = vmatprep.subr.bf16.mxu0 %v1357
  %1935 = vmatpush1.bf16.msra.mxu0 %v1356
  %1936 = vmatprep.mubr.bf16.mxu0 %v347
  %1937 = vmatmul.mubr.bf16.gmra.mrb[0].mxu0 %v346
  %v1938 = vpop.f32.mrb[0].mxu0
  %v1939 = vadd.f32 %v1896, %v1938
  %v1940 = vpop.f32.mrb[0].mxu0
  %v1941 = vadd.f32 %v1898, %v1940
  %v1942 = vpop.f32.mrb[0].mxu0
  %v1943 = vadd.f32 %v1900, %v1942
  %v1944 = vpop.f32.mrb[0].mxu0
  %v1945 = vadd.f32 %v1902, %v1944
  %1946 = vdwg.mxu0
  %1947 = vmatprep.subr.bf16.mxu0 %v1359
  %1948 = vmatpush1.bf16.msra.mxu0 %v1358
  %1949 = vmatprep.subr.bf16.mxu0 %v1361
  %1950 = vmatpush1.bf16.msra.mxu0 %v1360
  %1951 = vmatprep.subr.bf16.mxu0 %v1363
  %1952 = vmatpush1.bf16.msra.mxu0 %v1362
  %1953 = vmatprep.subr.bf16.mxu0 %v1365
  %1954 = vmatpush1.bf16.msra.mxu0 %v1364
  %1955 = vmatprep.subr.bf16.mxu0 %v1367
  %1956 = vmatpush1.bf16.msra.mxu0 %v1366
  %1957 = vmatprep.subr.bf16.mxu0 %v1369
  %1958 = vmatpush1.bf16.msra.mxu0 %v1368
  %1959 = vmatprep.subr.bf16.mxu0 %v1371
  %1960 = vmatpush1.bf16.msra.mxu0 %v1370
  %1961 = vmatprep.subr.bf16.mxu0 %v1373
  %1962 = vmatpush1.bf16.msra.mxu0 %v1372
  %1963 = vmatprep.subr.bf16.mxu0 %v1375
  %1964 = vmatpush1.bf16.msra.mxu0 %v1374
  %1965 = vmatprep.subr.bf16.mxu0 %v1377
  %1966 = vmatpush1.bf16.msra.mxu0 %v1376
  %1967 = vmatprep.subr.bf16.mxu0 %v1379
  %1968 = vmatpush1.bf16.msra.mxu0 %v1378
  %1969 = vmatprep.subr.bf16.mxu0 %v1381
  %1970 = vmatpush1.bf16.msra.mxu0 %v1380
  %1971 = vmatprep.subr.bf16.mxu0 %v1383
  %1972 = vmatpush1.bf16.msra.mxu0 %v1382
  %1973 = vmatprep.subr.bf16.mxu0 %v1385
  %1974 = vmatpush1.bf16.msra.mxu0 %v1384
  %1975 = vmatprep.subr.bf16.mxu0 %v1387
  %1976 = vmatpush1.bf16.msra.mxu0 %v1386
  %1977 = vmatprep.subr.bf16.mxu0 %v1389
  %1978 = vmatpush1.bf16.msra.mxu0 %v1388
  %1979 = vmatprep.mubr.bf16.mxu0 %v349
  %1980 = vmatmul.mubr.bf16.gmra.mrb[0].mxu0 %v348
  %v1981 = vpop.f32.mrb[0].mxu0
  %v1982 = vadd.f32 %v1939, %v1981
  %v1983 = vpop.f32.mrb[0].mxu0
  %v1984 = vadd.f32 %v1941, %v1983
  %v1985 = vpop.f32.mrb[0].mxu0
  %v1986 = vadd.f32 %v1943, %v1985
  %v1987 = vpop.f32.mrb[0].mxu0
  %v1988 = vadd.f32 %v1945, %v1987
  %1989 = vdwg.mxu0
  %1990 = vst [vmem:[%s2] sm:$0xff] %v1982
  %1991 = vst [vmem:[%s2 + $0x8] sm:$0xff] %v1984
  %1992 = vst [vmem:[%s2 + $0x10] sm:$0xff] %v1986
  %1993 = vst [vmem:[%s2 + $0x18] sm:$0xff] %v1988
  %v1994 = vadd.f32 %v1982, %v1986
  %v1995 = vrot.slane %v1994, 4
  %v1996 = vadd.f32 %v1994, %v1995
  %v1997 = vrot.slane %v1996, 2
  %v1998 = vadd.f32 %v1996, %v1997
  %v1999 = vrot.slane %v1998, 1
  %v2000 = vadd.f32 %v1998, %v1999
  %v2001 = vadd.f32 %v1984, %v1988
  %v2002 = vrot.slane %v2001, 4
  %v2003 = vadd.f32 %v2001, %v2002
  %v2004 = vrot.slane %v2003, 2
  %v2005 = vadd.f32 %v2003, %v2004
  %v2006 = vrot.slane %v2005, 1
  %v2007 = vadd.f32 %v2005, %v2006
  %v2010 = vcombine.low %v2000, %v2007
  %v2012 = vunpack.c.l.s4 1966171168
  %v2013 = vunpack.c.0.s8 %v2012
  %v2014 = vlaneseq
  %v2015 = vshrl.u32 %v2014, 7
  %v2016 = vsub.s32 %v2013, %v2015
  %v2017 = vrot.slane %v2010, %v2016
  %v2019 = vunpack.c.l.s4 1966171168
  %v2020 = vunpack.c.0.s8 %v2019
  %v2021 = vlaneseq
  %v2022 = vshrl.u32 %v2021, 7
  %v2023 = vsub.s32 %v2020, %v2022
  %v2024 = vrot.slane %v2017, %v2023
  %v2026 = vlaneseq
  %vm2027 = vcmp.ge.s32.totalorder %v2026, 0
  %vm2028 = vcmp.lt.s32.totalorder %v2026, 256
  %vm2029 = vmand %vm2027, %vm2028
  %2030 = vst.msk [vmem:[%s3] sm:$0x3] %vm2029, %v2024
  %v2031 = vmul.f32 %v1982, %v1982
  %v2032 = vmul.f32 %v1984, %v1984
  %v2033 = vmul.f32 %v1986, %v1986
  %v2034 = vmul.f32 %v1988, %v1988
  %v2035 = vadd.f32 %v2031, %v2033
  %v2036 = vrot.slane %v2035, 4
  %v2037 = vadd.f32 %v2035, %v2036
  %v2038 = vrot.slane %v2037, 2
  %v2039 = vadd.f32 %v2037, %v2038
  %v2040 = vrot.slane %v2039, 1
  %v2041 = vadd.f32 %v2039, %v2040
  %v2042 = vadd.f32 %v2032, %v2034
  %v2043 = vrot.slane %v2042, 4
  %v2044 = vadd.f32 %v2042, %v2043
  %v2045 = vrot.slane %v2044, 2
  %v2046 = vadd.f32 %v2044, %v2045
  %v2047 = vrot.slane %v2046, 1
  %v2048 = vadd.f32 %v2046, %v2047
  %v2051 = vcombine.low %v2041, %v2048
  %v2053 = vunpack.c.l.s4 1966171168
  %v2054 = vunpack.c.0.s8 %v2053
  %v2055 = vlaneseq
  %v2056 = vshrl.u32 %v2055, 7
  %v2057 = vsub.s32 %v2054, %v2056
  %v2058 = vrot.slane %v2051, %v2057
  %v2060 = vunpack.c.l.s4 1966171168
  %v2061 = vunpack.c.0.s8 %v2060
  %v2062 = vlaneseq
  %v2063 = vshrl.u32 %v2062, 7
  %v2064 = vsub.s32 %v2061, %v2063
  %v2065 = vrot.slane %v2058, %v2064
  %2067 = vst.msk [vmem:[%s4] sm:$0x3] %vm2029, %v2065
  // Predicated region
  $region10: #{mc_model_forward.24} parent=0 // pred_check
    _
  $region11: #{mc_model_forward.24} parent=0 // pred_check_branch
    %2069 = sbr.rel (0) target = $region13
  $region12: #{mc_model_forward.24} parent=0 // pred_region
    _
  $region13: #{mc_model_forward.24} parent=0 // pred_fallthru
    _
  // Predicated region
  $region14: #{mc_model_forward.24} parent=0 // pred_check
    _
  $region15: #{mc_model_forward.24} parent=0 // pred_check_branch
    %2071 = sbr.rel (0) target = $region17
  $region16: #{mc_model_forward.24} parent=0 // pred_region
    _
  $region17: #{mc_model_forward.24} parent=0 // pred_fallthru
    _
  // Predicated region
  $region18: #{mc_model_forward.24} parent=0 // pred_check
    _
  $region19: #{mc_model_forward.24} parent=0 // pred_check_branch
    %2073 = sbr.rel (0) target = $region21
  $region20: #{mc_model_forward.24} parent=0 // pred_region
    _
  $region21: #{mc_model_forward.24} parent=0 // pred_fallthru
    _
  // Predicated region
  $region22: #{mc_model_forward.24} parent=0 // pred_check
    _
  $region23: #{mc_model_forward.24} parent=0 // pred_check_branch
    %2075 = sbr.rel (0) target = $region25
  $region24: #{mc_model_forward.24} parent=0 // pred_region
    _
  $region25: #{mc_model_forward.24} parent=0 // pred_fallthru
    _
  // Predicated region
  $region26: #{mc_model_forward.24} parent=0 // pred_check
    _
  $region27: #{mc_model_forward.24} parent=0 // pred_check_branch
    %2077 = sbr.rel (0) target = $region29
  $region28: #{mc_model_forward.24} parent=0 // pred_region
    _
  $region29: #{mc_model_forward.24} parent=0 // pred_fallthru
    _
  // Predicated region
  $region30: #{mc_model_forward.24} parent=0 // pred_check
    _
  $region31: #{mc_model_forward.24} parent=0 // pred_check_branch
    %2079 = sbr.rel (0) target = $region33
  $region32: #{mc_model_forward.24} parent=0 // pred_region
    _
  $region33: #{mc_model_forward.24} parent=0 // pred_fallthru
    _

// kernel: mc_model_forward.26
$region0: #{mc_model_forward.26}
  #allocation0 [shape = 'u32[]', space=smem, size = 0x4, offset = 0x4, fixed_abs, tag = 'smem constant byte address 0x4 - core index']
  #allocation1 [shape = 'u32[144,128]{1,0:T(1,128)}', space=vmem, size = 0x12000, scoped, tag = 'internal scratch']
  %s0 = inlined_call_operand.vmem [shape: bf16[16,1024], index: 0, kind: input, shape index: {}]
  %s1 = inlined_call_operand.vmem [shape: bf16[1024,128], index: 1, kind: input, shape index: {}]
  %s2 = inlined_call_operand.vmem [shape: f32[16,128], index: 2, kind: output, shape index: {0}]
  %s3 = inlined_call_operand.vmem [shape: f32[1,1,128], index: 3, kind: output, shape index: {1}]
  %s4 = inlined_call_operand.vmem [shape: f32[1,1,128], index: 4, kind: output, shape index: {2}]
  %5 = xla_tuple %s2, %s3, %s4
  %s6 = sld [smem:[#allocation0]]
  $region34: #{mc_model_forward.26} parent=0
    _
  %s8 = ssub.s32 1, %s6
  %s9 = scalar_select 0, %s8, %s6
  // Predicated region
  $region2: #{mc_model_forward.26} parent=0 // pred_check
    _
  $region3: #{mc_model_forward.26} parent=0 // pred_check_branch
    %11 = sbr.rel (0) target = $region5
  $region4: #{mc_model_forward.26} parent=0 // pred_region
    _
  $region5: #{mc_model_forward.26} parent=0 // pred_fallthru
    _
  // Predicated region
  $region6: #{mc_model_forward.26} parent=0 // pred_check
    _
  $region7: #{mc_model_forward.26} parent=0 // pred_check_branch
    %13 = sbr.rel (0) target = $region9
  $region8: #{mc_model_forward.26} parent=0 // pred_region
    _
  $region9: #{mc_model_forward.26} parent=0 // pred_fallthru
    _
  %v15 = vld [vmem:[%s0] sm:$0xff]
  %v16 = vld [vmem:[%s0 + $0x8] sm:$0xff]
  %v17 = vld [vmem:[%s0 + $0x10] sm:$0xff]
  %v18 = vld [vmem:[%s0 + $0x18] sm:$0xff]
  %v19 = vld [vmem:[%s0 + $0x20] sm:$0xff]
  %v20 = vld [vmem:[%s0 + $0x28] sm:$0xff]
  %v21 = vld [vmem:[%s0 + $0x30] sm:$0xff]
  %v22 = vld [vmem:[%s0 + $0x38] sm:$0xff]
  %v23 = vld [vmem:[%s1] sm:$0xf]
  %v24 = vld [vmem:[%s1 + $0x4] sm:$0xf]
  %v25 = vld [vmem:[%s1 + $0x8] sm:$0xf]
  %v26 = vld [vmem:[%s1 + $0xc] sm:$0xf]
  %v27 = vld [vmem:[%s1 + $0x10] sm:$0xf]
  %v28 = vld [vmem:[%s1 + $0x14] sm:$0xf]
  %v29 = vld [vmem:[%s1 + $0x18] sm:$0xf]
  %v30 = vld [vmem:[%s1 + $0x1c] sm:$0xf]
  %v31 = vld [vmem:[%s1 + $0x20] sm:$0xf]
  %v32 = vld [vmem:[%s1 + $0x24] sm:$0xf]
  %v33 = vld [vmem:[%s1 + $0x28] sm:$0xf]
  %v34 = vld [vmem:[%s1 + $0x2c] sm:$0xf]
  %v35 = vld [vmem:[%s1 + $0x30] sm:$0xf]
  %v36 = vld [vmem:[%s1 + $0x34] sm:$0xf]
  %v37 = vld [vmem:[%s1 + $0x38] sm:$0xf]
  %v38 = vld [vmem:[%s1 + $0x3c] sm:$0xf]
  %v39 = vld [vmem:[%s1 + $0x40] sm:$0xf]
  %v40 = vld [vmem:[%s1 + $0x44] sm:$0xf]
  %v41 = vld [vmem:[%s1 + $0x48] sm:$0xf]
  %v42 = vld [vmem:[%s1 + $0x4c] sm:$0xf]
  %v43 = vld [vmem:[%s1 + $0x50] sm:$0xf]
  %v44 = vld [vmem:[%s1 + $0x54] sm:$0xf]
  %v45 = vld [vmem:[%s1 + $0x58] sm:$0xf]
  %v46 = vld [vmem:[%s1 + $0x5c] sm:$0xf]
  %v47 = vld [vmem:[%s1 + $0x60] sm:$0xf]
  %v48 = vld [vmem:[%s1 + $0x64] sm:$0xf]
  %v49 = vld [vmem:[%s1 + $0x68] sm:$0xf]
  %v50 = vld [vmem:[%s1 + $0x6c] sm:$0xf]
  %v51 = vld [vmem:[%s1 + $0x70] sm:$0xf]
  %v52 = vld [vmem:[%s1 + $0x74] sm:$0xf]
  %v53 = vld [vmem:[%s1 + $0x78] sm:$0xf]
  %v54 = vld [vmem:[%s1 + $0x7c] sm:$0xf]
  %v55 = vld [vmem:[%s1 + $0x80] sm:$0xf]
  %v56 = vld [vmem:[%s1 + $0x84] sm:$0xf]
  %v57 = vld [vmem:[%s1 + $0x88] sm:$0xf]
  %v58 = vld [vmem:[%s1 + $0x8c] sm:$0xf]
  %v59 = vld [vmem:[%s1 + $0x90] sm:$0xf]
  %v60 = vld [vmem:[%s1 + $0x94] sm:$0xf]
  %v61 = vld [vmem:[%s1 + $0x98] sm:$0xf]
  %v62 = vld [vmem:[%s1 + $0x9c] sm:$0xf]
  %v63 = vld [vmem:[%s1 + $0xa0] sm:$0xf]
  %v64 = vld [vmem:[%s1 + $0xa4] sm:$0xf]
  %v65 = vld [vmem:[%s1 + $0xa8] sm:$0xf]
  %v66 = vld [vmem:[%s1 + $0xac] sm:$0xf]
  %v67 = vld [vmem:[%s1 + $0xb0] sm:$0xf]
  %v68 = vld [vmem:[%s1 + $0xb4] sm:$0xf]
  %v69 = vld [vmem:[%s1 + $0xb8] sm:$0xf]
  %v70 = vld [vmem:[%s1 + $0xbc] sm:$0xf]
  %v71 = vld [vmem:[%s1 + $0xc0] sm:$0xf]
  %v72 = vld [vmem:[%s1 + $0xc4] sm:$0xf]
  %v73 = vld [vmem:[%s1 + $0xc8] sm:$0xf]
  %v74 = vld [vmem:[%s1 + $0xcc] sm:$0xf]
  %v75 = vld [vmem:[%s1 + $0xd0] sm:$0xf]
  %v76 = vld [vmem:[%s1 + $0xd4] sm:$0xf]
  %v77 = vld [vmem:[%s1 + $0xd8] sm:$0xf]
  %v78 = vld [vmem:[%s1 + $0xdc] sm:$0xf]
  %v79 = vld [vmem:[%s1 + $0xe0] sm:$0xf]
  %v80 = vld [vmem:[%s1 + $0xe4] sm:$0xf]
  %v81 = vld [vmem:[%s1 + $0xe8] sm:$0xf]
  %v82 = vld [vmem:[%s1 + $0xec] sm:$0xf]
  %v83 = vld [vmem:[%s1 + $0xf0] sm:$0xf]
  %v84 = vld [vmem:[%s1 + $0xf4] sm:$0xf]
  %v85 = vld [vmem:[%s1 + $0xf8] sm:$0xf]
  %v86 = vld [vmem:[%s1 + $0xfc] sm:$0xf]
  %v87 = vld [vmem:[%s1 + $0x100] sm:$0xf]
  %v88 = vld [vmem:[%s1 + $0x104] sm:$0xf]
  %v89 = vld [vmem:[%s1 + $0x108] sm:$0xf]
  %v90 = vld [vmem:[%s1 + $0x10c] sm:$0xf]
  %v91 = vld [vmem:[%s1 + $0x110] sm:$0xf]
  %v92 = vld [vmem:[%s1 + $0x114] sm:$0xf]
  %v93 = vld [vmem:[%s1 + $0x118] sm:$0xf]
  %v94 = vld [vmem:[%s1 + $0x11c] sm:$0xf]
  %v95 = vld [vmem:[%s1 + $0x120] sm:$0xf]
  %v96 = vld [vmem:[%s1 + $0x124] sm:$0xf]
  %v97 = vld [vmem:[%s1 + $0x128] sm:$0xf]
  %v98 = vld [vmem:[%s1 + $0x12c] sm:$0xf]
  %v99 = vld [vmem:[%s1 + $0x130] sm:$0xf]
  %v100 = vld [vmem:[%s1 + $0x134] sm:$0xf]
  %v101 = vld [vmem:[%s1 + $0x138] sm:$0xf]
  %v102 = vld [vmem:[%s1 + $0x13c] sm:$0xf]
  %v103 = vld [vmem:[%s1 + $0x140] sm:$0xf]
  %v104 = vld [vmem:[%s1 + $0x144] sm:$0xf]
  %v105 = vld [vmem:[%s1 + $0x148] sm:$0xf]
  %v106 = vld [vmem:[%s1 + $0x14c] sm:$0xf]
  %v107 = vld [vmem:[%s1 + $0x150] sm:$0xf]
  %v108 = vld [vmem:[%s1 + $0x154] sm:$0xf]
  %v109 = vld [vmem:[%s1 + $0x158] sm:$0xf]
  %v110 = vld [vmem:[%s1 + $0x15c] sm:$0xf]
  %v111 = vld [vmem:[%s1 + $0x160] sm:$0xf]
  %v112 = vld [vmem:[%s1 + $0x164] sm:$0xf]
  %v113 = vld [vmem:[%s1 + $0x168] sm:$0xf]
  %v114 = vld [vmem:[%s1 + $0x16c] sm:$0xf]
  %v115 = vld [vmem:[%s1 + $0x170] sm:$0xf]
  %v116 = vld [vmem:[%s1 + $0x174] sm:$0xf]
  %v117 = vld [vmem:[%s1 + $0x178] sm:$0xf]
  %v118 = vld [vmem:[%s1 + $0x17c] sm:$0xf]
  %v119 = vld [vmem:[%s1 + $0x180] sm:$0xf]
  %v120 = vld [vmem:[%s1 + $0x184] sm:$0xf]
  %v121 = vld [vmem:[%s1 + $0x188] sm:$0xf]
  %v122 = vld [vmem:[%s1 + $0x18c] sm:$0xf]
  %v123 = vld [vmem:[%s1 + $0x190] sm:$0xf]
  %v124 = vld [vmem:[%s1 + $0x194] sm:$0xf]
  %v125 = vld [vmem:[%s1 + $0x198] sm:$0xf]
  %v126 = vld [vmem:[%s1 + $0x19c] sm:$0xf]
  %v127 = vld [vmem:[%s1 + $0x1a0] sm:$0xf]
  %v128 = vld [vmem:[%s1 + $0x1a4] sm:$0xf]
  %v129 = vld [vmem:[%s1 + $0x1a8] sm:$0xf]
  %v130 = vld [vmem:[%s1 + $0x1ac] sm:$0xf]
  %v131 = vld [vmem:[%s1 + $0x1b0] sm:$0xf]
  %v132 = vld [vmem:[%s1 + $0x1b4] sm:$0xf]
  %v133 = vld [vmem:[%s1 + $0x1b8] sm:$0xf]
  %v134 = vld [vmem:[%s1 + $0x1bc] sm:$0xf]
  %v135 = vld [vmem:[%s1 + $0x1c0] sm:$0xf]
  %v136 = vld [vmem:[%s1 + $0x1c4] sm:$0xf]
  %v137 = vld [vmem:[%s1 + $0x1c8] sm:$0xf]
  %v138 = vld [vmem:[%s1 + $0x1cc] sm:$0xf]
  %v139 = vld [vmem:[%s1 + $0x1d0] sm:$0xf]
  %v140 = vld [vmem:[%s1 + $0x1d4] sm:$0xf]
  %v141 = vld [vmem:[%s1 + $0x1d8] sm:$0xf]
  %v142 = vld [vmem:[%s1 + $0x1dc] sm:$0xf]
  %v143 = vld [vmem:[%s1 + $0x1e0] sm:$0xf]
  %v144 = vld [vmem:[%s1 + $0x1e4] sm:$0xf]
  %v145 = vld [vmem:[%s1 + $0x1e8] sm:$0xf]
  %v146 = vld [vmem:[%s1 + $0x1ec] sm:$0xf]
  %v147 = vld [vmem:[%s1 + $0x1f0] sm:$0xf]
  %v148 = vld [vmem:[%s1 + $0x1f4] sm:$0xf]
  %v149 = vld [vmem:[%s1 + $0x1f8] sm:$0xf]
  %v150 = vld [vmem:[%s1 + $0x1fc] sm:$0xf]
  %v159 = vunpack.c.l.b16 %v15
  %v160 = vunpack.c.h.b16 %v15
  %v161 = vunpack.c.l.b16 %v16
  %v162 = vunpack.c.h.b16 %v16
  %v163 = vunpack.c.l.b16 %v17
  %v164 = vunpack.c.h.b16 %v17
  %v165 = vunpack.c.l.b16 %v18
  %v166 = vunpack.c.h.b16 %v18
  %v167 = vunpack.c.l.b16 %v19
  %v168 = vunpack.c.h.b16 %v19
  %v169 = vunpack.c.l.b16 %v20
  %v170 = vunpack.c.h.b16 %v20
  %v171 = vunpack.c.l.b16 %v21
  %v172 = vunpack.c.h.b16 %v21
  %v173 = vunpack.c.l.b16 %v22
  %v174 = vunpack.c.h.b16 %v22
  %v175 = vpack.c.b16 %v167, %v159
  %v176 = vpack.c.b16 %v168, %v160
  %v177 = vpack.c.b16 %v169, %v161
  %v178 = vpack.c.b16 %v170, %v162
  %v179 = vpack.c.b16 %v171, %v163
  %v180 = vpack.c.b16 %v172, %v164
  %v181 = vpack.c.b16 %v173, %v165
  %v182 = vpack.c.b16 %v174, %v166
  %v319 = vunpack.c.l.b16 %v23
  %v320 = vunpack.c.l.b16 %v24
  %v321 = vunpack.c.l.b16 %v25
  %v322 = vunpack.c.l.b16 %v26
  %v323 = vunpack.c.l.b16 %v27
  %v324 = vunpack.c.l.b16 %v28
  %v325 = vunpack.c.l.b16 %v29
  %v326 = vunpack.c.l.b16 %v30
  %v327 = vunpack.c.l.b16 %v31
  %v328 = vunpack.c.l.b16 %v32
  %v329 = vunpack.c.l.b16 %v33
  %v330 = vunpack.c.l.b16 %v34
  %v331 = vunpack.c.l.b16 %v35
  %v332 = vunpack.c.l.b16 %v36
  %v333 = vunpack.c.l.b16 %v37
  %v334 = vunpack.c.l.b16 %v38
  %v335 = vunpack.c.l.b16 %v39
  %v336 = vunpack.c.l.b16 %v40
  %v337 = vunpack.c.l.b16 %v41
  %v338 = vunpack.c.l.b16 %v42
  %v339 = vunpack.c.l.b16 %v43
  %v340 = vunpack.c.l.b16 %v44
  %v341 = vunpack.c.l.b16 %v45
  %v342 = vunpack.c.l.b16 %v46
  %v343 = vunpack.c.l.b16 %v47
  %v344 = vunpack.c.l.b16 %v48
  %v345 = vunpack.c.l.b16 %v49
  %v346 = vunpack.c.l.b16 %v50
  %v347 = vunpack.c.l.b16 %v51
  %v348 = vunpack.c.l.b16 %v52
  %v349 = vunpack.c.l.b16 %v53
  %v350 = vunpack.c.l.b16 %v54
  %v351 = vunpack.c.l.b16 %v55
  %v352 = vunpack.c.l.b16 %v56
  %v353 = vunpack.c.l.b16 %v57
  %v354 = vunpack.c.l.b16 %v58
  %v355 = vunpack.c.l.b16 %v59
  %v356 = vunpack.c.l.b16 %v60
  %v357 = vunpack.c.l.b16 %v61
  %v358 = vunpack.c.l.b16 %v62
  %v359 = vunpack.c.l.b16 %v63
  %v360 = vunpack.c.l.b16 %v64
  %v361 = vunpack.c.l.b16 %v65
  %v362 = vunpack.c.l.b16 %v66
  %v363 = vunpack.c.l.b16 %v67
  %v364 = vunpack.c.l.b16 %v68
  %v365 = vunpack.c.l.b16 %v69
  %v366 = vunpack.c.l.b16 %v70
  %v367 = vunpack.c.l.b16 %v71
  %v368 = vunpack.c.l.b16 %v72
  %v369 = vunpack.c.l.b16 %v73
  %v370 = vunpack.c.l.b16 %v74
  %v371 = vunpack.c.l.b16 %v75
  %v372 = vunpack.c.l.b16 %v76
  %v373 = vunpack.c.l.b16 %v77
  %v374 = vunpack.c.l.b16 %v78
  %v375 = vunpack.c.l.b16 %v79
  %v376 = vunpack.c.l.b16 %v80
  %v377 = vunpack.c.l.b16 %v81
  %v378 = vunpack.c.l.b16 %v82
  %v379 = vunpack.c.l.b16 %v83
  %v380 = vunpack.c.l.b16 %v84
  %v381 = vunpack.c.l.b16 %v85
  %v382 = vunpack.c.l.b16 %v86
  %v383 = vunpack.c.l.b16 %v87
  %v384 = vunpack.c.l.b16 %v88
  %v385 = vunpack.c.l.b16 %v89
  %v386 = vunpack.c.l.b16 %v90
  %v387 = vunpack.c.l.b16 %v91
  %v388 = vunpack.c.l.b16 %v92
  %v389 = vunpack.c.l.b16 %v93
  %v390 = vunpack.c.l.b16 %v94
  %v391 = vunpack.c.l.b16 %v95
  %v392 = vunpack.c.l.b16 %v96
  %v393 = vunpack.c.l.b16 %v97
  %v394 = vunpack.c.l.b16 %v98
  %v395 = vunpack.c.l.b16 %v99
  %v396 = vunpack.c.l.b16 %v100
  %v397 = vunpack.c.l.b16 %v101
  %v398 = vunpack.c.l.b16 %v102
  %v399 = vunpack.c.l.b16 %v103
  %v400 = vunpack.c.l.b16 %v104
  %v401 = vunpack.c.l.b16 %v105
  %v402 = vunpack.c.l.b16 %v106
  %v403 = vunpack.c.l.b16 %v107
  %v404 = vunpack.c.l.b16 %v108
  %v405 = vunpack.c.l.b16 %v109
  %v406 = vunpack.c.l.b16 %v110
  %v407 = vunpack.c.l.b16 %v111
  %v408 = vunpack.c.l.b16 %v112
  %v409 = vunpack.c.l.b16 %v113
  %v410 = vunpack.c.l.b16 %v114
  %v411 = vunpack.c.l.b16 %v115
  %v412 = vunpack.c.l.b16 %v116
  %v413 = vunpack.c.l.b16 %v117
  %v414 = vunpack.c.l.b16 %v118
  %v415 = vunpack.c.l.b16 %v119
  %v416 = vunpack.c.l.b16 %v120
  %v417 = vunpack.c.l.b16 %v121
  %v418 = vunpack.c.l.b16 %v122
  %v419 = vunpack.c.l.b16 %v123
  %v420 = vunpack.c.l.b16 %v124
  %v421 = vunpack.c.l.b16 %v125
  %v422 = vunpack.c.l.b16 %v126
  %v423 = vunpack.c.l.b16 %v127
  %v424 = vunpack.c.l.b16 %v128
  %v425 = vunpack.c.l.b16 %v129
  %v426 = vunpack.c.l.b16 %v130
  %v427 = vunpack.c.l.b16 %v131
  %v428 = vunpack.c.l.b16 %v132
  %v429 = vunpack.c.l.b16 %v133
  %v430 = vunpack.c.l.b16 %v134
  %v431 = vunpack.c.l.b16 %v135
  %v432 = vunpack.c.l.b16 %v136
  %v433 = vunpack.c.l.b16 %v137
  %v434 = vunpack.c.l.b16 %v138
  %v435 = vunpack.c.l.b16 %v139
  %v436 = vunpack.c.l.b16 %v140
  %v437 = vunpack.c.l.b16 %v141
  %v438 = vunpack.c.l.b16 %v142
  %v439 = vunpack.c.l.b16 %v143
  %v440 = vunpack.c.l.b16 %v144
  %v441 = vunpack.c.l.b16 %v145
  %v442 = vunpack.c.l.b16 %v146
  %v443 = vunpack.c.l.b16 %v147
  %v444 = vunpack.c.l.b16 %v148
  %v445 = vunpack.c.l.b16 %v149
  %v446 = vunpack.c.l.b16 %v150
  %v447 = vpack.c.b16 %v320, %v319
  %v448 = vpack.c.b16 %v322, %v321
  %v449 = vpack.c.b16 %v324, %v323
  %v450 = vpack.c.b16 %v326, %v325
  %v451 = vpack.c.b16 %v328, %v327
  %v452 = vpack.c.b16 %v330, %v329
  %v453 = vpack.c.b16 %v332, %v331
  %v454 = vpack.c.b16 %v334, %v333
  %v455 = vpack.c.b16 %v336, %v335
  %v456 = vpack.c.b16 %v338, %v337
  %v457 = vpack.c.b16 %v340, %v339
  %v458 = vpack.c.b16 %v342, %v341
  %v459 = vpack.c.b16 %v344, %v343
  %v460 = vpack.c.b16 %v346, %v345
  %v461 = vpack.c.b16 %v348, %v347
  %v462 = vpack.c.b16 %v350, %v349
  %v463 = vpack.c.b16 %v352, %v351
  %v464 = vpack.c.b16 %v354, %v353
  %v465 = vpack.c.b16 %v356, %v355
  %v466 = vpack.c.b16 %v358, %v357
  %v467 = vpack.c.b16 %v360, %v359
  %v468 = vpack.c.b16 %v362, %v361
  %v469 = vpack.c.b16 %v364, %v363
  %v470 = vpack.c.b16 %v366, %v365
  %v471 = vpack.c.b16 %v368, %v367
  %v472 = vpack.c.b16 %v370, %v369
  %v473 = vpack.c.b16 %v372, %v371
  %v474 = vpack.c.b16 %v374, %v373
  %v475 = vpack.c.b16 %v376, %v375
  %v476 = vpack.c.b16 %v378, %v377
  %v477 = vpack.c.b16 %v380, %v379
  %v478 = vpack.c.b16 %v382, %v381
  %v479 = vpack.c.b16 %v384, %v383
  %v480 = vpack.c.b16 %v386, %v385
  %v481 = vpack.c.b16 %v388, %v387
  %v482 = vpack.c.b16 %v390, %v389
  %v483 = vpack.c.b16 %v392, %v391
  %v484 = vpack.c.b16 %v394, %v393
  %v485 = vpack.c.b16 %v396, %v395
  %v486 = vpack.c.b16 %v398, %v397
  %v487 = vpack.c.b16 %v400, %v399
  %v488 = vpack.c.b16 %v402, %v401
  %v489 = vpack.c.b16 %v404, %v403
  %v490 = vpack.c.b16 %v406, %v405
  %v491 = vpack.c.b16 %v408, %v407
  %v492 = vpack.c.b16 %v410, %v409
  %v493 = vpack.c.b16 %v412, %v411
  %v494 = vpack.c.b16 %v414, %v413
  %v495 = vpack.c.b16 %v416, %v415
  %v496 = vpack.c.b16 %v418, %v417
  %v497 = vpack.c.b16 %v420, %v419
  %v498 = vpack.c.b16 %v422, %v421
  %v499 = vpack.c.b16 %v424, %v423
  %v500 = vpack.c.b16 %v426, %v425
  %v501 = vpack.c.b16 %v428, %v427
  %v502 = vpack.c.b16 %v430, %v429
  %v503 = vpack.c.b16 %v432, %v431
  %v504 = vpack.c.b16 %v434, %v433
  %v505 = vpack.c.b16 %v436, %v435
  %v506 = vpack.c.b16 %v438, %v437
  %v507 = vpack.c.b16 %v440, %v439
  %v508 = vpack.c.b16 %v442, %v441
  %v509 = vpack.c.b16 %v444, %v443
  %v510 = vpack.c.b16 %v446, %v445
  %575 = vmatprep.subr.bf16.mxu0 0
  %576 = vmatpush1.bf16.msra.mxu0 %v447
  %577 = vmatprep.subr.bf16.mxu0 0
  %578 = vmatpush1.bf16.msra.mxu0 %v448
  %579 = vmatprep.subr.bf16.mxu0 0
  %580 = vmatpush1.bf16.msra.mxu0 %v449
  %581 = vmatprep.subr.bf16.mxu0 0
  %582 = vmatpush1.bf16.msra.mxu0 %v450
  %583 = vmatprep.subr.bf16.mxu0 0
  %584 = vmatpush1.bf16.msra.mxu0 %v451
  %585 = vmatprep.subr.bf16.mxu0 0
  %586 = vmatpush1.bf16.msra.mxu0 %v452
  %587 = vmatprep.subr.bf16.mxu0 0
  %588 = vmatpush1.bf16.msra.mxu0 %v453
  %589 = vmatprep.subr.bf16.mxu0 0
  %590 = vmatpush1.bf16.msra.mxu0 %v454
  %591 = vmatprep.subr.bf16.mxu0 0
  %592 = vmatpush1.bf16.msra.mxu0 %v455
  %593 = vmatprep.subr.bf16.mxu0 0
  %594 = vmatpush1.bf16.msra.mxu0 %v456
  %595 = vmatprep.subr.bf16.mxu0 0
  %596 = vmatpush1.bf16.msra.mxu0 %v457
  %597 = vmatprep.subr.bf16.mxu0 0
  %598 = vmatpush1.bf16.msra.mxu0 %v458
  %599 = vmatprep.subr.bf16.mxu0 0
  %600 = vmatpush1.bf16.msra.mxu0 %v459
  %601 = vmatprep.subr.bf16.mxu0 0
  %602 = vmatpush1.bf16.msra.mxu0 %v460
  %603 = vmatprep.subr.bf16.mxu0 0
  %604 = vmatpush1.bf16.msra.mxu0 %v461
  %605 = vmatprep.subr.bf16.mxu0 0
  %606 = vmatpush1.bf16.msra.mxu0 %v462
  %607 = vmatprep.mubr.bf16.mxu0 %v176
  %608 = vmatmul.mubr.bf16.gmra.mrb[0].mxu0 %v175
  %v609 = vpop.f32.mrb[0].mxu0
  %v610 = vadd.f32 0.0, %v609
  %v611 = vpop.f32.mrb[0].mxu0
  %v612 = vpop.f32.mrb[0].mxu0
  %v613 = vadd.f32 0.0, %v612
  %v614 = vpop.f32.mrb[0].mxu0
  %615 = vdwg.mxu0
  %616 = vmatprep.subr.bf16.mxu0 0
  %617 = vmatpush1.bf16.msra.mxu0 %v463
  %618 = vmatprep.subr.bf16.mxu0 0
  %619 = vmatpush1.bf16.msra.mxu0 %v464
  %620 = vmatprep.subr.bf16.mxu0 0
  %621 = vmatpush1.bf16.msra.mxu0 %v465
  %622 = vmatprep.subr.bf16.mxu0 0
  %623 = vmatpush1.bf16.msra.mxu0 %v466
  %624 = vmatprep.subr.bf16.mxu0 0
  %625 = vmatpush1.bf16.msra.mxu0 %v467
  %626 = vmatprep.subr.bf16.mxu0 0
  %627 = vmatpush1.bf16.msra.mxu0 %v468
  %628 = vmatprep.subr.bf16.mxu0 0
  %629 = vmatpush1.bf16.msra.mxu0 %v469
  %630 = vmatprep.subr.bf16.mxu0 0
  %631 = vmatpush1.bf16.msra.mxu0 %v470
  %632 = vmatprep.subr.bf16.mxu0 0
  %633 = vmatpush1.bf16.msra.mxu0 %v471
  %634 = vmatprep.subr.bf16.mxu0 0
  %635 = vmatpush1.bf16.msra.mxu0 %v472
  %636 = vmatprep.subr.bf16.mxu0 0
  %637 = vmatpush1.bf16.msra.mxu0 %v473
  %638 = vmatprep.subr.bf16.mxu0 0
  %639 = vmatpush1.bf16.msra.mxu0 %v474
  %640 = vmatprep.subr.bf16.mxu0 0
  %641 = vmatpush1.bf16.msra.mxu0 %v475
  %642 = vmatprep.subr.bf16.mxu0 0
  %643 = vmatpush1.bf16.msra.mxu0 %v476
  %644 = vmatprep.subr.bf16.mxu0 0
  %645 = vmatpush1.bf16.msra.mxu0 %v477
  %646 = vmatprep.subr.bf16.mxu0 0
  %647 = vmatpush1.bf16.msra.mxu0 %v478
  %648 = vmatprep.mubr.bf16.mxu0 %v178
  %649 = vmatmul.mubr.bf16.gmra.mrb[0].mxu0 %v177
  %v650 = vpop.f32.mrb[0].mxu0
  %v651 = vadd.f32 %v610, %v650
  %v652 = vpop.f32.mrb[0].mxu0
  %v653 = vpop.f32.mrb[0].mxu0
  %v654 = vadd.f32 %v613, %v653
  %v655 = vpop.f32.mrb[0].mxu0
  %656 = vdwg.mxu0
  %657 = vmatprep.subr.bf16.mxu0 0
  %658 = vmatpush1.bf16.msra.mxu0 %v479
  %659 = vmatprep.subr.bf16.mxu0 0
  %660 = vmatpush1.bf16.msra.mxu0 %v480
  %661 = vmatprep.subr.bf16.mxu0 0
  %662 = vmatpush1.bf16.msra.mxu0 %v481
  %663 = vmatprep.subr.bf16.mxu0 0
  %664 = vmatpush1.bf16.msra.mxu0 %v482
  %665 = vmatprep.subr.bf16.mxu0 0
  %666 = vmatpush1.bf16.msra.mxu0 %v483
  %667 = vmatprep.subr.bf16.mxu0 0
  %668 = vmatpush1.bf16.msra.mxu0 %v484
  %669 = vmatprep.subr.bf16.mxu0 0
  %670 = vmatpush1.bf16.msra.mxu0 %v485
  %671 = vmatprep.subr.bf16.mxu0 0
  %672 = vmatpush1.bf16.msra.mxu0 %v486
  %673 = vmatprep.subr.bf16.mxu0 0
  %674 = vmatpush1.bf16.msra.mxu0 %v487
  %675 = vmatprep.subr.bf16.mxu0 0
  %676 = vmatpush1.bf16.msra.mxu0 %v488
  %677 = vmatprep.subr.bf16.mxu0 0
  %678 = vmatpush1.bf16.msra.mxu0 %v489
  %679 = vmatprep.subr.bf16.mxu0 0
  %680 = vmatpush1.bf16.msra.mxu0 %v490
  %681 = vmatprep.subr.bf16.mxu0 0
  %682 = vmatpush1.bf16.msra.mxu0 %v491
  %683 = vmatprep.subr.bf16.mxu0 0
  %684 = vmatpush1.bf16.msra.mxu0 %v492
  %685 = vmatprep.subr.bf16.mxu0 0
  %686 = vmatpush1.bf16.msra.mxu0 %v493
  %687 = vmatprep.subr.bf16.mxu0 0
  %688 = vmatpush1.bf16.msra.mxu0 %v494
  %689 = vmatprep.mubr.bf16.mxu0 %v180
  %690 = vmatmul.mubr.bf16.gmra.mrb[0].mxu0 %v179
  %v691 = vpop.f32.mrb[0].mxu0
  %v692 = vadd.f32 %v651, %v691
  %v693 = vpop.f32.mrb[0].mxu0
  %v694 = vpop.f32.mrb[0].mxu0
  %v695 = vadd.f32 %v654, %v694
  %v696 = vpop.f32.mrb[0].mxu0
  %697 = vdwg.mxu0
  %698 = vmatprep.subr.bf16.mxu0 0
  %699 = vmatpush1.bf16.msra.mxu0 %v495
  %700 = vmatprep.subr.bf16.mxu0 0
  %701 = vmatpush1.bf16.msra.mxu0 %v496
  %702 = vmatprep.subr.bf16.mxu0 0
  %703 = vmatpush1.bf16.msra.mxu0 %v497
  %704 = vmatprep.subr.bf16.mxu0 0
  %705 = vmatpush1.bf16.msra.mxu0 %v498
  %706 = vmatprep.subr.bf16.mxu0 0
  %707 = vmatpush1.bf16.msra.mxu0 %v499
  %708 = vmatprep.subr.bf16.mxu0 0
  %709 = vmatpush1.bf16.msra.mxu0 %v500
  %710 = vmatprep.subr.bf16.mxu0 0
  %711 = vmatpush1.bf16.msra.mxu0 %v501
  %712 = vmatprep.subr.bf16.mxu0 0
  %713 = vmatpush1.bf16.msra.mxu0 %v502
  %714 = vmatprep.subr.bf16.mxu0 0
  %715 = vmatpush1.bf16.msra.mxu0 %v503
  %716 = vmatprep.subr.bf16.mxu0 0
  %717 = vmatpush1.bf16.msra.mxu0 %v504
  %718 = vmatprep.subr.bf16.mxu0 0
  %719 = vmatpush1.bf16.msra.mxu0 %v505
  %720 = vmatprep.subr.bf16.mxu0 0
  %721 = vmatpush1.bf16.msra.mxu0 %v506
  %722 = vmatprep.subr.bf16.mxu0 0
  %723 = vmatpush1.bf16.msra.mxu0 %v507
  %724 = vmatprep.subr.bf16.mxu0 0
  %725 = vmatpush1.bf16.msra.mxu0 %v508
  %726 = vmatprep.subr.bf16.mxu0 0
  %727 = vmatpush1.bf16.msra.mxu0 %v509
  %728 = vmatprep.subr.bf16.mxu0 0
  %729 = vmatpush1.bf16.msra.mxu0 %v510
  %730 = vmatprep.mubr.bf16.mxu0 %v182
  %731 = vmatmul.mubr.bf16.gmra.mrb[0].mxu0 %v181
  %v732 = vpop.f32.mrb[0].mxu0
  %v733 = vadd.f32 %v692, %v732
  %v734 = vpop.f32.mrb[0].mxu0
  %v735 = vpop.f32.mrb[0].mxu0
  %v736 = vadd.f32 %v695, %v735
  %v737 = vpop.f32.mrb[0].mxu0
  %738 = vdwg.mxu0
  %739 = vst [vmem:[%s2] sm:$0xff] %v733
  %740 = vst [vmem:[%s2 + $0x8] sm:$0xff] %v736
  %v741 = vadd.f32 %v733, %v736
  %v742 = vrot.slane %v741, 4
  %v743 = vadd.f32 %v741, %v742
  %v744 = vrot.slane %v743, 2
  %v745 = vadd.f32 %v743, %v744
  %v746 = vrot.slane %v745, 1
  %v747 = vadd.f32 %v745, %v746
  %748 = vst [vmem:[%s3] sm:$0x1] %v747
  %v749 = vmul.f32 %v733, %v733
  %v750 = vmul.f32 %v736, %v736
  %v751 = vadd.f32 %v749, %v750
  %v752 = vrot.slane %v751, 4
  %v753 = vadd.f32 %v751, %v752
  %v754 = vrot.slane %v753, 2
  %v755 = vadd.f32 %v753, %v754
  %v756 = vrot.slane %v755, 1
  %v757 = vadd.f32 %v755, %v756
  %758 = vst [vmem:[%s4] sm:$0x1] %v757
  // Predicated region
  $region10: #{mc_model_forward.26} parent=0 // pred_check
    _
  $region11: #{mc_model_forward.26} parent=0 // pred_check_branch
    %760 = sbr.rel (0) target = $region13
  $region12: #{mc_model_forward.26} parent=0 // pred_region
    _
  $region13: #{mc_model_forward.26} parent=0 // pred_fallthru
    _
  // Predicated region
  $region14: #{mc_model_forward.26} parent=0 // pred_check
    _
  $region15: #{mc_model_forward.26} parent=0 // pred_check_branch
    %762 = sbr.rel (0) target = $region17
  $region16: #{mc_model_forward.26} parent=0 // pred_region
    _
  $region17: #{mc_model_forward.26} parent=0 // pred_fallthru
    _
  // Predicated region
  $region18: #{mc_model_forward.26} parent=0 // pred_check
    _
  $region19: #{mc_model_forward.26} parent=0 // pred_check_branch
    %764 = sbr.rel (0) target = $region21
  $region20: #{mc_model_forward.26} parent=0 // pred_region
    _
  $region21: #{mc_model_forward.26} parent=0 // pred_fallthru
    _
  // Predicated region
  $region22: #{mc_model_forward.26} parent=0 // pred_check
    _
  $region23: #{mc_model_forward.26} parent=0 // pred_check_branch
    %766 = sbr.rel (0) target = $region25
  $region24: #{mc_model_forward.26} parent=0 // pred_region
    _
  $region25: #{mc_model_forward.26} parent=0 // pred_fallthru
    _
  // Predicated region
  $region26: #{mc_model_forward.26} parent=0 // pred_check
    _
  $region27: #{mc_model_forward.26} parent=0 // pred_check_branch
    %768 = sbr.rel (0) target = $region29
  $region28: #{mc_model_forward.26} parent=0 // pred_region
    _
  $region29: #{mc_model_forward.26} parent=0 // pred_fallthru
    _
  // Predicated region
  $region30: #{mc_model_forward.26} parent=0 // pred_check
    _
  $region31: #{mc_model_forward.26} parent=0 // pred_check_branch
    %770 = sbr.rel (0) target = $region33
  $region32: #{mc_model_forward.26} parent=0 // pred_region
    _
  $region33: #{mc_model_forward.26} parent=0 // pred_fallthru
    _

// kernel: mc_model_forward.30
$region0: #{mc_model_forward.30}
  #allocation0 [shape = 'u32[]', space=smem, size = 0x4, offset = 0x4, fixed_abs, tag = 'smem constant byte address 0x4 - core index']
  #allocation1 [shape = 'u32[144,128]{1,0:T(1,128)}', space=vmem, size = 0x12000, scoped, tag = 'internal scratch']
  %s0 = inlined_call_operand.vmem [shape: f32[32,128], index: 0, kind: input, shape index: {}]
  %s1 = inlined_call_operand.vmem [shape: f32[4,1,128], index: 1, kind: input, shape index: {}]
  %s2 = inlined_call_operand.vmem [shape: f32[4,1,128], index: 2, kind: input, shape index: {}]
  %s3 = inlined_call_operand.vmem [shape: f32[1,128], index: 3, kind: input, shape index: {}]
  %s4 = inlined_call_operand.vmem [shape: f32[1,128], index: 4, kind: input, shape index: {}]
  %s5 = inlined_call_operand.vmem [shape: f32[32,128], index: 5, kind: input, shape index: {}]
  %s6 = inlined_call_operand.vmem [shape: f32[32,128], index: 6, kind: output, shape index: {}]
  %s7 = sld [smem:[#allocation0]]
  $region34: #{mc_model_forward.30} parent=0
    _
  %s9 = ssub.s32 1, %s7
  %s10 = scalar_select 0, %s9, %s7
  // Predicated region
  $region2: #{mc_model_forward.30} parent=0 // pred_check
    _
  $region3: #{mc_model_forward.30} parent=0 // pred_check_branch
    %12 = sbr.rel (0) target = $region5
  $region4: #{mc_model_forward.30} parent=0 // pred_region
    _
  $region5: #{mc_model_forward.30} parent=0 // pred_fallthru
    _
  // Predicated region
  $region6: #{mc_model_forward.30} parent=0 // pred_check
    _
  $region7: #{mc_model_forward.30} parent=0 // pred_check_branch
    %14 = sbr.rel (0) target = $region9
  $region8: #{mc_model_forward.30} parent=0 // pred_region
    _
  $region9: #{mc_model_forward.30} parent=0 // pred_fallthru
    _
  // Predicated region
  $region10: #{mc_model_forward.30} parent=0 // pred_check
    _
  $region11: #{mc_model_forward.30} parent=0 // pred_check_branch
    %16 = sbr.rel (0) target = $region13
  $region12: #{mc_model_forward.30} parent=0 // pred_region
    _
  $region13: #{mc_model_forward.30} parent=0 // pred_fallthru
    _
  // Predicated region
  $region14: #{mc_model_forward.30} parent=0 // pred_check
    _
  $region15: #{mc_model_forward.30} parent=0 // pred_check_branch
    %18 = sbr.rel (0) target = $region17
  $region16: #{mc_model_forward.30} parent=0 // pred_region
    _
  $region17: #{mc_model_forward.30} parent=0 // pred_fallthru
    _
  // Predicated region
  $region18: #{mc_model_forward.30} parent=0 // pred_check
    _
  $region19: #{mc_model_forward.30} parent=0 // pred_check_branch
    %20 = sbr.rel (0) target = $region21
  $region20: #{mc_model_forward.30} parent=0 // pred_region
    _
  $region21: #{mc_model_forward.30} parent=0 // pred_fallthru
    _
  // Predicated region
  $region22: #{mc_model_forward.30} parent=0 // pred_check
    _
  $region23: #{mc_model_forward.30} parent=0 // pred_check_branch
    %22 = sbr.rel (0) target = $region25
  $region24: #{mc_model_forward.30} parent=0 // pred_region
    _
  $region25: #{mc_model_forward.30} parent=0 // pred_fallthru
    _
  %v23 = vld [vmem:[%s1] sm:$0x1]
  %v24 = vld [vmem:[%s1 + $0x1] sm:$0x1]
  %v25 = vld [vmem:[%s1 + $0x2] sm:$0x1]
  %v26 = vld [vmem:[%s1 + $0x3] sm:$0x1]
  %vm27 = vcmask 1040384
  %v28 = vsel %vm27, %v23, 0.0
  %v29 = vsel %vm27, %v24, 0.0
  %v30 = vadd.f32 %v28, %v29
  %v31 = vsel %vm27, %v25, 0.0
  %v32 = vadd.f32 %v30, %v31
  %v33 = vsel %vm27, %v26, 0.0
  %v34 = vadd.f32 %v32, %v33
  %v35 = vmul.f32 %v34, 0.03125
  %v36 = vld [vmem:[%s2] sm:$0x1]
  %v37 = vld [vmem:[%s2 + $0x1] sm:$0x1]
  %v38 = vld [vmem:[%s2 + $0x2] sm:$0x1]
  %v39 = vld [vmem:[%s2 + $0x3] sm:$0x1]
  %v40 = vsel %vm27, %v36, 0.0
  %v41 = vsel %vm27, %v37, 0.0
  %v42 = vadd.f32 %v40, %v41
  %v43 = vsel %vm27, %v38, 0.0
  %v44 = vadd.f32 %v42, %v43
  %v45 = vsel %vm27, %v39, 0.0
  %v46 = vadd.f32 %v44, %v45
  %v47 = vmul.f32 %v46, 0.03125
  %v48 = vmul.f32 %v35, %v35
  %v49 = vsub.f32 %v47, %v48
  %v50 = vld [vmem:[%s3] sm:$0x1]
  %v51 = vadd.f32 %v49, 1e-05
  %v52 = vrsqrt.pop %v51
  %v53 = vmul.f32 %v50, %v52
  %v54 = vld [vmem:[%s4] sm:$0x1]
  %v55 = vmul.f32 %v35, %v53
  %v56 = vsub.f32 %v54, %v55
  %v57 = vld [vmem:[%s0] sm:$0xff]
  %v58 = vld [vmem:[%s0 + $0x8] sm:$0xff]
  %v59 = vld [vmem:[%s0 + $0x10] sm:$0xff]
  %v60 = vld [vmem:[%s0 + $0x18] sm:$0xff]
  %v62 = vlaneseq
  %v63 = vshrl.u32 %v62, 7
  %v64 = vsub.s32 0, %v63
  %v65 = vrot.slane %v53, %v64
  %v67 = vmul.f32 %v57, %v65
  %v68 = vmul.f32 %v58, %v65
  %v69 = vmul.f32 %v59, %v65
  %v70 = vmul.f32 %v60, %v65
  %v72 = vlaneseq
  %v73 = vshrl.u32 %v72, 7
  %v74 = vsub.s32 0, %v73
  %v75 = vrot.slane %v56, %v74
  %v77 = vadd.f32 %v67, %v75
  %v78 = vadd.f32 %v68, %v75
  %v79 = vadd.f32 %v69, %v75
  %v80 = vadd.f32 %v70, %v75
  %vm81 = vcmp.ge.f32.partialorder %v77, 0.0
  %vm82 = vcmp.ge.f32.partialorder %v78, 0.0
  %vm83 = vcmp.ge.f32.partialorder %v79, 0.0
  %vm84 = vcmp.ge.f32.partialorder %v80, 0.0
  %v85 = vmul.f32 %v77, 0.01
  %v86 = vmul.f32 %v78, 0.01
  %v87 = vmul.f32 %v79, 0.01
  %v88 = vmul.f32 %v80, 0.01
  %v89 = vsel %vm81, %v77, %v85
  %v90 = vsel %vm82, %v78, %v86
  %v91 = vsel %vm83, %v79, %v87
  %v92 = vsel %vm84, %v80, %v88
  %v93 = vld [vmem:[%s5] sm:$0xff]
  %v94 = vld [vmem:[%s5 + $0x8] sm:$0xff]
  %v95 = vld [vmem:[%s5 + $0x10] sm:$0xff]
  %v96 = vld [vmem:[%s5 + $0x18] sm:$0xff]
  %v97 = vadd.f32 %v89, %v93
  %v98 = vadd.f32 %v90, %v94
  %v99 = vadd.f32 %v91, %v95
  %v100 = vadd.f32 %v92, %v96
  %101 = vst [vmem:[%s6] sm:$0xff] %v97
  %102 = vst [vmem:[%s6 + $0x8] sm:$0xff] %v98
  %103 = vst [vmem:[%s6 + $0x10] sm:$0xff] %v99
  %104 = vst [vmem:[%s6 + $0x18] sm:$0xff] %v100
  // Predicated region
  $region26: #{mc_model_forward.30} parent=0 // pred_check
    _
  $region27: #{mc_model_forward.30} parent=0 // pred_check_branch
    %106 = sbr.rel (0) target = $region29
  $region28: #{mc_model_forward.30} parent=0 // pred_region
    _
  $region29: #{mc_model_forward.30} parent=0 // pred_fallthru
    _
  // Predicated region
  $region30: #{mc_model_forward.30} parent=0 // pred_check
    _
  $region31: #{mc_model_forward.30} parent=0 // pred_check_branch
    %108 = sbr.rel (0) target = $region33
  $region32: #{mc_model_forward.30} parent=0 // pred_region
    _
  $region33: #{mc_model_forward.30} parent=0 // pred_fallthru
    _

// kernel: mc_model_forward.31
$region0: #{mc_model_forward.31}
  #allocation0 [shape = 'u32[]', space=smem, size = 0x4, offset = 0x4, fixed_abs, tag = 'smem constant byte address 0x4 - core index']
  #allocation1 [shape = 'u32[144,128]{1,0:T(1,128)}', space=vmem, size = 0x12000, scoped, tag = 'internal scratch']
  %s0 = inlined_call_operand.vmem [shape: bf16[32,512], index: 0, kind: input, shape index: {}]
  %s1 = inlined_call_operand.vmem [shape: bf16[512,128], index: 1, kind: input, shape index: {}]
  %s2 = inlined_call_operand.vmem [shape: f32[32,128], index: 2, kind: output, shape index: {0}]
  %s3 = inlined_call_operand.vmem [shape: f32[1,1,128], index: 3, kind: output, shape index: {1}]
  %s4 = inlined_call_operand.vmem [shape: f32[1,1,128], index: 4, kind: output, shape index: {2}]
  %5 = xla_tuple %s2, %s3, %s4
  %s6 = sld [smem:[#allocation0]]
  $region34: #{mc_model_forward.31} parent=0
    _
  %s8 = ssub.s32 1, %s6
  %s9 = scalar_select 0, %s8, %s6
  // Predicated region
  $region2: #{mc_model_forward.31} parent=0 // pred_check
    _
  $region3: #{mc_model_forward.31} parent=0 // pred_check_branch
    %11 = sbr.rel (0) target = $region5
  $region4: #{mc_model_forward.31} parent=0 // pred_region
    _
  $region5: #{mc_model_forward.31} parent=0 // pred_fallthru
    _
  // Predicated region
  $region6: #{mc_model_forward.31} parent=0 // pred_check
    _
  $region7: #{mc_model_forward.31} parent=0 // pred_check_branch
    %13 = sbr.rel (0) target = $region9
  $region8: #{mc_model_forward.31} parent=0 // pred_region
    _
  $region9: #{mc_model_forward.31} parent=0 // pred_fallthru
    _
  %v15 = vld [vmem:[%s0] sm:$0xff]
  %v16 = vld [vmem:[%s0 + $0x8] sm:$0xff]
  %v17 = vld [vmem:[%s0 + $0x10] sm:$0xff]
  %v18 = vld [vmem:[%s0 + $0x18] sm:$0xff]
  %v19 = vld [vmem:[%s0 + $0x20] sm:$0xff]
  %v20 = vld [vmem:[%s0 + $0x28] sm:$0xff]
  %v21 = vld [vmem:[%s0 + $0x30] sm:$0xff]
  %v22 = vld [vmem:[%s0 + $0x38] sm:$0xff]
  %v23 = vld [vmem:[%s1] sm:$0xf]
  %v24 = vld [vmem:[%s1 + $0x4] sm:$0xf]
  %v25 = vld [vmem:[%s1 + $0x8] sm:$0xf]
  %v26 = vld [vmem:[%s1 + $0xc] sm:$0xf]
  %v27 = vld [vmem:[%s1 + $0x10] sm:$0xf]
  %v28 = vld [vmem:[%s1 + $0x14] sm:$0xf]
  %v29 = vld [vmem:[%s1 + $0x18] sm:$0xf]
  %v30 = vld [vmem:[%s1 + $0x1c] sm:$0xf]
  %v31 = vld [vmem:[%s1 + $0x20] sm:$0xf]
  %v32 = vld [vmem:[%s1 + $0x24] sm:$0xf]
  %v33 = vld [vmem:[%s1 + $0x28] sm:$0xf]
  %v34 = vld [vmem:[%s1 + $0x2c] sm:$0xf]
  %v35 = vld [vmem:[%s1 + $0x30] sm:$0xf]
  %v36 = vld [vmem:[%s1 + $0x34] sm:$0xf]
  %v37 = vld [vmem:[%s1 + $0x38] sm:$0xf]
  %v38 = vld [vmem:[%s1 + $0x3c] sm:$0xf]
  %v39 = vld [vmem:[%s1 + $0x40] sm:$0xf]
  %v40 = vld [vmem:[%s1 + $0x44] sm:$0xf]
  %v41 = vld [vmem:[%s1 + $0x48] sm:$0xf]
  %v42 = vld [vmem:[%s1 + $0x4c] sm:$0xf]
  %v43 = vld [vmem:[%s1 + $0x50] sm:$0xf]
  %v44 = vld [vmem:[%s1 + $0x54] sm:$0xf]
  %v45 = vld [vmem:[%s1 + $0x58] sm:$0xf]
  %v46 = vld [vmem:[%s1 + $0x5c] sm:$0xf]
  %v47 = vld [vmem:[%s1 + $0x60] sm:$0xf]
  %v48 = vld [vmem:[%s1 + $0x64] sm:$0xf]
  %v49 = vld [vmem:[%s1 + $0x68] sm:$0xf]
  %v50 = vld [vmem:[%s1 + $0x6c] sm:$0xf]
  %v51 = vld [vmem:[%s1 + $0x70] sm:$0xf]
  %v52 = vld [vmem:[%s1 + $0x74] sm:$0xf]
  %v53 = vld [vmem:[%s1 + $0x78] sm:$0xf]
  %v54 = vld [vmem:[%s1 + $0x7c] sm:$0xf]
  %v55 = vld [vmem:[%s1 + $0x80] sm:$0xf]
  %v56 = vld [vmem:[%s1 + $0x84] sm:$0xf]
  %v57 = vld [vmem:[%s1 + $0x88] sm:$0xf]
  %v58 = vld [vmem:[%s1 + $0x8c] sm:$0xf]
  %v59 = vld [vmem:[%s1 + $0x90] sm:$0xf]
  %v60 = vld [vmem:[%s1 + $0x94] sm:$0xf]
  %v61 = vld [vmem:[%s1 + $0x98] sm:$0xf]
  %v62 = vld [vmem:[%s1 + $0x9c] sm:$0xf]
  %v63 = vld [vmem:[%s1 + $0xa0] sm:$0xf]
  %v64 = vld [vmem:[%s1 + $0xa4] sm:$0xf]
  %v65 = vld [vmem:[%s1 + $0xa8] sm:$0xf]
  %v66 = vld [vmem:[%s1 + $0xac] sm:$0xf]
  %v67 = vld [vmem:[%s1 + $0xb0] sm:$0xf]
  %v68 = vld [vmem:[%s1 + $0xb4] sm:$0xf]
  %v69 = vld [vmem:[%s1 + $0xb8] sm:$0xf]
  %v70 = vld [vmem:[%s1 + $0xbc] sm:$0xf]
  %v71 = vld [vmem:[%s1 + $0xc0] sm:$0xf]
  %v72 = vld [vmem:[%s1 + $0xc4] sm:$0xf]
  %v73 = vld [vmem:[%s1 + $0xc8] sm:$0xf]
  %v74 = vld [vmem:[%s1 + $0xcc] sm:$0xf]
  %v75 = vld [vmem:[%s1 + $0xd0] sm:$0xf]
  %v76 = vld [vmem:[%s1 + $0xd4] sm:$0xf]
  %v77 = vld [vmem:[%s1 + $0xd8] sm:$0xf]
  %v78 = vld [vmem:[%s1 + $0xdc] sm:$0xf]
  %v79 = vld [vmem:[%s1 + $0xe0] sm:$0xf]
  %v80 = vld [vmem:[%s1 + $0xe4] sm:$0xf]
  %v81 = vld [vmem:[%s1 + $0xe8] sm:$0xf]
  %v82 = vld [vmem:[%s1 + $0xec] sm:$0xf]
  %v83 = vld [vmem:[%s1 + $0xf0] sm:$0xf]
  %v84 = vld [vmem:[%s1 + $0xf4] sm:$0xf]
  %v85 = vld [vmem:[%s1 + $0xf8] sm:$0xf]
  %v86 = vld [vmem:[%s1 + $0xfc] sm:$0xf]
  %v95 = vunpack.c.l.b16 %v15
  %v96 = vunpack.c.h.b16 %v15
  %v97 = vunpack.c.l.b16 %v16
  %v98 = vunpack.c.h.b16 %v16
  %v99 = vunpack.c.l.b16 %v17
  %v100 = vunpack.c.h.b16 %v17
  %v101 = vunpack.c.l.b16 %v18
  %v102 = vunpack.c.h.b16 %v18
  %v103 = vunpack.c.l.b16 %v19
  %v104 = vunpack.c.h.b16 %v19
  %v105 = vunpack.c.l.b16 %v20
  %v106 = vunpack.c.h.b16 %v20
  %v107 = vunpack.c.l.b16 %v21
  %v108 = vunpack.c.h.b16 %v21
  %v109 = vunpack.c.l.b16 %v22
  %v110 = vunpack.c.h.b16 %v22
  %v111 = vpack.c.b16 %v99, %v95
  %v112 = vpack.c.b16 %v100, %v96
  %v113 = vpack.c.b16 %v101, %v97
  %v114 = vpack.c.b16 %v102, %v98
  %v115 = vpack.c.b16 %v107, %v103
  %v116 = vpack.c.b16 %v108, %v104
  %v117 = vpack.c.b16 %v109, %v105
  %v118 = vpack.c.b16 %v110, %v106
  %v191 = vunpack.c.l.b16 %v23
  %v192 = vunpack.c.l.b16 %v24
  %v193 = vunpack.c.l.b16 %v25
  %v194 = vunpack.c.l.b16 %v26
  %v195 = vunpack.c.l.b16 %v27
  %v196 = vunpack.c.l.b16 %v28
  %v197 = vunpack.c.l.b16 %v29
  %v198 = vunpack.c.l.b16 %v30
  %v199 = vunpack.c.l.b16 %v31
  %v200 = vunpack.c.l.b16 %v32
  %v201 = vunpack.c.l.b16 %v33
  %v202 = vunpack.c.l.b16 %v34
  %v203 = vunpack.c.l.b16 %v35
  %v204 = vunpack.c.l.b16 %v36
  %v205 = vunpack.c.l.b16 %v37
  %v206 = vunpack.c.l.b16 %v38
  %v207 = vunpack.c.l.b16 %v39
  %v208 = vunpack.c.l.b16 %v40
  %v209 = vunpack.c.l.b16 %v41
  %v210 = vunpack.c.l.b16 %v42
  %v211 = vunpack.c.l.b16 %v43
  %v212 = vunpack.c.l.b16 %v44
  %v213 = vunpack.c.l.b16 %v45
  %v214 = vunpack.c.l.b16 %v46
  %v215 = vunpack.c.l.b16 %v47
  %v216 = vunpack.c.l.b16 %v48
  %v217 = vunpack.c.l.b16 %v49
  %v218 = vunpack.c.l.b16 %v50
  %v219 = vunpack.c.l.b16 %v51
  %v220 = vunpack.c.l.b16 %v52
  %v221 = vunpack.c.l.b16 %v53
  %v222 = vunpack.c.l.b16 %v54
  %v223 = vunpack.c.l.b16 %v55
  %v224 = vunpack.c.l.b16 %v56
  %v225 = vunpack.c.l.b16 %v57
  %v226 = vunpack.c.l.b16 %v58
  %v227 = vunpack.c.l.b16 %v59
  %v228 = vunpack.c.l.b16 %v60
  %v229 = vunpack.c.l.b16 %v61
  %v230 = vunpack.c.l.b16 %v62
  %v231 = vunpack.c.l.b16 %v63
  %v232 = vunpack.c.l.b16 %v64
  %v233 = vunpack.c.l.b16 %v65
  %v234 = vunpack.c.l.b16 %v66
  %v235 = vunpack.c.l.b16 %v67
  %v236 = vunpack.c.l.b16 %v68
  %v237 = vunpack.c.l.b16 %v69
  %v238 = vunpack.c.l.b16 %v70
  %v239 = vunpack.c.l.b16 %v71
  %v240 = vunpack.c.l.b16 %v72
  %v241 = vunpack.c.l.b16 %v73
  %v242 = vunpack.c.l.b16 %v74
  %v243 = vunpack.c.l.b16 %v75
  %v244 = vunpack.c.l.b16 %v76
  %v245 = vunpack.c.l.b16 %v77
  %v246 = vunpack.c.l.b16 %v78
  %v247 = vunpack.c.l.b16 %v79
  %v248 = vunpack.c.l.b16 %v80
  %v249 = vunpack.c.l.b16 %v81
  %v250 = vunpack.c.l.b16 %v82
  %v251 = vunpack.c.l.b16 %v83
  %v252 = vunpack.c.l.b16 %v84
  %v253 = vunpack.c.l.b16 %v85
  %v254 = vunpack.c.l.b16 %v86
  %v255 = vpack.c.b16 %v192, %v191
  %v256 = vpack.c.b16 %v194, %v193
  %v257 = vpack.c.b16 %v196, %v195
  %v258 = vpack.c.b16 %v198, %v197
  %v259 = vpack.c.b16 %v200, %v199
  %v260 = vpack.c.b16 %v202, %v201
  %v261 = vpack.c.b16 %v204, %v203
  %v262 = vpack.c.b16 %v206, %v205
  %v263 = vpack.c.b16 %v208, %v207
  %v264 = vpack.c.b16 %v210, %v209
  %v265 = vpack.c.b16 %v212, %v211
  %v266 = vpack.c.b16 %v214, %v213
  %v267 = vpack.c.b16 %v216, %v215
  %v268 = vpack.c.b16 %v218, %v217
  %v269 = vpack.c.b16 %v220, %v219
  %v270 = vpack.c.b16 %v222, %v221
  %v271 = vpack.c.b16 %v224, %v223
  %v272 = vpack.c.b16 %v226, %v225
  %v273 = vpack.c.b16 %v228, %v227
  %v274 = vpack.c.b16 %v230, %v229
  %v275 = vpack.c.b16 %v232, %v231
  %v276 = vpack.c.b16 %v234, %v233
  %v277 = vpack.c.b16 %v236, %v235
  %v278 = vpack.c.b16 %v238, %v237
  %v279 = vpack.c.b16 %v240, %v239
  %v280 = vpack.c.b16 %v242, %v241
  %v281 = vpack.c.b16 %v244, %v243
  %v282 = vpack.c.b16 %v246, %v245
  %v283 = vpack.c.b16 %v248, %v247
  %v284 = vpack.c.b16 %v250, %v249
  %v285 = vpack.c.b16 %v252, %v251
  %v286 = vpack.c.b16 %v254, %v253
  %319 = vmatprep.subr.bf16.mxu0 0
  %320 = vmatpush1.bf16.msra.mxu0 %v255
  %321 = vmatprep.subr.bf16.mxu0 0
  %322 = vmatpush1.bf16.msra.mxu0 %v256
  %323 = vmatprep.subr.bf16.mxu0 0
  %324 = vmatpush1.bf16.msra.mxu0 %v257
  %325 = vmatprep.subr.bf16.mxu0 0
  %326 = vmatpush1.bf16.msra.mxu0 %v258
  %327 = vmatprep.subr.bf16.mxu0 0
  %328 = vmatpush1.bf16.msra.mxu0 %v259
  %329 = vmatprep.subr.bf16.mxu0 0
  %330 = vmatpush1.bf16.msra.mxu0 %v260
  %331 = vmatprep.subr.bf16.mxu0 0
  %332 = vmatpush1.bf16.msra.mxu0 %v261
  %333 = vmatprep.subr.bf16.mxu0 0
  %334 = vmatpush1.bf16.msra.mxu0 %v262
  %335 = vmatprep.subr.bf16.mxu0 0
  %336 = vmatpush1.bf16.msra.mxu0 %v263
  %337 = vmatprep.subr.bf16.mxu0 0
  %338 = vmatpush1.bf16.msra.mxu0 %v264
  %339 = vmatprep.subr.bf16.mxu0 0
  %340 = vmatpush1.bf16.msra.mxu0 %v265
  %341 = vmatprep.subr.bf16.mxu0 0
  %342 = vmatpush1.bf16.msra.mxu0 %v266
  %343 = vmatprep.subr.bf16.mxu0 0
  %344 = vmatpush1.bf16.msra.mxu0 %v267
  %345 = vmatprep.subr.bf16.mxu0 0
  %346 = vmatpush1.bf16.msra.mxu0 %v268
  %347 = vmatprep.subr.bf16.mxu0 0
  %348 = vmatpush1.bf16.msra.mxu0 %v269
  %349 = vmatprep.subr.bf16.mxu0 0
  %350 = vmatpush1.bf16.msra.mxu0 %v270
  %351 = vmatprep.mubr.bf16.mxu0 %v112
  %352 = vmatmul.mubr.bf16.gmra.mrb[0].mxu0 %v111
  %v353 = vpop.f32.mrb[0].mxu0
  %v354 = vadd.f32 0.0, %v353
  %v355 = vpop.f32.mrb[0].mxu0
  %v356 = vpop.f32.mrb[0].mxu0
  %v357 = vadd.f32 0.0, %v356
  %v358 = vpop.f32.mrb[0].mxu0
  %359 = vmatprep.mubr.bf16.mxu0 %v116
  %360 = vmatmul.mubr.bf16.gmra.mrb[0].mxu0 %v115
  %v361 = vpop.f32.mrb[0].mxu0
  %v362 = vadd.f32 0.0, %v361
  %v363 = vpop.f32.mrb[0].mxu0
  %v364 = vpop.f32.mrb[0].mxu0
  %v365 = vadd.f32 0.0, %v364
  %v366 = vpop.f32.mrb[0].mxu0
  %367 = vdwg.mxu0
  %368 = vmatprep.subr.bf16.mxu0 0
  %369 = vmatpush1.bf16.msra.mxu0 %v271
  %370 = vmatprep.subr.bf16.mxu0 0
  %371 = vmatpush1.bf16.msra.mxu0 %v272
  %372 = vmatprep.subr.bf16.mxu0 0
  %373 = vmatpush1.bf16.msra.mxu0 %v273
  %374 = vmatprep.subr.bf16.mxu0 0
  %375 = vmatpush1.bf16.msra.mxu0 %v274
  %376 = vmatprep.subr.bf16.mxu0 0
  %377 = vmatpush1.bf16.msra.mxu0 %v275
  %378 = vmatprep.subr.bf16.mxu0 0
  %379 = vmatpush1.bf16.msra.mxu0 %v276
  %380 = vmatprep.subr.bf16.mxu0 0
  %381 = vmatpush1.bf16.msra.mxu0 %v277
  %382 = vmatprep.subr.bf16.mxu0 0
  %383 = vmatpush1.bf16.msra.mxu0 %v278
  %384 = vmatprep.subr.bf16.mxu0 0
  %385 = vmatpush1.bf16.msra.mxu0 %v279
  %386 = vmatprep.subr.bf16.mxu0 0
  %387 = vmatpush1.bf16.msra.mxu0 %v280
  %388 = vmatprep.subr.bf16.mxu0 0
  %389 = vmatpush1.bf16.msra.mxu0 %v281
  %390 = vmatprep.subr.bf16.mxu0 0
  %391 = vmatpush1.bf16.msra.mxu0 %v282
  %392 = vmatprep.subr.bf16.mxu0 0
  %393 = vmatpush1.bf16.msra.mxu0 %v283
  %394 = vmatprep.subr.bf16.mxu0 0
  %395 = vmatpush1.bf16.msra.mxu0 %v284
  %396 = vmatprep.subr.bf16.mxu0 0
  %397 = vmatpush1.bf16.msra.mxu0 %v285
  %398 = vmatprep.subr.bf16.mxu0 0
  %399 = vmatpush1.bf16.msra.mxu0 %v286
  %400 = vmatprep.mubr.bf16.mxu0 %v114
  %401 = vmatmul.mubr.bf16.gmra.mrb[0].mxu0 %v113
  %v402 = vpop.f32.mrb[0].mxu0
  %v403 = vadd.f32 %v354, %v402
  %v404 = vpop.f32.mrb[0].mxu0
  %v405 = vpop.f32.mrb[0].mxu0
  %v406 = vadd.f32 %v357, %v405
  %v407 = vpop.f32.mrb[0].mxu0
  %408 = vmatprep.mubr.bf16.mxu0 %v118
  %409 = vmatmul.mubr.bf16.gmra.mrb[0].mxu0 %v117
  %v410 = vpop.f32.mrb[0].mxu0
  %v411 = vadd.f32 %v362, %v410
  %v412 = vpop.f32.mrb[0].mxu0
  %v413 = vpop.f32.mrb[0].mxu0
  %v414 = vadd.f32 %v365, %v413
  %v415 = vpop.f32.mrb[0].mxu0
  %416 = vdwg.mxu0
  %417 = vst [vmem:[%s2] sm:$0xff] %v403
  %418 = vst [vmem:[%s2 + $0x8] sm:$0xff] %v406
  %419 = vst [vmem:[%s2 + $0x10] sm:$0xff] %v411
  %420 = vst [vmem:[%s2 + $0x18] sm:$0xff] %v414
  %v421 = vadd.f32 %v403, %v406
  %v422 = vadd.f32 %v421, %v411
  %v423 = vadd.f32 %v422, %v414
  %v424 = vrot.slane %v423, 4
  %v425 = vadd.f32 %v423, %v424
  %v426 = vrot.slane %v425, 2
  %v427 = vadd.f32 %v425, %v426
  %v428 = vrot.slane %v427, 1
  %v429 = vadd.f32 %v427, %v428
  %430 = vst [vmem:[%s3] sm:$0x1] %v429
  %v431 = vmul.f32 %v403, %v403
  %v432 = vmul.f32 %v406, %v406
  %v433 = vmul.f32 %v411, %v411
  %v434 = vmul.f32 %v414, %v414
  %v435 = vadd.f32 %v431, %v432
  %v436 = vadd.f32 %v435, %v433
  %v437 = vadd.f32 %v436, %v434
  %v438 = vrot.slane %v437, 4
  %v439 = vadd.f32 %v437, %v438
  %v440 = vrot.slane %v439, 2
  %v441 = vadd.f32 %v439, %v440
  %v442 = vrot.slane %v441, 1
  %v443 = vadd.f32 %v441, %v442
  %444 = vst [vmem:[%s4] sm:$0x1] %v443
  // Predicated region
  $region10: #{mc_model_forward.31} parent=0 // pred_check
    _
  $region11: #{mc_model_forward.31} parent=0 // pred_check_branch
    %446 = sbr.rel (0) target = $region13
  $region12: #{mc_model_forward.31} parent=0 // pred_region
    _
  $region13: #{mc_model_forward.31} parent=0 // pred_fallthru
    _
  // Predicated region
  $region14: #{mc_model_forward.31} parent=0 // pred_check
    _
  $region15: #{mc_model_forward.31} parent=0 // pred_check_branch
    %448 = sbr.rel (0) target = $region17
  $region16: #{mc_model_forward.31} parent=0 // pred_region
    _
  $region17: #{mc_model_forward.31} parent=0 // pred_fallthru
    _
  // Predicated region
  $region18: #{mc_model_forward.31} parent=0 // pred_check
    _
  $region19: #{mc_model_forward.31} parent=0 // pred_check_branch
    %450 = sbr.rel (0) target = $region21
  $region20: #{mc_model_forward.31} parent=0 // pred_region
    _
  $region21: #{mc_model_forward.31} parent=0 // pred_fallthru
    _
  // Predicated region
  $region22: #{mc_model_forward.31} parent=0 // pred_check
    _
  $region23: #{mc_model_forward.31} parent=0 // pred_check_branch
    %452 = sbr.rel (0) target = $region25
  $region24: #{mc_model_forward.31} parent=0 // pred_region
    _
  $region25: #{mc_model_forward.31} parent=0 // pred_fallthru
    _
  // Predicated region
  $region26: #{mc_model_forward.31} parent=0 // pred_check
    _
  $region27: #{mc_model_forward.31} parent=0 // pred_check_branch
    %454 = sbr.rel (0) target = $region29
  $region28: #{mc_model_forward.31} parent=0 // pred_region
    _
  $region29: #{mc_model_forward.31} parent=0 // pred_fallthru
    _
  // Predicated region
  $region30: #{mc_model_forward.31} parent=0 // pred_check
    _
  $region31: #{mc_model_forward.31} parent=0 // pred_check_branch
    %456 = sbr.rel (0) target = $region33
  $region32: #{mc_model_forward.31} parent=0 // pred_region
    _
  $region33: #{mc_model_forward.31} parent=0 // pred_fallthru
    _

// kernel: mc_model_forward.35
$region0: #{mc_model_forward.35}
  #allocation0 [shape = 'u32[]', space=smem, size = 0x4, offset = 0x4, fixed_abs, tag = 'smem constant byte address 0x4 - core index']
  #allocation1 [shape = 'u32[144,128]{1,0:T(1,128)}', space=vmem, size = 0x12000, scoped, tag = 'internal scratch']
  %s0 = inlined_call_operand.vmem [shape: f32[128,128], index: 0, kind: input, shape index: {}]
  %s1 = inlined_call_operand.vmem [shape: f32[4,1,128], index: 1, kind: input, shape index: {}]
  %s2 = inlined_call_operand.vmem [shape: f32[4,1,128], index: 2, kind: input, shape index: {}]
  %s3 = inlined_call_operand.vmem [shape: f32[1,128], index: 3, kind: input, shape index: {}]
  %s4 = inlined_call_operand.vmem [shape: f32[1,128], index: 4, kind: input, shape index: {}]
  %s5 = inlined_call_operand.vmem [shape: f32[128,128], index: 5, kind: input, shape index: {}]
  %s6 = inlined_call_operand.vmem [shape: f32[128,128], index: 6, kind: output, shape index: {}]
  %s7 = sld [smem:[#allocation0]]
  $region34: #{mc_model_forward.35} parent=0
    _
  %s9 = ssub.s32 1, %s7
  %s10 = scalar_select 0, %s9, %s7
  // Predicated region
  $region2: #{mc_model_forward.35} parent=0 // pred_check
    _
  $region3: #{mc_model_forward.35} parent=0 // pred_check_branch
    %12 = sbr.rel (0) target = $region5
  $region4: #{mc_model_forward.35} parent=0 // pred_region
    _
  $region5: #{mc_model_forward.35} parent=0 // pred_fallthru
    _
  // Predicated region
  $region6: #{mc_model_forward.35} parent=0 // pred_check
    _
  $region7: #{mc_model_forward.35} parent=0 // pred_check_branch
    %14 = sbr.rel (0) target = $region9
  $region8: #{mc_model_forward.35} parent=0 // pred_region
    _
  $region9: #{mc_model_forward.35} parent=0 // pred_fallthru
    _
  // Predicated region
  $region10: #{mc_model_forward.35} parent=0 // pred_check
    _
  $region11: #{mc_model_forward.35} parent=0 // pred_check_branch
    %16 = sbr.rel (0) target = $region13
  $region12: #{mc_model_forward.35} parent=0 // pred_region
    _
  $region13: #{mc_model_forward.35} parent=0 // pred_fallthru
    _
  // Predicated region
  $region14: #{mc_model_forward.35} parent=0 // pred_check
    _
  $region15: #{mc_model_forward.35} parent=0 // pred_check_branch
    %18 = sbr.rel (0) target = $region17
  $region16: #{mc_model_forward.35} parent=0 // pred_region
    _
  $region17: #{mc_model_forward.35} parent=0 // pred_fallthru
    _
  // Predicated region
  $region18: #{mc_model_forward.35} parent=0 // pred_check
    _
  $region19: #{mc_model_forward.35} parent=0 // pred_check_branch
    %20 = sbr.rel (0) target = $region21
  $region20: #{mc_model_forward.35} parent=0 // pred_region
    _
  $region21: #{mc_model_forward.35} parent=0 // pred_fallthru
    _
  // Predicated region
  $region22: #{mc_model_forward.35} parent=0 // pred_check
    _
  $region23: #{mc_model_forward.35} parent=0 // pred_check_branch
    %22 = sbr.rel (0) target = $region25
  $region24: #{mc_model_forward.35} parent=0 // pred_region
    _
  $region25: #{mc_model_forward.35} parent=0 // pred_fallthru
    _
  %v23 = vld [vmem:[%s1] sm:$0x1]
  %v24 = vld [vmem:[%s1 + $0x1] sm:$0x1]
  %v25 = vld [vmem:[%s1 + $0x2] sm:$0x1]
  %v26 = vld [vmem:[%s1 + $0x3] sm:$0x1]
  %vm27 = vcmask 1040384
  %v28 = vsel %vm27, %v23, 0.0
  %v29 = vsel %vm27, %v24, 0.0
  %v30 = vadd.f32 %v28, %v29
  %v31 = vsel %vm27, %v25, 0.0
  %v32 = vadd.f32 %v30, %v31
  %v33 = vsel %vm27, %v26, 0.0
  %v34 = vadd.f32 %v32, %v33
  %v35 = vmul.f32 %v34, 0.0078125
  %v36 = vld [vmem:[%s2] sm:$0x1]
  %v37 = vld [vmem:[%s2 + $0x1] sm:$0x1]
  %v38 = vld [vmem:[%s2 + $0x2] sm:$0x1]
  %v39 = vld [vmem:[%s2 + $0x3] sm:$0x1]
  %v40 = vsel %vm27, %v36, 0.0
  %v41 = vsel %vm27, %v37, 0.0
  %v42 = vadd.f32 %v40, %v41
  %v43 = vsel %vm27, %v38, 0.0
  %v44 = vadd.f32 %v42, %v43
  %v45 = vsel %vm27, %v39, 0.0
  %v46 = vadd.f32 %v44, %v45
  %v47 = vmul.f32 %v46, 0.0078125
  %v48 = vmul.f32 %v35, %v35
  %v49 = vsub.f32 %v47, %v48
  %v50 = vld [vmem:[%s3] sm:$0x1]
  %v51 = vadd.f32 %v49, 1e-05
  %v52 = vrsqrt.pop %v51
  %v53 = vmul.f32 %v50, %v52
  %v54 = vld [vmem:[%s4] sm:$0x1]
  %v55 = vmul.f32 %v35, %v53
  %v56 = vsub.f32 %v54, %v55
  %v57 = vld [vmem:[%s0] sm:$0xff]
  %v58 = vld [vmem:[%s0 + $0x8] sm:$0xff]
  %v59 = vld [vmem:[%s0 + $0x10] sm:$0xff]
  %v60 = vld [vmem:[%s0 + $0x18] sm:$0xff]
  %v61 = vld [vmem:[%s0 + $0x20] sm:$0xff]
  %v62 = vld [vmem:[%s0 + $0x28] sm:$0xff]
  %v63 = vld [vmem:[%s0 + $0x30] sm:$0xff]
  %v64 = vld [vmem:[%s0 + $0x38] sm:$0xff]
  %v65 = vld [vmem:[%s0 + $0x40] sm:$0xff]
  %v66 = vld [vmem:[%s0 + $0x48] sm:$0xff]
  %v67 = vld [vmem:[%s0 + $0x50] sm:$0xff]
  %v68 = vld [vmem:[%s0 + $0x58] sm:$0xff]
  %v69 = vld [vmem:[%s0 + $0x60] sm:$0xff]
  %v70 = vld [vmem:[%s0 + $0x68] sm:$0xff]
  %v71 = vld [vmem:[%s0 + $0x70] sm:$0xff]
  %v72 = vld [vmem:[%s0 + $0x78] sm:$0xff]
  %v74 = vlaneseq
  %v75 = vshrl.u32 %v74, 7
  %v76 = vsub.s32 0, %v75
  %v77 = vrot.slane %v53, %v76
  %v79 = vmul.f32 %v57, %v77
  %v80 = vmul.f32 %v58, %v77
  %v81 = vmul.f32 %v59, %v77
  %v82 = vmul.f32 %v60, %v77
  %v83 = vmul.f32 %v61, %v77
  %v84 = vmul.f32 %v62, %v77
  %v85 = vmul.f32 %v63, %v77
  %v86 = vmul.f32 %v64, %v77
  %v87 = vmul.f32 %v65, %v77
  %v88 = vmul.f32 %v66, %v77
  %v89 = vmul.f32 %v67, %v77
  %v90 = vmul.f32 %v68, %v77
  %v91 = vmul.f32 %v69, %v77
  %v92 = vmul.f32 %v70, %v77
  %v93 = vmul.f32 %v71, %v77
  %v94 = vmul.f32 %v72, %v77
  %v96 = vlaneseq
  %v97 = vshrl.u32 %v96, 7
  %v98 = vsub.s32 0, %v97
  %v99 = vrot.slane %v56, %v98
  %v101 = vadd.f32 %v79, %v99
  %v102 = vadd.f32 %v80, %v99
  %v103 = vadd.f32 %v81, %v99
  %v104 = vadd.f32 %v82, %v99
  %v105 = vadd.f32 %v83, %v99
  %v106 = vadd.f32 %v84, %v99
  %v107 = vadd.f32 %v85, %v99
  %v108 = vadd.f32 %v86, %v99
  %v109 = vadd.f32 %v87, %v99
  %v110 = vadd.f32 %v88, %v99
  %v111 = vadd.f32 %v89, %v99
  %v112 = vadd.f32 %v90, %v99
  %v113 = vadd.f32 %v91, %v99
  %v114 = vadd.f32 %v92, %v99
  %v115 = vadd.f32 %v93, %v99
  %v116 = vadd.f32 %v94, %v99
  %vm117 = vcmp.ge.f32.partialorder %v101, 0.0
  %vm118 = vcmp.ge.f32.partialorder %v102, 0.0
  %vm119 = vcmp.ge.f32.partialorder %v103, 0.0
  %vm120 = vcmp.ge.f32.partialorder %v104, 0.0
  %vm121 = vcmp.ge.f32.partialorder %v105, 0.0
  %vm122 = vcmp.ge.f32.partialorder %v106, 0.0
  %vm123 = vcmp.ge.f32.partialorder %v107, 0.0
  %vm124 = vcmp.ge.f32.partialorder %v108, 0.0
  %vm125 = vcmp.ge.f32.partialorder %v109, 0.0
  %vm126 = vcmp.ge.f32.partialorder %v110, 0.0
  %vm127 = vcmp.ge.f32.partialorder %v111, 0.0
  %vm128 = vcmp.ge.f32.partialorder %v112, 0.0
  %vm129 = vcmp.ge.f32.partialorder %v113, 0.0
  %vm130 = vcmp.ge.f32.partialorder %v114, 0.0
  %vm131 = vcmp.ge.f32.partialorder %v115, 0.0
  %vm132 = vcmp.ge.f32.partialorder %v116, 0.0
  %v133 = vmul.f32 %v101, 0.01
  %v134 = vmul.f32 %v102, 0.01
  %v135 = vmul.f32 %v103, 0.01
  %v136 = vmul.f32 %v104, 0.01
  %v137 = vmul.f32 %v105, 0.01
  %v138 = vmul.f32 %v106, 0.01
  %v139 = vmul.f32 %v107, 0.01
  %v140 = vmul.f32 %v108, 0.01
  %v141 = vmul.f32 %v109, 0.01
  %v142 = vmul.f32 %v110, 0.01
  %v143 = vmul.f32 %v111, 0.01
  %v144 = vmul.f32 %v112, 0.01
  %v145 = vmul.f32 %v113, 0.01
  %v146 = vmul.f32 %v114, 0.01
  %v147 = vmul.f32 %v115, 0.01
  %v148 = vmul.f32 %v116, 0.01
  %v149 = vsel %vm117, %v101, %v133
  %v150 = vsel %vm118, %v102, %v134
  %v151 = vsel %vm119, %v103, %v135
  %v152 = vsel %vm120, %v104, %v136
  %v153 = vsel %vm121, %v105, %v137
  %v154 = vsel %vm122, %v106, %v138
  %v155 = vsel %vm123, %v107, %v139
  %v156 = vsel %vm124, %v108, %v140
  %v157 = vsel %vm125, %v109, %v141
  %v158 = vsel %vm126, %v110, %v142
  %v159 = vsel %vm127, %v111, %v143
  %v160 = vsel %vm128, %v112, %v144
  %v161 = vsel %vm129, %v113, %v145
  %v162 = vsel %vm130, %v114, %v146
  %v163 = vsel %vm131, %v115, %v147
  %v164 = vsel %vm132, %v116, %v148
  %v165 = vld [vmem:[%s5] sm:$0xff]
  %v166 = vld [vmem:[%s5 + $0x8] sm:$0xff]
  %v167 = vld [vmem:[%s5 + $0x10] sm:$0xff]
  %v168 = vld [vmem:[%s5 + $0x18] sm:$0xff]
  %v169 = vld [vmem:[%s5 + $0x20] sm:$0xff]
  %v170 = vld [vmem:[%s5 + $0x28] sm:$0xff]
  %v171 = vld [vmem:[%s5 + $0x30] sm:$0xff]
  %v172 = vld [vmem:[%s5 + $0x38] sm:$0xff]
  %v173 = vld [vmem:[%s5 + $0x40] sm:$0xff]
  %v174 = vld [vmem:[%s5 + $0x48] sm:$0xff]
  %v175 = vld [vmem:[%s5 + $0x50] sm:$0xff]
  %v176 = vld [vmem:[%s5 + $0x58] sm:$0xff]
  %v177 = vld [vmem:[%s5 + $0x60] sm:$0xff]
  %v178 = vld [vmem:[%s5 + $0x68] sm:$0xff]
  %v179 = vld [vmem:[%s5 + $0x70] sm:$0xff]
  %v180 = vld [vmem:[%s5 + $0x78] sm:$0xff]
  %v181 = vadd.f32 %v149, %v165
  %v182 = vadd.f32 %v150, %v166
  %v183 = vadd.f32 %v151, %v167
  %v184 = vadd.f32 %v152, %v168
  %v185 = vadd.f32 %v153, %v169
  %v186 = vadd.f32 %v154, %v170
  %v187 = vadd.f32 %v155, %v171
  %v188 = vadd.f32 %v156, %v172
  %v189 = vadd.f32 %v157, %v173
  %v190 = vadd.f32 %v158, %v174
  %v191 = vadd.f32 %v159, %v175
  %v192 = vadd.f32 %v160, %v176
  %v193 = vadd.f32 %v161, %v177
  %v194 = vadd.f32 %v162, %v178
  %v195 = vadd.f32 %v163, %v179
  %v196 = vadd.f32 %v164, %v180
  %197 = vst [vmem:[%s6] sm:$0xff] %v181
  %198 = vst [vmem:[%s6 + $0x8] sm:$0xff] %v182
  %199 = vst [vmem:[%s6 + $0x10] sm:$0xff] %v183
  %200 = vst [vmem:[%s6 + $0x18] sm:$0xff] %v184
  %201 = vst [vmem:[%s6 + $0x20] sm:$0xff] %v185
  %202 = vst [vmem:[%s6 + $0x28] sm:$0xff] %v186
  %203 = vst [vmem:[%s6 + $0x30] sm:$0xff] %v187
  %204 = vst [vmem:[%s6 + $0x38] sm:$0xff] %v188
  %205 = vst [vmem:[%s6 + $0x40] sm:$0xff] %v189
  %206 = vst [vmem:[%s6 + $0x48] sm:$0xff] %v190
  %207 = vst [vmem:[%s6 + $0x50] sm:$0xff] %v191
  %208 = vst [vmem:[%s6 + $0x58] sm:$0xff] %v192
  %209 = vst [vmem:[%s6 + $0x60] sm:$0xff] %v193
  %210 = vst [vmem:[%s6 + $0x68] sm:$0xff] %v194
  %211 = vst [vmem:[%s6 + $0x70] sm:$0xff] %v195
  %212 = vst [vmem:[%s6 + $0x78] sm:$0xff] %v196
  // Predicated region
  $region26: #{mc_model_forward.35} parent=0 // pred_check
    _
  $region27: #{mc_model_forward.35} parent=0 // pred_check_branch
    %214 = sbr.rel (0) target = $region29
  $region28: #{mc_model_forward.35} parent=0 // pred_region
    _
  $region29: #{mc_model_forward.35} parent=0 // pred_fallthru
    _
  // Predicated region
  $region30: #{mc_model_forward.35} parent=0 // pred_check
    _
  $region31: #{mc_model_forward.35} parent=0 // pred_check_branch
    %216 = sbr.rel (0) target = $region33
  $region32: #{mc_model_forward.35} parent=0 // pred_region
    _
  $region33: #{mc_model_forward.35} parent=0 // pred_fallthru
    _

// kernel: mc_model_forward.36
$region0: #{mc_model_forward.36}
  #allocation0 [shape = 'u32[]', space=smem, size = 0x4, offset = 0x4, fixed_abs, tag = 'smem constant byte address 0x4 - core index']
  #allocation1 [shape = 'u32[144,128]{1,0:T(1,128)}', space=vmem, size = 0x12000, scoped, tag = 'internal scratch']
  %s0 = inlined_call_operand.vmem [shape: bf16[128,256], index: 0, kind: input, shape index: {}]
  %s1 = inlined_call_operand.vmem [shape: bf16[256,128], index: 1, kind: input, shape index: {}]
  %s2 = inlined_call_operand.vmem [shape: f32[1,128], index: 2, kind: input, shape index: {}]
  %s3 = inlined_call_operand.vmem [shape: f32[128,128], index: 3, kind: output, shape index: {}]
  %s4 = sld [smem:[#allocation0]]
  $region22: #{mc_model_forward.36} parent=0
    _
  %s6 = ssub.s32 1, %s4
  %s7 = scalar_select 0, %s6, %s4
  // Predicated region
  $region2: #{mc_model_forward.36} parent=0 // pred_check
    _
  $region3: #{mc_model_forward.36} parent=0 // pred_check_branch
    %9 = sbr.rel (0) target = $region5
  $region4: #{mc_model_forward.36} parent=0 // pred_region
    _
  $region5: #{mc_model_forward.36} parent=0 // pred_fallthru
    _
  // Predicated region
  $region6: #{mc_model_forward.36} parent=0 // pred_check
    _
  $region7: #{mc_model_forward.36} parent=0 // pred_check_branch
    %11 = sbr.rel (0) target = $region9
  $region8: #{mc_model_forward.36} parent=0 // pred_region
    _
  $region9: #{mc_model_forward.36} parent=0 // pred_fallthru
    _
  // Predicated region
  $region10: #{mc_model_forward.36} parent=0 // pred_check
    _
  $region11: #{mc_model_forward.36} parent=0 // pred_check_branch
    %13 = sbr.rel (0) target = $region13
  $region12: #{mc_model_forward.36} parent=0 // pred_region
    _
  $region13: #{mc_model_forward.36} parent=0 // pred_fallthru
    _
  %v15 = vld [vmem:[%s0] sm:$0xff]
  %v16 = vld [vmem:[%s0 + $0x8] sm:$0xff]
  %v17 = vld [vmem:[%s0 + $0x10] sm:$0xff]
  %v18 = vld [vmem:[%s0 + $0x18] sm:$0xff]
  %v19 = vld [vmem:[%s0 + $0x20] sm:$0xff]
  %v20 = vld [vmem:[%s0 + $0x28] sm:$0xff]
  %v21 = vld [vmem:[%s0 + $0x30] sm:$0xff]
  %v22 = vld [vmem:[%s0 + $0x38] sm:$0xff]
  %v23 = vld [vmem:[%s0 + $0x40] sm:$0xff]
  %v24 = vld [vmem:[%s0 + $0x48] sm:$0xff]
  %v25 = vld [vmem:[%s0 + $0x50] sm:$0xff]
  %v26 = vld [vmem:[%s0 + $0x58] sm:$0xff]
  %v27 = vld [vmem:[%s0 + $0x60] sm:$0xff]
  %v28 = vld [vmem:[%s0 + $0x68] sm:$0xff]
  %v29 = vld [vmem:[%s0 + $0x70] sm:$0xff]
  %v30 = vld [vmem:[%s0 + $0x78] sm:$0xff]
  %v31 = vld [vmem:[%s1] sm:$0xf]
  %v32 = vld [vmem:[%s1 + $0x4] sm:$0xf]
  %v33 = vld [vmem:[%s1 + $0x8] sm:$0xf]
  %v34 = vld [vmem:[%s1 + $0xc] sm:$0xf]
  %v35 = vld [vmem:[%s1 + $0x10] sm:$0xf]
  %v36 = vld [vmem:[%s1 + $0x14] sm:$0xf]
  %v37 = vld [vmem:[%s1 + $0x18] sm:$0xf]
  %v38 = vld [vmem:[%s1 + $0x1c] sm:$0xf]
  %v39 = vld [vmem:[%s1 + $0x20] sm:$0xf]
  %v40 = vld [vmem:[%s1 + $0x24] sm:$0xf]
  %v41 = vld [vmem:[%s1 + $0x28] sm:$0xf]
  %v42 = vld [vmem:[%s1 + $0x2c] sm:$0xf]
  %v43 = vld [vmem:[%s1 + $0x30] sm:$0xf]
  %v44 = vld [vmem:[%s1 + $0x34] sm:$0xf]
  %v45 = vld [vmem:[%s1 + $0x38] sm:$0xf]
  %v46 = vld [vmem:[%s1 + $0x3c] sm:$0xf]
  %v47 = vld [vmem:[%s1 + $0x40] sm:$0xf]
  %v48 = vld [vmem:[%s1 + $0x44] sm:$0xf]
  %v49 = vld [vmem:[%s1 + $0x48] sm:$0xf]
  %v50 = vld [vmem:[%s1 + $0x4c] sm:$0xf]
  %v51 = vld [vmem:[%s1 + $0x50] sm:$0xf]
  %v52 = vld [vmem:[%s1 + $0x54] sm:$0xf]
  %v53 = vld [vmem:[%s1 + $0x58] sm:$0xf]
  %v54 = vld [vmem:[%s1 + $0x5c] sm:$0xf]
  %v55 = vld [vmem:[%s1 + $0x60] sm:$0xf]
  %v56 = vld [vmem:[%s1 + $0x64] sm:$0xf]
  %v57 = vld [vmem:[%s1 + $0x68] sm:$0xf]
  %v58 = vld [vmem:[%s1 + $0x6c] sm:$0xf]
  %v59 = vld [vmem:[%s1 + $0x70] sm:$0xf]
  %v60 = vld [vmem:[%s1 + $0x74] sm:$0xf]
  %v61 = vld [vmem:[%s1 + $0x78] sm:$0xf]
  %v62 = vld [vmem:[%s1 + $0x7c] sm:$0xf]
  %v63 = vld [vmem:[%s2] sm:$0x1]
  %v65 = vlaneseq
  %v66 = vshrl.u32 %v65, 7
  %v67 = vsub.s32 0, %v66
  %v68 = vrot.slane %v63, %v67
  %v86 = vunpack.c.l.b16 %v15
  %v87 = vunpack.c.h.b16 %v15
  %v88 = vunpack.c.l.b16 %v16
  %v89 = vunpack.c.h.b16 %v16
  %v90 = vunpack.c.l.b16 %v17
  %v91 = vunpack.c.h.b16 %v17
  %v92 = vunpack.c.l.b16 %v18
  %v93 = vunpack.c.h.b16 %v18
  %v94 = vunpack.c.l.b16 %v19
  %v95 = vunpack.c.h.b16 %v19
  %v96 = vunpack.c.l.b16 %v20
  %v97 = vunpack.c.h.b16 %v20
  %v98 = vunpack.c.l.b16 %v21
  %v99 = vunpack.c.h.b16 %v21
  %v100 = vunpack.c.l.b16 %v22
  %v101 = vunpack.c.h.b16 %v22
  %v102 = vunpack.c.l.b16 %v23
  %v103 = vunpack.c.h.b16 %v23
  %v104 = vunpack.c.l.b16 %v24
  %v105 = vunpack.c.h.b16 %v24
  %v106 = vunpack.c.l.b16 %v25
  %v107 = vunpack.c.h.b16 %v25
  %v108 = vunpack.c.l.b16 %v26
  %v109 = vunpack.c.h.b16 %v26
  %v110 = vunpack.c.l.b16 %v27
  %v111 = vunpack.c.h.b16 %v27
  %v112 = vunpack.c.l.b16 %v28
  %v113 = vunpack.c.h.b16 %v28
  %v114 = vunpack.c.l.b16 %v29
  %v115 = vunpack.c.h.b16 %v29
  %v116 = vunpack.c.l.b16 %v30
  %v117 = vunpack.c.h.b16 %v30
  %v118 = vpack.c.b16 %v88, %v86
  %v119 = vpack.c.b16 %v89, %v87
  %v120 = vpack.c.b16 %v92, %v90
  %v121 = vpack.c.b16 %v93, %v91
  %v122 = vpack.c.b16 %v96, %v94
  %v123 = vpack.c.b16 %v97, %v95
  %v124 = vpack.c.b16 %v100, %v98
  %v125 = vpack.c.b16 %v101, %v99
  %v126 = vpack.c.b16 %v104, %v102
  %v127 = vpack.c.b16 %v105, %v103
  %v128 = vpack.c.b16 %v108, %v106
  %v129 = vpack.c.b16 %v109, %v107
  %v130 = vpack.c.b16 %v112, %v110
  %v131 = vpack.c.b16 %v113, %v111
  %v132 = vpack.c.b16 %v116, %v114
  %v133 = vpack.c.b16 %v117, %v115
  %v182 = vunpack.c.l.b16 %v31
  %v183 = vunpack.c.l.b16 %v32
  %v184 = vunpack.c.l.b16 %v33
  %v185 = vunpack.c.l.b16 %v34
  %v186 = vunpack.c.l.b16 %v35
  %v187 = vunpack.c.l.b16 %v36
  %v188 = vunpack.c.l.b16 %v37
  %v189 = vunpack.c.l.b16 %v38
  %v190 = vunpack.c.l.b16 %v39
  %v191 = vunpack.c.l.b16 %v40
  %v192 = vunpack.c.l.b16 %v41
  %v193 = vunpack.c.l.b16 %v42
  %v194 = vunpack.c.l.b16 %v43
  %v195 = vunpack.c.l.b16 %v44
  %v196 = vunpack.c.l.b16 %v45
  %v197 = vunpack.c.l.b16 %v46
  %v198 = vunpack.c.l.b16 %v47
  %v199 = vunpack.c.l.b16 %v48
  %v200 = vunpack.c.l.b16 %v49
  %v201 = vunpack.c.l.b16 %v50
  %v202 = vunpack.c.l.b16 %v51
  %v203 = vunpack.c.l.b16 %v52
  %v204 = vunpack.c.l.b16 %v53
  %v205 = vunpack.c.l.b16 %v54
  %v206 = vunpack.c.l.b16 %v55
  %v207 = vunpack.c.l.b16 %v56
  %v208 = vunpack.c.l.b16 %v57
  %v209 = vunpack.c.l.b16 %v58
  %v210 = vunpack.c.l.b16 %v59
  %v211 = vunpack.c.l.b16 %v60
  %v212 = vunpack.c.l.b16 %v61
  %v213 = vunpack.c.l.b16 %v62
  %v214 = vpack.c.b16 %v183, %v182
  %v215 = vpack.c.b16 %v185, %v184
  %v216 = vpack.c.b16 %v187, %v186
  %v217 = vpack.c.b16 %v189, %v188
  %v218 = vpack.c.b16 %v191, %v190
  %v219 = vpack.c.b16 %v193, %v192
  %v220 = vpack.c.b16 %v195, %v194
  %v221 = vpack.c.b16 %v197, %v196
  %v222 = vpack.c.b16 %v199, %v198
  %v223 = vpack.c.b16 %v201, %v200
  %v224 = vpack.c.b16 %v203, %v202
  %v225 = vpack.c.b16 %v205, %v204
  %v226 = vpack.c.b16 %v207, %v206
  %v227 = vpack.c.b16 %v209, %v208
  %v228 = vpack.c.b16 %v211, %v210
  %v229 = vpack.c.b16 %v213, %v212
  %246 = vmatprep.subr.bf16.mxu0 0
  %247 = vmatpush1.bf16.msra.mxu0 %v214
  %248 = vmatprep.subr.bf16.mxu0 0
  %249 = vmatpush1.bf16.msra.mxu0 %v215
  %250 = vmatprep.subr.bf16.mxu0 0
  %251 = vmatpush1.bf16.msra.mxu0 %v216
  %252 = vmatprep.subr.bf16.mxu0 0
  %253 = vmatpush1.bf16.msra.mxu0 %v217
  %254 = vmatprep.subr.bf16.mxu0 0
  %255 = vmatpush1.bf16.msra.mxu0 %v218
  %256 = vmatprep.subr.bf16.mxu0 0
  %257 = vmatpush1.bf16.msra.mxu0 %v219
  %258 = vmatprep.subr.bf16.mxu0 0
  %259 = vmatpush1.bf16.msra.mxu0 %v220
  %260 = vmatprep.subr.bf16.mxu0 0
  %261 = vmatpush1.bf16.msra.mxu0 %v221
  %262 = vmatprep.subr.bf16.mxu0 0
  %263 = vmatpush1.bf16.msra.mxu0 %v222
  %264 = vmatprep.subr.bf16.mxu0 0
  %265 = vmatpush1.bf16.msra.mxu0 %v223
  %266 = vmatprep.subr.bf16.mxu0 0
  %267 = vmatpush1.bf16.msra.mxu0 %v224
  %268 = vmatprep.subr.bf16.mxu0 0
  %269 = vmatpush1.bf16.msra.mxu0 %v225
  %270 = vmatprep.subr.bf16.mxu0 0
  %271 = vmatpush1.bf16.msra.mxu0 %v226
  %272 = vmatprep.subr.bf16.mxu0 0
  %273 = vmatpush1.bf16.msra.mxu0 %v227
  %274 = vmatprep.subr.bf16.mxu0 0
  %275 = vmatpush1.bf16.msra.mxu0 %v228
  %276 = vmatprep.subr.bf16.mxu0 0
  %277 = vmatpush1.bf16.msra.mxu0 %v229
  %278 = vmatprep.mubr.bf16.mxu0 %v119
  %279 = vmatmul.mubr.bf16.gmra.mrb[0].mxu0 %v118
  %v280 = vpop.f32.mrb[0].mxu0
  %v281 = vadd.f32 %v68, %v280
  %v282 = vpop.f32.mrb[0].mxu0
  %v283 = vpop.f32.mrb[0].mxu0
  %v284 = vadd.f32 %v68, %v283
  %v285 = vpop.f32.mrb[0].mxu0
  %286 = vmatprep.mubr.bf16.mxu0 %v121
  %287 = vmatmul.mubr.bf16.gmra.mrb[0].mxu0 %v120
  %v288 = vpop.f32.mrb[0].mxu0
  %v289 = vadd.f32 %v68, %v288
  %v290 = vpop.f32.mrb[0].mxu0
  %v291 = vpop.f32.mrb[0].mxu0
  %v292 = vadd.f32 %v68, %v291
  %v293 = vpop.f32.mrb[0].mxu0
  %294 = vmatprep.mubr.bf16.mxu0 %v123
  %295 = vmatmul.mubr.bf16.gmra.mrb[0].mxu0 %v122
  %v296 = vpop.f32.mrb[0].mxu0
  %v297 = vadd.f32 %v68, %v296
  %v298 = vpop.f32.mrb[0].mxu0
  %v299 = vpop.f32.mrb[0].mxu0
  %v300 = vadd.f32 %v68, %v299
  %v301 = vpop.f32.mrb[0].mxu0
  %302 = vmatprep.mubr.bf16.mxu0 %v125
  %303 = vmatmul.mubr.bf16.gmra.mrb[0].mxu0 %v124
  %v304 = vpop.f32.mrb[0].mxu0
  %v305 = vadd.f32 %v68, %v304
  %v306 = vpop.f32.mrb[0].mxu0
  %v307 = vpop.f32.mrb[0].mxu0
  %v308 = vadd.f32 %v68, %v307
  %v309 = vpop.f32.mrb[0].mxu0
  %310 = vmatprep.mubr.bf16.mxu0 %v127
  %311 = vmatmul.mubr.bf16.gmra.mrb[0].mxu0 %v126
  %v312 = vpop.f32.mrb[0].mxu0
  %v313 = vadd.f32 %v68, %v312
  %v314 = vpop.f32.mrb[0].mxu0
  %v315 = vpop.f32.mrb[0].mxu0
  %v316 = vadd.f32 %v68, %v315
  %v317 = vpop.f32.mrb[0].mxu0
  %318 = vmatprep.mubr.bf16.mxu0 %v129
  %319 = vmatmul.mubr.bf16.gmra.mrb[0].mxu0 %v128
  %v320 = vpop.f32.mrb[0].mxu0
  %v321 = vadd.f32 %v68, %v320
  %v322 = vpop.f32.mrb[0].mxu0
  %v323 = vpop.f32.mrb[0].mxu0
  %v324 = vadd.f32 %v68, %v323
  %v325 = vpop.f32.mrb[0].mxu0
  %326 = vmatprep.mubr.bf16.mxu0 %v131
  %327 = vmatmul.mubr.bf16.gmra.mrb[0].mxu0 %v130
  %v328 = vpop.f32.mrb[0].mxu0
  %v329 = vadd.f32 %v68, %v328
  %v330 = vpop.f32.mrb[0].mxu0
  %v331 = vpop.f32.mrb[0].mxu0
  %v332 = vadd.f32 %v68, %v331
  %v333 = vpop.f32.mrb[0].mxu0
  %334 = vmatprep.mubr.bf16.mxu0 %v133
  %335 = vmatmul.mubr.bf16.gmra.mrb[0].mxu0 %v132
  %v336 = vpop.f32.mrb[0].mxu0
  %v337 = vadd.f32 %v68, %v336
  %v338 = vpop.f32.mrb[0].mxu0
  %v339 = vpop.f32.mrb[0].mxu0
  %v340 = vadd.f32 %v68, %v339
  %v341 = vpop.f32.mrb[0].mxu0
  %342 = vdwg.mxu0
  %343 = vst [vmem:[%s3] sm:$0xff] %v281
  %344 = vst [vmem:[%s3 + $0x8] sm:$0xff] %v284
  %345 = vst [vmem:[%s3 + $0x10] sm:$0xff] %v289
  %346 = vst [vmem:[%s3 + $0x18] sm:$0xff] %v292
  %347 = vst [vmem:[%s3 + $0x20] sm:$0xff] %v297
  %348 = vst [vmem:[%s3 + $0x28] sm:$0xff] %v300
  %349 = vst [vmem:[%s3 + $0x30] sm:$0xff] %v305
  %350 = vst [vmem:[%s3 + $0x38] sm:$0xff] %v308
  %351 = vst [vmem:[%s3 + $0x40] sm:$0xff] %v313
  %352 = vst [vmem:[%s3 + $0x48] sm:$0xff] %v316
  %353 = vst [vmem:[%s3 + $0x50] sm:$0xff] %v321
  %354 = vst [vmem:[%s3 + $0x58] sm:$0xff] %v324
  %355 = vst [vmem:[%s3 + $0x60] sm:$0xff] %v329
  %356 = vst [vmem:[%s3 + $0x68] sm:$0xff] %v332
  %357 = vst [vmem:[%s3 + $0x70] sm:$0xff] %v337
  %358 = vst [vmem:[%s3 + $0x78] sm:$0xff] %v340
  // Predicated region
  $region14: #{mc_model_forward.36} parent=0 // pred_check
    _
  $region15: #{mc_model_forward.36} parent=0 // pred_check_branch
    %360 = sbr.rel (0) target = $region17
  $region16: #{mc_model_forward.36} parent=0 // pred_region
    _
  $region17: #{mc_model_forward.36} parent=0 // pred_fallthru
    _
  // Predicated region
  $region18: #{mc_model_forward.36} parent=0 // pred_check
    _
  $region19: #{mc_model_forward.36} parent=0 // pred_check_branch
    %362 = sbr.rel (0) target = $region21
  $region20: #{mc_model_forward.36} parent=0 // pred_region
    _
  $region21: #{mc_model_forward.36} parent=0 // pred_fallthru
    _

</llo_original>
